<compile_context>
chip_gen: v7x
topology: tpu7x:2x2x1
jax: 0.10.0
libtpu: 0.0.40
codegen_flags: <defaults>
</compile_context>

<pallas_src>
import math
import functools

import jax
import jax.numpy as jnp
from jax.experimental import pallas as pl
from jax.experimental.pallas import tpu as pltpu


# --------------------------------------------------------------------------
# small math helpers (pure jnp -> usable inside the kernel and in the reference)
# --------------------------------------------------------------------------
def _layer_norm(x, g, b, eps=1e-5):
    mu = jnp.mean(x, axis=-1, keepdims=True)
    var = jnp.mean(jnp.square(x - mu), axis=-1, keepdims=True)
    return (x - mu) / jnp.sqrt(var + eps) * g + b


def _gelu(x):
    # TODO(synk): PyTorch nn.GELU() default is the exact erf formulation; erf lowering is not
    # guaranteed in Mosaic, so the tanh approximation is used (the reference uses the same form).
    c = math.sqrt(2.0 / math.pi)
    return 0.5 * x * (1.0 + jnp.tanh(c * (x + 0.044715 * x * x * x)))


# --------------------------------------------------------------------------
# parameter construction (deterministic, synthetic weights)
# --------------------------------------------------------------------------
def init_params(key, *, embed_dim, ffn_dim):
    keys = iter(jax.random.split(key, 32))

    def w(shape, scale=0.05):
        return (scale * jax.random.normal(next(keys), shape)).astype(jnp.float32)

    E, F = embed_dim, ffn_dim
    return dict(
        ln1_g=1.0 + w((1, E), 0.1), ln1_b=w((1, E)),
        wq=w((E, E)), bq=w((1, E)),
        wk=w((E, E)), bk=w((1, E)),
        wv=w((E, E)), bv=w((1, E)),
        wo=w((E, E)), bo=w((1, E)),
        ln2_g=1.0 + w((1, E), 0.1), ln2_b=w((1, E)),
        w1=w((E, F)), b1=w((1, F)),
        w2=w((F, E)), b2=w((1, E)),
    )


# --------------------------------------------------------------------------
# Pallas kernel
# --------------------------------------------------------------------------
def _mat_block_kernel(x_ref, mrow_ref, mcol_ref,
                      ln1_g, ln1_b, wqkv, bqkv, wo, bo,
                      ln2_g, ln2_b, w1, b1, w2, b2,
                      out_ref, ctx_scratch,
                      *, num_heads, head_dim, batch_tile, seq_len, bf16_eltwise):
    f32, bf16 = jnp.float32, jnp.bfloat16
    Bt, S, H, hd = batch_tile, seq_len, num_heads, head_dim
    E = H * hd
    M = Bt * S

    # masking terms (1 = visible, 0 = masked), hoisted out of the loops
    neg_bias = (1.0 - mrow_ref[...]) * (-1e30)                     # (Bt, 1, S) key-side bias
    q_valid = (mcol_ref[...] != 0.0).astype(f32)                   # (M, 1) query-row validity

    # ---- masked multi-head self-attention (norm1 -> attn -> residual) ----
    # x is only read where needed (LayerNorm input / residual add), never held across the
    # unrolled attention loops.
    h = _layer_norm(x_ref[...].reshape(M, E).astype(f32), ln1_g[...], ln1_b[...])
    qkvb = (jnp.dot(h.astype(bf16), wqkv[...], preferred_element_type=f32)
            + bqkv[...]).astype(bf16)                              # (M, 3E); W_q pre-scaled

    for bb in range(Bt):                                           # static unroll: sequences
        r0 = bb * S
        q_b = qkvb[r0:r0 + S, :E]                                  # (S, E)
        kT_b = qkvb[r0:r0 + S, E:2 * E].T                          # (E, S) one bulk transpose
        v_b = qkvb[r0:r0 + S, 2 * E:]                              # (S, E)
        bias_b = neg_bias[bb]                                      # (1, S)
        for hh in range(H):                                        # static unroll: heads
            lo = hh * hd
            s = jnp.dot(q_b[:, lo:lo + hd], kT_b[lo:lo + hd, :],
                        preferred_element_type=f32)                # (S, S)
            s = s + bias_b
            m = jnp.max(s, axis=-1, keepdims=True)
            p = jnp.exp(s - m)
            r = pl.reciprocal(jnp.sum(p, axis=-1, keepdims=True), approx=True)
            if bf16_eltwise:
                attn = p.astype(bf16) * r.astype(bf16)
            else:
                attn = (p * r).astype(bf16)
            # write this head's context straight into its lane slice of the VMEM scratch
            ctx_scratch[r0:r0 + S, lo:lo + hd] = jnp.dot(
                attn, v_b[:, lo:lo + hd], preferred_element_type=f32)

    # fused epilogue: zero fully-masked query rows, single (M,E)@(E,E) dot with the full W_o
    ctx = (ctx_scratch[...] * q_valid).astype(bf16)
    attn_out = jnp.dot(ctx, wo[...], preferred_element_type=f32) + bo[...]
    x1 = x_ref[...].reshape(M, E).astype(f32) + attn_out           # dropout_attn = identity

    # ---- feed-forward (norm2 -> linear/GELU/linear -> residual) ----
    h2 = _layer_norm(x1, ln2_g[...], ln2_b[...])
    f = jnp.dot(h2.astype(bf16), w1[...], preferred_element_type=f32) + b1[...]
    f = _gelu(f.astype(bf16)) if bf16_eltwise else _gelu(f)
    f = jnp.dot(f.astype(bf16), w2[...], preferred_element_type=f32) + b2[...]
    x1 = x1 + f                                                    # dropout_ffn = identity

    out_ref[...] = x1.reshape(Bt, S, E).astype(out_ref.dtype)


# --------------------------------------------------------------------------
# wrapper
# --------------------------------------------------------------------------
def _pick_batch_tile(batch, seq_len, *, target_rows=256, min_grid=2):
    """Per-step batch tile: divides `batch`, keeps >= min_grid grid steps when possible
    (v7x has 2 TensorCores), and makes M = Bt*S as close to target_rows as allowed."""
    divisors = [d for d in range(1, batch + 1) if batch % d == 0]
    cands = [d for d in divisors if batch // d >= min_grid] or divisors
    reaching = [d for d in cands if d * seq_len >= target_rows]
    return min(reaching) if reaching else max(cands)


def _bf16_elementwise_ok():
    # v6e/v7x have bf16 VPU/EUP paths; keep elementwise math in f32 elsewhere (e.g. v5e).
    try:
        kind = jax.devices()[0].device_kind.lower()
    except Exception:
        return False
    return ("v6" in kind) or ("v7" in kind)


def mat_block_pallas(x, mask, params, *, num_heads, batch_tile=None):
    B, S, E = x.shape
    assert E % num_heads == 0
    hd = E // num_heads
    f32, bf16 = jnp.float32, jnp.bfloat16

    Bt = batch_tile if batch_tile is not None else _pick_batch_tile(B, S)
    assert B % Bt == 0

    # fold 1/sqrt(head_dim) into the query projection and fuse Wq|Wk|Wv into one (E, 3E)
    # weight; all MXU weights are shipped to VMEM in bf16 (biases / LN params stay f32).
    scale = 1.0 / math.sqrt(hd)
    wqkv = jnp.concatenate([params["wq"] * scale, params["wk"], params["wv"]],
                           axis=1).astype(bf16)
    bqkv = jnp.concatenate([params["bq"] * scale, params["bk"], params["bv"]],
                           axis=1).astype(f32)

    weights = [
        params["ln1_g"].astype(f32), params["ln1_b"].astype(f32),
        wqkv, bqkv,
        params["wo"].astype(bf16), params["bo"].astype(f32),
        params["ln2_g"].astype(f32), params["ln2_b"].astype(f32),
        params["w1"].astype(bf16), params["b1"].astype(f32),
        params["w2"].astype(bf16), params["b2"].astype(f32),
    ]

    # mask in key-row layout (per sequence) and flattened query-column layout: tiny extra DMA,
    # avoids any in-kernel mask relayout on the hot path.
    mask_row = mask.reshape(B, 1, S).astype(f32)
    mask_col = mask.reshape(B * S, 1).astype(f32)

    def full_spec(a):
        # TODO(synk): when scaling E/F toward v7x's 64 MiB VMEM, add pipeline_mode=pl.Buffered(1)
        # on these constant-index weight specs and set vmem_limit_bytes in CompilerParams.
        return pl.BlockSpec(a.shape, lambda b, _n=a.ndim: (0,) * _n)

    in_specs = [
        pl.BlockSpec((Bt, S, E), lambda b: (b, 0, 0)),   # x
        pl.BlockSpec((Bt, 1, S), lambda b: (b, 0, 0)),   # key-side mask
        pl.BlockSpec((Bt * S, 1), lambda b: (b, 0)),     # query-side mask (flattened rows)
    ] + [full_spec(a) for a in weights]

    kernel = functools.partial(
        _mat_block_kernel, num_heads=num_heads, head_dim=hd,
        batch_tile=Bt, seq_len=S, bf16_eltwise=_bf16_elementwise_ok())

    return pl.pallas_call(
        kernel,
        out_shape=jax.ShapeDtypeStruct((B, S, E), f32),
        grid_spec=pltpu.PrefetchScalarGridSpec(
            num_scalar_prefetch=0,
            grid=(B // Bt,),
            in_specs=in_specs,
            out_specs=pl.BlockSpec((Bt, S, E), lambda b: (b, 0, 0)),
            scratch_shapes=[pltpu.VMEM((Bt * S, E), f32)],
        ),
        compiler_params=pltpu.CompilerParams(
            dimension_semantics=("parallel",)),
    )(x, mask_row, mask_col, *weights)


# --------------------------------------------------------------------------
# pure-JAX reference (mirrors the PyTorch module, f32 everywhere)
# --------------------------------------------------------------------------
def mat_block_ref(x, mask, params, *, num_heads):
    B, S, E = x.shape
    hd = E // num_heads
    m = mask.astype(jnp.float32)

    h = _layer_norm(x, params["ln1_g"], params["ln1_b"])
    q = (h @ params["wq"] + params["bq"]).reshape(B, S, num_heads, hd).transpose(0, 2, 1, 3)
    k = (h @ params["wk"] + params["bk"]).reshape(B, S, num_heads, hd).transpose(0, 2, 1, 3)
    v = (h @ params["wv"] + params["bv"]).reshape(B, S, num_heads, hd).transpose(0, 2, 1, 3)
    s = jnp.einsum("bhid,bhjd->bhij", q, k) / math.sqrt(hd)
    mask2d = m[:, :, None] * m[:, None, :]                      # mask_k * mask_q
    s = jnp.where(mask2d[:, None] == 0.0, -jnp.inf, s)
    smax = jnp.max(s, axis=-1, keepdims=True)
    p = jnp.exp(s - smax)
    attn = p / jnp.sum(p, axis=-1, keepdims=True)               # NaN on fully-masked rows
    attn = jnp.nan_to_num(attn)                                 # torch.nan_to_num(..., 0.0)
    ctx = jnp.einsum("bhij,bhjd->bhid", attn, v)
    ctx = ctx.transpose(0, 2, 1, 3).reshape(B, S, E)
    x = x + ctx @ params["wo"] + params["bo"]

    h2 = _layer_norm(x, params["ln2_g"], params["ln2_b"])
    f = _gelu(h2 @ params["w1"] + params["b1"])
    x = x + f @ params["w2"] + params["b2"]
    return x


# --------------------------------------------------------------------------
if __name__ == "__main__":
    # block config: embed_dim=128 keeps every tile lane-dense; B=4 allows Bt=2 per grid step
    # (M = 128 rows per dot) while keeping 2 grid steps for v7x's two TensorCores.
    embed_dim, num_heads, ffn_dim = 128, 4, 256
    B, S = 4, 64

    key = jax.random.PRNGKey(0)
    k_p, k_x, k_m = jax.random.split(key, 3)

    params = init_params(k_p, embed_dim=embed_dim, ffn_dim=ffn_dim)
    x = jax.random.normal(k_x, (B, S, embed_dim), dtype=jnp.float32)

    # 1 = visible patch, 0 = masked patch; force a few masked positions so the
    # fully-masked-query (softmax -> NaN -> nan_to_num) path is exercised.
    mask = (jax.random.uniform(k_m, (B, S)) > 0.25).astype(jnp.float32)
    mask = mask.at[0, 3].set(0.0).at[1, 0].set(0.0).at[3, 17].set(0.0)

    out = mat_block_pallas(x, mask, params, num_heads=num_heads)
    out = jax.block_until_ready(out)

    ref = mat_block_ref(x, mask, params, num_heads=num_heads)
    max_err = float(jnp.max(jnp.abs(out - ref)))
    assert out.shape == (B, S, embed_dim)
    assert max_err < 5e-2, f"kernel/reference mismatch: {max_err}"

    print("KERNEL_OK")
</pallas_src>

<mosaic_0001>
module attributes {stable_mosaic.version = 11 : i64} {
  func.func @_mat_block_kernel(%arg0: i32, %arg1: memref<2x64x128xf32, #tpu.memory_space<vmem>>, %arg2: memref<2x1x64xf32, #tpu.memory_space<vmem>>, %arg3: memref<128x1xf32, #tpu.memory_space<vmem>>, %arg4: memref<1x128xf32, #tpu.memory_space<vmem>>, %arg5: memref<1x128xf32, #tpu.memory_space<vmem>>, %arg6: memref<128x384xbf16, #tpu.memory_space<vmem>>, %arg7: memref<1x384xf32, #tpu.memory_space<vmem>>, %arg8: memref<128x128xbf16, #tpu.memory_space<vmem>>, %arg9: memref<1x128xf32, #tpu.memory_space<vmem>>, %arg10: memref<1x128xf32, #tpu.memory_space<vmem>>, %arg11: memref<1x128xf32, #tpu.memory_space<vmem>>, %arg12: memref<128x256xbf16, #tpu.memory_space<vmem>>, %arg13: memref<1x256xf32, #tpu.memory_space<vmem>>, %arg14: memref<256x128xbf16, #tpu.memory_space<vmem>>, %arg15: memref<1x128xf32, #tpu.memory_space<vmem>>, %arg16: memref<2x64x128xf32, #tpu.memory_space<vmem>>, %arg17: memref<128x128xf32, #tpu.memory_space<vmem>>) attributes {dimension_semantics = [#tpu.dimension_semantics<parallel>], iteration_bounds = array<i64: 2>, scalar_prefetch = 0 : i64, scratch_operands = 1 : i64, tpu.core_type = #tpu.core_type<tc>, window_params = [{transform_indices = @transform_0, window_bounds = array<i64: 2, 64, 128>}, {transform_indices = @transform_1, window_bounds = array<i64: 2, 1, 64>}, {transform_indices = @transform_2, window_bounds = array<i64: 128, 1>}, {pipeline_mode = #tpu.pipeline_mode<synchronous>, transform_indices = @transform_3, window_bounds = array<i64: 1, 128>}, {pipeline_mode = #tpu.pipeline_mode<synchronous>, transform_indices = @transform_4, window_bounds = array<i64: 1, 128>}, {pipeline_mode = #tpu.pipeline_mode<synchronous>, transform_indices = @transform_5, window_bounds = array<i64: 128, 384>}, {pipeline_mode = #tpu.pipeline_mode<synchronous>, transform_indices = @transform_6, window_bounds = array<i64: 1, 384>}, {pipeline_mode = #tpu.pipeline_mode<synchronous>, transform_indices = @transform_7, window_bounds = array<i64: 128, 128>}, {pipeline_mode = #tpu.pipeline_mode<synchronous>, transform_indices = @transform_8, window_bounds = array<i64: 1, 128>}, {pipeline_mode = #tpu.pipeline_mode<synchronous>, transform_indices = @transform_9, window_bounds = array<i64: 1, 128>}, {pipeline_mode = #tpu.pipeline_mode<synchronous>, transform_indices = @transform_10, window_bounds = array<i64: 1, 128>}, {pipeline_mode = #tpu.pipeline_mode<synchronous>, transform_indices = @transform_11, window_bounds = array<i64: 128, 256>}, {pipeline_mode = #tpu.pipeline_mode<synchronous>, transform_indices = @transform_12, window_bounds = array<i64: 1, 256>}, {pipeline_mode = #tpu.pipeline_mode<synchronous>, transform_indices = @transform_13, window_bounds = array<i64: 256, 128>}, {pipeline_mode = #tpu.pipeline_mode<synchronous>, transform_indices = @transform_14, window_bounds = array<i64: 1, 128>}, {transform_indices = @transform_15, window_bounds = array<i64: 2, 64, 128>}]} {
    %c0 = arith.constant 0 : index
    %c0_0 = arith.constant 0 : index
    %c0_1 = arith.constant 0 : index
    %0 = vector.load %arg2[%c0, %c0_0, %c0_1] : memref<2x1x64xf32, #tpu.memory_space<vmem>>, vector<2x1x64xf32>
    %cst = arith.constant 1.000000e+00 : f32
    %1 = vector.broadcast %cst : f32 to vector<2x1x64xf32>
    %2 = arith.subf %1, %0 : vector<2x1x64xf32>
    %cst_2 = arith.constant -1.000000e+30 : f32
    %3 = vector.broadcast %cst_2 : f32 to vector<2x1x64xf32>
    %4 = arith.mulf %2, %3 : vector<2x1x64xf32>
    %c0_3 = arith.constant 0 : index
    %c0_4 = arith.constant 0 : index
    %5 = vector.load %arg3[%c0_3, %c0_4] : memref<128x1xf32, #tpu.memory_space<vmem>>, vector<128x1xf32>
    %cst_5 = arith.constant 0.000000e+00 : f32
    %6 = vector.broadcast %cst_5 : f32 to vector<128x1xf32>
    %7 = arith.cmpf one, %5, %6 : vector<128x1xf32>
    %8 = arith.extui %7 : vector<128x1xi1> to vector<128x1xi32>
    %9 = arith.sitofp %8 : vector<128x1xi32> to vector<128x1xf32>
    %c0_6 = arith.constant 0 : index
    %c0_7 = arith.constant 0 : index
    %c0_8 = arith.constant 0 : index
    %10 = vector.load %arg1[%c0_6, %c0_7, %c0_8] : memref<2x64x128xf32, #tpu.memory_space<vmem>>, vector<2x64x128xf32>
    %11 = vector.shape_cast %10 : vector<2x64x128xf32> to vector<128x128xf32>
    %c0_9 = arith.constant 0 : index
    %c0_10 = arith.constant 0 : index
    %12 = vector.load %arg4[%c0_9, %c0_10] : memref<1x128xf32, #tpu.memory_space<vmem>>, vector<1x128xf32>
    %c0_11 = arith.constant 0 : index
    %c0_12 = arith.constant 0 : index
    %13 = vector.load %arg5[%c0_11, %c0_12] : memref<1x128xf32, #tpu.memory_space<vmem>>, vector<1x128xf32>
    %cst_13 = arith.constant dense<0.000000e+00> : vector<128xf32>
    %14 = vector.multi_reduction <add>, %11, %cst_13 [1] : vector<128x128xf32> to vector<128xf32>
    %15 = vector.shape_cast %14 : vector<128xf32> to vector<128x1xf32>
    %cst_14 = arith.constant 1.280000e+02 : f32
    %16 = vector.broadcast %cst_14 : f32 to vector<128x1xf32>
    %17 = arith.divf %15, %16 : vector<128x1xf32>
    %18 = vector.broadcast %17 : vector<128x1xf32> to vector<128x128xf32>
    %19 = arith.subf %11, %18 : vector<128x128xf32>
    %20 = arith.mulf %19, %19 : vector<128x128xf32>
    %cst_15 = arith.constant dense<0.000000e+00> : vector<128xf32>
    %21 = vector.multi_reduction <add>, %20, %cst_15 [1] : vector<128x128xf32> to vector<128xf32>
    %22 = vector.shape_cast %21 : vector<128xf32> to vector<128x1xf32>
    %cst_16 = arith.constant 1.280000e+02 : f32
    %23 = vector.broadcast %cst_16 : f32 to vector<128x1xf32>
    %24 = arith.divf %22, %23 : vector<128x1xf32>
    %25 = vector.broadcast %17 : vector<128x1xf32> to vector<128x128xf32>
    %26 = arith.subf %11, %25 : vector<128x128xf32>
    %cst_17 = arith.constant 9.99999974E-6 : f32
    %27 = vector.broadcast %cst_17 : f32 to vector<128x1xf32>
    %28 = arith.addf %24, %27 : vector<128x1xf32>
    %29 = math.sqrt %28 : vector<128x1xf32>
    %30 = vector.broadcast %29 : vector<128x1xf32> to vector<128x128xf32>
    %31 = arith.divf %26, %30 : vector<128x128xf32>
    %32 = vector.broadcast %12 : vector<1x128xf32> to vector<128x128xf32>
    %33 = arith.mulf %31, %32 : vector<128x128xf32>
    %34 = vector.broadcast %13 : vector<1x128xf32> to vector<128x128xf32>
    %35 = arith.addf %33, %34 : vector<128x128xf32>
    %36 = arith.truncf %35 : vector<128x128xf32> to vector<128x128xbf16>
    %c0_18 = arith.constant 0 : index
    %c0_19 = arith.constant 0 : index
    %37 = vector.load %arg6[%c0_18, %c0_19] : memref<128x384xbf16, #tpu.memory_space<vmem>>, vector<128x384xbf16>
    %cst_20 = arith.constant dense<0.000000e+00> : vector<128x384xf32>
    %38 = tpu.matmul %36, %37, %cst_20 {dimension_numbers = #tpu.dot_dimension_numbers<[1], [0], [0], [1], [0, 0, 1, 1], [], []>} : vector<128x128xbf16>, vector<128x384xbf16>, vector<128x384xf32> -> vector<128x384xf32>
    %c0_21 = arith.constant 0 : index
    %c0_22 = arith.constant 0 : index
    %39 = vector.load %arg7[%c0_21, %c0_22] : memref<1x384xf32, #tpu.memory_space<vmem>>, vector<1x384xf32>
    %40 = vector.broadcast %39 : vector<1x384xf32> to vector<128x384xf32>
    %41 = arith.addf %38, %40 : vector<128x384xf32>
    %42 = arith.truncf %41 : vector<128x384xf32> to vector<128x384xbf16>
    %43 = vector.extract_strided_slice %42 {offsets = [0, 0], sizes = [64, 128], strides = [1, 1]} : vector<128x384xbf16> to vector<64x128xbf16>
    %44 = vector.extract_strided_slice %42 {offsets = [0, 128], sizes = [64, 128], strides = [1, 1]} : vector<128x384xbf16> to vector<64x128xbf16>
    %45 = tpu.transpose %44, [1, 0] : vector<64x128xbf16> -> vector<128x64xbf16>
    %46 = vector.extract_strided_slice %42 {offsets = [0, 256], sizes = [64, 128], strides = [1, 1]} : vector<128x384xbf16> to vector<64x128xbf16>
    %47 = vector.extract_strided_slice %4 {offsets = [0, 0, 0], sizes = [1, 1, 64], strides = [1, 1, 1]} : vector<2x1x64xf32> to vector<1x1x64xf32>
    %48 = vector.shape_cast %47 : vector<1x1x64xf32> to vector<1x64xf32>
    %49 = vector.extract_strided_slice %43 {offsets = [0, 0], sizes = [64, 32], strides = [1, 1]} : vector<64x128xbf16> to vector<64x32xbf16>
    %50 = vector.extract_strided_slice %45 {offsets = [0, 0], sizes = [32, 64], strides = [1, 1]} : vector<128x64xbf16> to vector<32x64xbf16>
    %cst_23 = arith.constant dense<0.000000e+00> : vector<64x64xf32>
    %51 = tpu.matmul %49, %50, %cst_23 {dimension_numbers = #tpu.dot_dimension_numbers<[1], [0], [0], [1], [0, 0, 1, 1], [], []>} : vector<64x32xbf16>, vector<32x64xbf16>, vector<64x64xf32> -> vector<64x64xf32>
    %52 = vector.broadcast %48 : vector<1x64xf32> to vector<64x64xf32>
    %53 = arith.addf %51, %52 : vector<64x64xf32>
    %cst_24 = arith.constant dense<0xFF800000> : vector<64xf32>
    %54 = vector.multi_reduction <maximumf>, %53, %cst_24 [1] : vector<64x64xf32> to vector<64xf32>
    %55 = vector.shape_cast %54 : vector<64xf32> to vector<64x1xf32>
    %56 = vector.broadcast %55 : vector<64x1xf32> to vector<64x64xf32>
    %57 = arith.subf %53, %56 : vector<64x64xf32>
    %58 = math.exp %57 : vector<64x64xf32>
    %cst_25 = arith.constant dense<0.000000e+00> : vector<64xf32>
    %59 = vector.multi_reduction <add>, %58, %cst_25 [1] : vector<64x64xf32> to vector<64xf32>
    %60 = vector.shape_cast %59 : vector<64xf32> to vector<64x1xf32>
    %61 = tpu.reciprocal %60 {approx = true} : vector<64x1xf32> -> vector<64x1xf32>
    %62 = vector.broadcast %61 : vector<64x1xf32> to vector<64x64xf32>
    %63 = arith.mulf %58, %62 : vector<64x64xf32>
    %64 = arith.truncf %63 : vector<64x64xf32> to vector<64x64xbf16>
    %65 = vector.extract_strided_slice %46 {offsets = [0, 0], sizes = [64, 32], strides = [1, 1]} : vector<64x128xbf16> to vector<64x32xbf16>
    %cst_26 = arith.constant dense<0.000000e+00> : vector<64x32xf32>
    %66 = tpu.matmul %64, %65, %cst_26 {dimension_numbers = #tpu.dot_dimension_numbers<[1], [0], [0], [1], [0, 0, 1, 1], [], []>} : vector<64x64xbf16>, vector<64x32xbf16>, vector<64x32xf32> -> vector<64x32xf32>
    %c0_27 = arith.constant 0 : index
    %c0_28 = arith.constant 0 : index
    %67 = vector.load %arg17[%c0_27, %c0_28] : memref<128x128xf32, #tpu.memory_space<vmem>>, vector<64x32xf32>
    tpu.vector_store %arg17[%c0_27, %c0_28], %66 {strides = array<i32>} : memref<128x128xf32, #tpu.memory_space<vmem>>, vector<64x32xf32>,
    %68 = vector.extract_strided_slice %43 {offsets = [0, 32], sizes = [64, 32], strides = [1, 1]} : vector<64x128xbf16> to vector<64x32xbf16>
    %69 = vector.extract_strided_slice %45 {offsets = [32, 0], sizes = [32, 64], strides = [1, 1]} : vector<128x64xbf16> to vector<32x64xbf16>
    %cst_29 = arith.constant dense<0.000000e+00> : vector<64x64xf32>
    %70 = tpu.matmul %68, %69, %cst_29 {dimension_numbers = #tpu.dot_dimension_numbers<[1], [0], [0], [1], [0, 0, 1, 1], [], []>} : vector<64x32xbf16>, vector<32x64xbf16>, vector<64x64xf32> -> vector<64x64xf32>
    %71 = vector.broadcast %48 : vector<1x64xf32> to vector<64x64xf32>
    %72 = arith.addf %70, %71 : vector<64x64xf32>
    %cst_30 = arith.constant dense<0xFF800000> : vector<64xf32>
    %73 = vector.multi_reduction <maximumf>, %72, %cst_30 [1] : vector<64x64xf32> to vector<64xf32>
    %74 = vector.shape_cast %73 : vector<64xf32> to vector<64x1xf32>
    %75 = vector.broadcast %74 : vector<64x1xf32> to vector<64x64xf32>
    %76 = arith.subf %72, %75 : vector<64x64xf32>
    %77 = math.exp %76 : vector<64x64xf32>
    %cst_31 = arith.constant dense<0.000000e+00> : vector<64xf32>
    %78 = vector.multi_reduction <add>, %77, %cst_31 [1] : vector<64x64xf32> to vector<64xf32>
    %79 = vector.shape_cast %78 : vector<64xf32> to vector<64x1xf32>
    %80 = tpu.reciprocal %79 {approx = true} : vector<64x1xf32> -> vector<64x1xf32>
    %81 = vector.broadcast %80 : vector<64x1xf32> to vector<64x64xf32>
    %82 = arith.mulf %77, %81 : vector<64x64xf32>
    %83 = arith.truncf %82 : vector<64x64xf32> to vector<64x64xbf16>
    %84 = vector.extract_strided_slice %46 {offsets = [0, 32], sizes = [64, 32], strides = [1, 1]} : vector<64x128xbf16> to vector<64x32xbf16>
    %cst_32 = arith.constant dense<0.000000e+00> : vector<64x32xf32>
    %85 = tpu.matmul %83, %84, %cst_32 {dimension_numbers = #tpu.dot_dimension_numbers<[1], [0], [0], [1], [0, 0, 1, 1], [], []>} : vector<64x64xbf16>, vector<64x32xbf16>, vector<64x32xf32> -> vector<64x32xf32>
    %c0_33 = arith.constant 0 : index
    %c32 = arith.constant 32 : index
    %86 = vector.load %arg17[%c0_33, %c32] : memref<128x128xf32, #tpu.memory_space<vmem>>, vector<64x32xf32>
    tpu.vector_store %arg17[%c0_33, %c32], %85 {strides = array<i32>} : memref<128x128xf32, #tpu.memory_space<vmem>>, vector<64x32xf32>,
    %87 = vector.extract_strided_slice %43 {offsets = [0, 64], sizes = [64, 32], strides = [1, 1]} : vector<64x128xbf16> to vector<64x32xbf16>
    %88 = vector.extract_strided_slice %45 {offsets = [64, 0], sizes = [32, 64], strides = [1, 1]} : vector<128x64xbf16> to vector<32x64xbf16>
    %cst_34 = arith.constant dense<0.000000e+00> : vector<64x64xf32>
    %89 = tpu.matmul %87, %88, %cst_34 {dimension_numbers = #tpu.dot_dimension_numbers<[1], [0], [0], [1], [0, 0, 1, 1], [], []>} : vector<64x32xbf16>, vector<32x64xbf16>, vector<64x64xf32> -> vector<64x64xf32>
    %90 = vector.broadcast %48 : vector<1x64xf32> to vector<64x64xf32>
    %91 = arith.addf %89, %90 : vector<64x64xf32>
    %cst_35 = arith.constant dense<0xFF800000> : vector<64xf32>
    %92 = vector.multi_reduction <maximumf>, %91, %cst_35 [1] : vector<64x64xf32> to vector<64xf32>
    %93 = vector.shape_cast %92 : vector<64xf32> to vector<64x1xf32>
    %94 = vector.broadcast %93 : vector<64x1xf32> to vector<64x64xf32>
    %95 = arith.subf %91, %94 : vector<64x64xf32>
    %96 = math.exp %95 : vector<64x64xf32>
    %cst_36 = arith.constant dense<0.000000e+00> : vector<64xf32>
    %97 = vector.multi_reduction <add>, %96, %cst_36 [1] : vector<64x64xf32> to vector<64xf32>
    %98 = vector.shape_cast %97 : vector<64xf32> to vector<64x1xf32>
    %99 = tpu.reciprocal %98 {approx = true} : vector<64x1xf32> -> vector<64x1xf32>
    %100 = vector.broadcast %99 : vector<64x1xf32> to vector<64x64xf32>
    %101 = arith.mulf %96, %100 : vector<64x64xf32>
    %102 = arith.truncf %101 : vector<64x64xf32> to vector<64x64xbf16>
    %103 = vector.extract_strided_slice %46 {offsets = [0, 64], sizes = [64, 32], strides = [1, 1]} : vector<64x128xbf16> to vector<64x32xbf16>
    %cst_37 = arith.constant dense<0.000000e+00> : vector<64x32xf32>
    %104 = tpu.matmul %102, %103, %cst_37 {dimension_numbers = #tpu.dot_dimension_numbers<[1], [0], [0], [1], [0, 0, 1, 1], [], []>} : vector<64x64xbf16>, vector<64x32xbf16>, vector<64x32xf32> -> vector<64x32xf32>
    %c0_38 = arith.constant 0 : index
    %c64 = arith.constant 64 : index
    %105 = vector.load %arg17[%c0_38, %c64] : memref<128x128xf32, #tpu.memory_space<vmem>>, vector<64x32xf32>
    tpu.vector_store %arg17[%c0_38, %c64], %104 {strides = array<i32>} : memref<128x128xf32, #tpu.memory_space<vmem>>, vector<64x32xf32>,
    %106 = vector.extract_strided_slice %43 {offsets = [0, 96], sizes = [64, 32], strides = [1, 1]} : vector<64x128xbf16> to vector<64x32xbf16>
    %107 = vector.extract_strided_slice %45 {offsets = [96, 0], sizes = [32, 64], strides = [1, 1]} : vector<128x64xbf16> to vector<32x64xbf16>
    %cst_39 = arith.constant dense<0.000000e+00> : vector<64x64xf32>
    %108 = tpu.matmul %106, %107, %cst_39 {dimension_numbers = #tpu.dot_dimension_numbers<[1], [0], [0], [1], [0, 0, 1, 1], [], []>} : vector<64x32xbf16>, vector<32x64xbf16>, vector<64x64xf32> -> vector<64x64xf32>
    %109 = vector.broadcast %48 : vector<1x64xf32> to vector<64x64xf32>
    %110 = arith.addf %108, %109 : vector<64x64xf32>
    %cst_40 = arith.constant dense<0xFF800000> : vector<64xf32>
    %111 = vector.multi_reduction <maximumf>, %110, %cst_40 [1] : vector<64x64xf32> to vector<64xf32>
    %112 = vector.shape_cast %111 : vector<64xf32> to vector<64x1xf32>
    %113 = vector.broadcast %112 : vector<64x1xf32> to vector<64x64xf32>
    %114 = arith.subf %110, %113 : vector<64x64xf32>
    %115 = math.exp %114 : vector<64x64xf32>
    %cst_41 = arith.constant dense<0.000000e+00> : vector<64xf32>
    %116 = vector.multi_reduction <add>, %115, %cst_41 [1] : vector<64x64xf32> to vector<64xf32>
    %117 = vector.shape_cast %116 : vector<64xf32> to vector<64x1xf32>
    %118 = tpu.reciprocal %117 {approx = true} : vector<64x1xf32> -> vector<64x1xf32>
    %119 = vector.broadcast %118 : vector<64x1xf32> to vector<64x64xf32>
    %120 = arith.mulf %115, %119 : vector<64x64xf32>
    %121 = arith.truncf %120 : vector<64x64xf32> to vector<64x64xbf16>
    %122 = vector.extract_strided_slice %46 {offsets = [0, 96], sizes = [64, 32], strides = [1, 1]} : vector<64x128xbf16> to vector<64x32xbf16>
    %cst_42 = arith.constant dense<0.000000e+00> : vector<64x32xf32>
    %123 = tpu.matmul %121, %122, %cst_42 {dimension_numbers = #tpu.dot_dimension_numbers<[1], [0], [0], [1], [0, 0, 1, 1], [], []>} : vector<64x64xbf16>, vector<64x32xbf16>, vector<64x32xf32> -> vector<64x32xf32>
    %c0_43 = arith.constant 0 : index
    %c96 = arith.constant 96 : index
    %124 = vector.load %arg17[%c0_43, %c96] : memref<128x128xf32, #tpu.memory_space<vmem>>, vector<64x32xf32>
    tpu.vector_store %arg17[%c0_43, %c96], %123 {strides = array<i32>} : memref<128x128xf32, #tpu.memory_space<vmem>>, vector<64x32xf32>,
    %125 = vector.extract_strided_slice %42 {offsets = [64, 0], sizes = [64, 128], strides = [1, 1]} : vector<128x384xbf16> to vector<64x128xbf16>
    %126 = vector.extract_strided_slice %42 {offsets = [64, 128], sizes = [64, 128], strides = [1, 1]} : vector<128x384xbf16> to vector<64x128xbf16>
    %127 = tpu.transpose %126, [1, 0] : vector<64x128xbf16> -> vector<128x64xbf16>
    %128 = vector.extract_strided_slice %42 {offsets = [64, 256], sizes = [64, 128], strides = [1, 1]} : vector<128x384xbf16> to vector<64x128xbf16>
    %129 = vector.extract_strided_slice %4 {offsets = [1, 0, 0], sizes = [1, 1, 64], strides = [1, 1, 1]} : vector<2x1x64xf32> to vector<1x1x64xf32>
    %130 = vector.shape_cast %129 : vector<1x1x64xf32> to vector<1x64xf32>
    %131 = vector.extract_strided_slice %125 {offsets = [0, 0], sizes = [64, 32], strides = [1, 1]} : vector<64x128xbf16> to vector<64x32xbf16>
    %132 = vector.extract_strided_slice %127 {offsets = [0, 0], sizes = [32, 64], strides = [1, 1]} : vector<128x64xbf16> to vector<32x64xbf16>
    %cst_44 = arith.constant dense<0.000000e+00> : vector<64x64xf32>
    %133 = tpu.matmul %131, %132, %cst_44 {dimension_numbers = #tpu.dot_dimension_numbers<[1], [0], [0], [1], [0, 0, 1, 1], [], []>} : vector<64x32xbf16>, vector<32x64xbf16>, vector<64x64xf32> -> vector<64x64xf32>
    %134 = vector.broadcast %130 : vector<1x64xf32> to vector<64x64xf32>
    %135 = arith.addf %133, %134 : vector<64x64xf32>
    %cst_45 = arith.constant dense<0xFF800000> : vector<64xf32>
    %136 = vector.multi_reduction <maximumf>, %135, %cst_45 [1] : vector<64x64xf32> to vector<64xf32>
    %137 = vector.shape_cast %136 : vector<64xf32> to vector<64x1xf32>
    %138 = vector.broadcast %137 : vector<64x1xf32> to vector<64x64xf32>
    %139 = arith.subf %135, %138 : vector<64x64xf32>
    %140 = math.exp %139 : vector<64x64xf32>
    %cst_46 = arith.constant dense<0.000000e+00> : vector<64xf32>
    %141 = vector.multi_reduction <add>, %140, %cst_46 [1] : vector<64x64xf32> to vector<64xf32>
    %142 = vector.shape_cast %141 : vector<64xf32> to vector<64x1xf32>
    %143 = tpu.reciprocal %142 {approx = true} : vector<64x1xf32> -> vector<64x1xf32>
    %144 = vector.broadcast %143 : vector<64x1xf32> to vector<64x64xf32>
    %145 = arith.mulf %140, %144 : vector<64x64xf32>
    %146 = arith.truncf %145 : vector<64x64xf32> to vector<64x64xbf16>
    %147 = vector.extract_strided_slice %128 {offsets = [0, 0], sizes = [64, 32], strides = [1, 1]} : vector<64x128xbf16> to vector<64x32xbf16>
    %cst_47 = arith.constant dense<0.000000e+00> : vector<64x32xf32>
    %148 = tpu.matmul %146, %147, %cst_47 {dimension_numbers = #tpu.dot_dimension_numbers<[1], [0], [0], [1], [0, 0, 1, 1], [], []>} : vector<64x64xbf16>, vector<64x32xbf16>, vector<64x32xf32> -> vector<64x32xf32>
    %c64_48 = arith.constant 64 : index
    %c0_49 = arith.constant 0 : index
    %149 = vector.load %arg17[%c64_48, %c0_49] : memref<128x128xf32, #tpu.memory_space<vmem>>, vector<64x32xf32>
    tpu.vector_store %arg17[%c64_48, %c0_49], %148 {strides = array<i32>} : memref<128x128xf32, #tpu.memory_space<vmem>>, vector<64x32xf32>,
    %150 = vector.extract_strided_slice %125 {offsets = [0, 32], sizes = [64, 32], strides = [1, 1]} : vector<64x128xbf16> to vector<64x32xbf16>
    %151 = vector.extract_strided_slice %127 {offsets = [32, 0], sizes = [32, 64], strides = [1, 1]} : vector<128x64xbf16> to vector<32x64xbf16>
    %cst_50 = arith.constant dense<0.000000e+00> : vector<64x64xf32>
    %152 = tpu.matmul %150, %151, %cst_50 {dimension_numbers = #tpu.dot_dimension_numbers<[1], [0], [0], [1], [0, 0, 1, 1], [], []>} : vector<64x32xbf16>, vector<32x64xbf16>, vector<64x64xf32> -> vector<64x64xf32>
    %153 = vector.broadcast %130 : vector<1x64xf32> to vector<64x64xf32>
    %154 = arith.addf %152, %153 : vector<64x64xf32>
    %cst_51 = arith.constant dense<0xFF800000> : vector<64xf32>
    %155 = vector.multi_reduction <maximumf>, %154, %cst_51 [1] : vector<64x64xf32> to vector<64xf32>
    %156 = vector.shape_cast %155 : vector<64xf32> to vector<64x1xf32>
    %157 = vector.broadcast %156 : vector<64x1xf32> to vector<64x64xf32>
    %158 = arith.subf %154, %157 : vector<64x64xf32>
    %159 = math.exp %158 : vector<64x64xf32>
    %cst_52 = arith.constant dense<0.000000e+00> : vector<64xf32>
    %160 = vector.multi_reduction <add>, %159, %cst_52 [1] : vector<64x64xf32> to vector<64xf32>
    %161 = vector.shape_cast %160 : vector<64xf32> to vector<64x1xf32>
    %162 = tpu.reciprocal %161 {approx = true} : vector<64x1xf32> -> vector<64x1xf32>
    %163 = vector.broadcast %162 : vector<64x1xf32> to vector<64x64xf32>
    %164 = arith.mulf %159, %163 : vector<64x64xf32>
    %165 = arith.truncf %164 : vector<64x64xf32> to vector<64x64xbf16>
    %166 = vector.extract_strided_slice %128 {offsets = [0, 32], sizes = [64, 32], strides = [1, 1]} : vector<64x128xbf16> to vector<64x32xbf16>
    %cst_53 = arith.constant dense<0.000000e+00> : vector<64x32xf32>
    %167 = tpu.matmul %165, %166, %cst_53 {dimension_numbers = #tpu.dot_dimension_numbers<[1], [0], [0], [1], [0, 0, 1, 1], [], []>} : vector<64x64xbf16>, vector<64x32xbf16>, vector<64x32xf32> -> vector<64x32xf32>
    %c64_54 = arith.constant 64 : index
    %c32_55 = arith.constant 32 : index
    %168 = vector.load %arg17[%c64_54, %c32_55] : memref<128x128xf32, #tpu.memory_space<vmem>>, vector<64x32xf32>
    tpu.vector_store %arg17[%c64_54, %c32_55], %167 {strides = array<i32>} : memref<128x128xf32, #tpu.memory_space<vmem>>, vector<64x32xf32>,
    %169 = vector.extract_strided_slice %125 {offsets = [0, 64], sizes = [64, 32], strides = [1, 1]} : vector<64x128xbf16> to vector<64x32xbf16>
    %170 = vector.extract_strided_slice %127 {offsets = [64, 0], sizes = [32, 64], strides = [1, 1]} : vector<128x64xbf16> to vector<32x64xbf16>
    %cst_56 = arith.constant dense<0.000000e+00> : vector<64x64xf32>
    %171 = tpu.matmul %169, %170, %cst_56 {dimension_numbers = #tpu.dot_dimension_numbers<[1], [0], [0], [1], [0, 0, 1, 1], [], []>} : vector<64x32xbf16>, vector<32x64xbf16>, vector<64x64xf32> -> vector<64x64xf32>
    %172 = vector.broadcast %130 : vector<1x64xf32> to vector<64x64xf32>
    %173 = arith.addf %171, %172 : vector<64x64xf32>
    %cst_57 = arith.constant dense<0xFF800000> : vector<64xf32>
    %174 = vector.multi_reduction <maximumf>, %173, %cst_57 [1] : vector<64x64xf32> to vector<64xf32>
    %175 = vector.shape_cast %174 : vector<64xf32> to vector<64x1xf32>
    %176 = vector.broadcast %175 : vector<64x1xf32> to vector<64x64xf32>
    %177 = arith.subf %173, %176 : vector<64x64xf32>
    %178 = math.exp %177 : vector<64x64xf32>
    %cst_58 = arith.constant dense<0.000000e+00> : vector<64xf32>
    %179 = vector.multi_reduction <add>, %178, %cst_58 [1] : vector<64x64xf32> to vector<64xf32>
    %180 = vector.shape_cast %179 : vector<64xf32> to vector<64x1xf32>
    %181 = tpu.reciprocal %180 {approx = true} : vector<64x1xf32> -> vector<64x1xf32>
    %182 = vector.broadcast %181 : vector<64x1xf32> to vector<64x64xf32>
    %183 = arith.mulf %178, %182 : vector<64x64xf32>
    %184 = arith.truncf %183 : vector<64x64xf32> to vector<64x64xbf16>
    %185 = vector.extract_strided_slice %128 {offsets = [0, 64], sizes = [64, 32], strides = [1, 1]} : vector<64x128xbf16> to vector<64x32xbf16>
    %cst_59 = arith.constant dense<0.000000e+00> : vector<64x32xf32>
    %186 = tpu.matmul %184, %185, %cst_59 {dimension_numbers = #tpu.dot_dimension_numbers<[1], [0], [0], [1], [0, 0, 1, 1], [], []>} : vector<64x64xbf16>, vector<64x32xbf16>, vector<64x32xf32> -> vector<64x32xf32>
    %c64_60 = arith.constant 64 : index
    %c64_61 = arith.constant 64 : index
    %187 = vector.load %arg17[%c64_60, %c64_61] : memref<128x128xf32, #tpu.memory_space<vmem>>, vector<64x32xf32>
    tpu.vector_store %arg17[%c64_60, %c64_61], %186 {strides = array<i32>} : memref<128x128xf32, #tpu.memory_space<vmem>>, vector<64x32xf32>,
    %188 = vector.extract_strided_slice %125 {offsets = [0, 96], sizes = [64, 32], strides = [1, 1]} : vector<64x128xbf16> to vector<64x32xbf16>
    %189 = vector.extract_strided_slice %127 {offsets = [96, 0], sizes = [32, 64], strides = [1, 1]} : vector<128x64xbf16> to vector<32x64xbf16>
    %cst_62 = arith.constant dense<0.000000e+00> : vector<64x64xf32>
    %190 = tpu.matmul %188, %189, %cst_62 {dimension_numbers = #tpu.dot_dimension_numbers<[1], [0], [0], [1], [0, 0, 1, 1], [], []>} : vector<64x32xbf16>, vector<32x64xbf16>, vector<64x64xf32> -> vector<64x64xf32>
    %191 = vector.broadcast %130 : vector<1x64xf32> to vector<64x64xf32>
    %192 = arith.addf %190, %191 : vector<64x64xf32>
    %cst_63 = arith.constant dense<0xFF800000> : vector<64xf32>
    %193 = vector.multi_reduction <maximumf>, %192, %cst_63 [1] : vector<64x64xf32> to vector<64xf32>
    %194 = vector.shape_cast %193 : vector<64xf32> to vector<64x1xf32>
    %195 = vector.broadcast %194 : vector<64x1xf32> to vector<64x64xf32>
    %196 = arith.subf %192, %195 : vector<64x64xf32>
    %197 = math.exp %196 : vector<64x64xf32>
    %cst_64 = arith.constant dense<0.000000e+00> : vector<64xf32>
    %198 = vector.multi_reduction <add>, %197, %cst_64 [1] : vector<64x64xf32> to vector<64xf32>
    %199 = vector.shape_cast %198 : vector<64xf32> to vector<64x1xf32>
    %200 = tpu.reciprocal %199 {approx = true} : vector<64x1xf32> -> vector<64x1xf32>
    %201 = vector.broadcast %200 : vector<64x1xf32> to vector<64x64xf32>
    %202 = arith.mulf %197, %201 : vector<64x64xf32>
    %203 = arith.truncf %202 : vector<64x64xf32> to vector<64x64xbf16>
    %204 = vector.extract_strided_slice %128 {offsets = [0, 96], sizes = [64, 32], strides = [1, 1]} : vector<64x128xbf16> to vector<64x32xbf16>
    %cst_65 = arith.constant dense<0.000000e+00> : vector<64x32xf32>
    %205 = tpu.matmul %203, %204, %cst_65 {dimension_numbers = #tpu.dot_dimension_numbers<[1], [0], [0], [1], [0, 0, 1, 1], [], []>} : vector<64x64xbf16>, vector<64x32xbf16>, vector<64x32xf32> -> vector<64x32xf32>
    %c64_66 = arith.constant 64 : index
    %c96_67 = arith.constant 96 : index
    %206 = vector.load %arg17[%c64_66, %c96_67] : memref<128x128xf32, #tpu.memory_space<vmem>>, vector<64x32xf32>
    tpu.vector_store %arg17[%c64_66, %c96_67], %205 {strides = array<i32>} : memref<128x128xf32, #tpu.memory_space<vmem>>, vector<64x32xf32>,
    %c0_68 = arith.constant 0 : index
    %c0_69 = arith.constant 0 : index
    %207 = vector.load %arg17[%c0_68, %c0_69] : memref<128x128xf32, #tpu.memory_space<vmem>>, vector<128x128xf32>
    %208 = vector.broadcast %9 : vector<128x1xf32> to vector<128x128xf32>
    %209 = arith.mulf %207, %208 : vector<128x128xf32>
    %210 = arith.truncf %209 : vector<128x128xf32> to vector<128x128xbf16>
    %c0_70 = arith.constant 0 : index
    %c0_71 = arith.constant 0 : index
    %211 = vector.load %arg8[%c0_70, %c0_71] : memref<128x128xbf16, #tpu.memory_space<vmem>>, vector<128x128xbf16>
    %cst_72 = arith.constant dense<0.000000e+00> : vector<128x128xf32>
    %212 = tpu.matmul %210, %211, %cst_72 {dimension_numbers = #tpu.dot_dimension_numbers<[1], [0], [0], [1], [0, 0, 1, 1], [], []>} : vector<128x128xbf16>, vector<128x128xbf16>, vector<128x128xf32> -> vector<128x128xf32>
    %c0_73 = arith.constant 0 : index
    %c0_74 = arith.constant 0 : index
    %213 = vector.load %arg9[%c0_73, %c0_74] : memref<1x128xf32, #tpu.memory_space<vmem>>, vector<1x128xf32>
    %214 = vector.broadcast %213 : vector<1x128xf32> to vector<128x128xf32>
    %215 = arith.addf %212, %214 : vector<128x128xf32>
    %c0_75 = arith.constant 0 : index
    %c0_76 = arith.constant 0 : index
    %c0_77 = arith.constant 0 : index
    %216 = vector.load %arg1[%c0_75, %c0_76, %c0_77] : memref<2x64x128xf32, #tpu.memory_space<vmem>>, vector<2x64x128xf32>
    %217 = vector.shape_cast %216 : vector<2x64x128xf32> to vector<128x128xf32>
    %218 = arith.addf %217, %215 : vector<128x128xf32>
    %c0_78 = arith.constant 0 : index
    %c0_79 = arith.constant 0 : index
    %219 = vector.load %arg10[%c0_78, %c0_79] : memref<1x128xf32, #tpu.memory_space<vmem>>, vector<1x128xf32>
    %c0_80 = arith.constant 0 : index
    %c0_81 = arith.constant 0 : index
    %220 = vector.load %arg11[%c0_80, %c0_81] : memref<1x128xf32, #tpu.memory_space<vmem>>, vector<1x128xf32>
    %cst_82 = arith.constant dense<0.000000e+00> : vector<128xf32>
    %221 = vector.multi_reduction <add>, %218, %cst_82 [1] : vector<128x128xf32> to vector<128xf32>
    %222 = vector.shape_cast %221 : vector<128xf32> to vector<128x1xf32>
    %cst_83 = arith.constant 1.280000e+02 : f32
    %223 = vector.broadcast %cst_83 : f32 to vector<128x1xf32>
    %224 = arith.divf %222, %223 : vector<128x1xf32>
    %225 = vector.broadcast %224 : vector<128x1xf32> to vector<128x128xf32>
    %226 = arith.subf %218, %225 : vector<128x128xf32>
    %227 = arith.mulf %226, %226 : vector<128x128xf32>
    %cst_84 = arith.constant dense<0.000000e+00> : vector<128xf32>
    %228 = vector.multi_reduction <add>, %227, %cst_84 [1] : vector<128x128xf32> to vector<128xf32>
    %229 = vector.shape_cast %228 : vector<128xf32> to vector<128x1xf32>
    %cst_85 = arith.constant 1.280000e+02 : f32
    %230 = vector.broadcast %cst_85 : f32 to vector<128x1xf32>
    %231 = arith.divf %229, %230 : vector<128x1xf32>
    %232 = vector.broadcast %224 : vector<128x1xf32> to vector<128x128xf32>
    %233 = arith.subf %218, %232 : vector<128x128xf32>
    %cst_86 = arith.constant 9.99999974E-6 : f32
    %234 = vector.broadcast %cst_86 : f32 to vector<128x1xf32>
    %235 = arith.addf %231, %234 : vector<128x1xf32>
    %236 = math.sqrt %235 : vector<128x1xf32>
    %237 = vector.broadcast %236 : vector<128x1xf32> to vector<128x128xf32>
    %238 = arith.divf %233, %237 : vector<128x128xf32>
    %239 = vector.broadcast %219 : vector<1x128xf32> to vector<128x128xf32>
    %240 = arith.mulf %238, %239 : vector<128x128xf32>
    %241 = vector.broadcast %220 : vector<1x128xf32> to vector<128x128xf32>
    %242 = arith.addf %240, %241 : vector<128x128xf32>
    %243 = arith.truncf %242 : vector<128x128xf32> to vector<128x128xbf16>
    %c0_87 = arith.constant 0 : index
    %c0_88 = arith.constant 0 : index
    %244 = vector.load %arg12[%c0_87, %c0_88] : memref<128x256xbf16, #tpu.memory_space<vmem>>, vector<128x256xbf16>
    %cst_89 = arith.constant dense<0.000000e+00> : vector<128x256xf32>
    %245 = tpu.matmul %243, %244, %cst_89 {dimension_numbers = #tpu.dot_dimension_numbers<[1], [0], [0], [1], [0, 0, 1, 1], [], []>} : vector<128x128xbf16>, vector<128x256xbf16>, vector<128x256xf32> -> vector<128x256xf32>
    %c0_90 = arith.constant 0 : index
    %c0_91 = arith.constant 0 : index
    %246 = vector.load %arg13[%c0_90, %c0_91] : memref<1x256xf32, #tpu.memory_space<vmem>>, vector<1x256xf32>
    %247 = vector.broadcast %246 : vector<1x256xf32> to vector<128x256xf32>
    %248 = arith.addf %245, %247 : vector<128x256xf32>
    %cst_92 = arith.constant 5.000000e-01 : f32
    %249 = vector.broadcast %cst_92 : f32 to vector<128x256xf32>
    %250 = arith.mulf %249, %248 : vector<128x256xf32>
    %cst_93 = arith.constant 4.471500e-02 : f32
    %251 = vector.broadcast %cst_93 : f32 to vector<128x256xf32>
    %252 = arith.mulf %251, %248 : vector<128x256xf32>
    %253 = arith.mulf %252, %248 : vector<128x256xf32>
    %254 = arith.mulf %253, %248 : vector<128x256xf32>
    %255 = arith.addf %248, %254 : vector<128x256xf32>
    %cst_94 = arith.constant 0.797884583 : f32
    %256 = vector.broadcast %cst_94 : f32 to vector<128x256xf32>
    %257 = arith.mulf %256, %255 : vector<128x256xf32>
    %258 = math.tanh %257 : vector<128x256xf32>
    %cst_95 = arith.constant 1.000000e+00 : f32
    %259 = vector.broadcast %cst_95 : f32 to vector<128x256xf32>
    %260 = arith.addf %259, %258 : vector<128x256xf32>
    %261 = arith.mulf %250, %260 : vector<128x256xf32>
    %262 = arith.truncf %261 : vector<128x256xf32> to vector<128x256xbf16>
    %c0_96 = arith.constant 0 : index
    %c0_97 = arith.constant 0 : index
    %263 = vector.load %arg14[%c0_96, %c0_97] : memref<256x128xbf16, #tpu.memory_space<vmem>>, vector<256x128xbf16>
    %cst_98 = arith.constant dense<0.000000e+00> : vector<128x128xf32>
    %264 = tpu.matmul %262, %263, %cst_98 {dimension_numbers = #tpu.dot_dimension_numbers<[1], [0], [0], [1], [0, 0, 1, 1], [], []>} : vector<128x256xbf16>, vector<256x128xbf16>, vector<128x128xf32> -> vector<128x128xf32>
    %c0_99 = arith.constant 0 : index
    %c0_100 = arith.constant 0 : index
    %265 = vector.load %arg15[%c0_99, %c0_100] : memref<1x128xf32, #tpu.memory_space<vmem>>, vector<1x128xf32>
    %266 = vector.broadcast %265 : vector<1x128xf32> to vector<128x128xf32>
    %267 = arith.addf %264, %266 : vector<128x128xf32>
    %268 = arith.addf %218, %267 : vector<128x128xf32>
    %269 = vector.shape_cast %268 : vector<128x128xf32> to vector<2x64x128xf32>
    %c0_101 = arith.constant 0 : index
    %c0_102 = arith.constant 0 : index
    %c0_103 = arith.constant 0 : index
    %270 = vector.load %arg16[%c0_101, %c0_102, %c0_103] : memref<2x64x128xf32, #tpu.memory_space<vmem>>, vector<2x64x128xf32>
    tpu.vector_store %arg16[%c0_101, %c0_102, %c0_103], %269 {strides = array<i32>} : memref<2x64x128xf32, #tpu.memory_space<vmem>>, vector<2x64x128xf32>,
    return
  }
  func.func @transform_0(%arg0: i32) -> (i32, i32, i32) {
    %c0_i32 = arith.constant 0 : i32
    %c0_i32_0 = arith.constant 0 : i32
    %c0_i32_1 = arith.constant 0 : i32
    return %arg0, %c0_i32, %c0_i32_0 : i32, i32, i32
  }
  func.func @transform_1(%arg0: i32) -> (i32, i32, i32) {
    %c0_i32 = arith.constant 0 : i32
    %c0_i32_0 = arith.constant 0 : i32
    %c0_i32_1 = arith.constant 0 : i32
    return %arg0, %c0_i32, %c0_i32_0 : i32, i32, i32
  }
  func.func @transform_2(%arg0: i32) -> (i32, i32) {
    %c0_i32 = arith.constant 0 : i32
    %c0_i32_0 = arith.constant 0 : i32
    return %arg0, %c0_i32 : i32, i32
  }
  func.func @transform_3(%arg0: i32) -> (i32, i32) {
    %c0_i32 = arith.constant 0 : i32
    %c0_i32_0 = arith.constant 0 : i32
    %c0_i32_1 = arith.constant 0 : i32
    return %c0_i32, %c0_i32_0 : i32, i32
  }
  func.func @transform_4(%arg0: i32) -> (i32, i32) {
    %c0_i32 = arith.constant 0 : i32
    %c0_i32_0 = arith.constant 0 : i32
    %c0_i32_1 = arith.constant 0 : i32
    return %c0_i32, %c0_i32_0 : i32, i32
  }
  func.func @transform_5(%arg0: i32) -> (i32, i32) {
    %c0_i32 = arith.constant 0 : i32
    %c0_i32_0 = arith.constant 0 : i32
    %c0_i32_1 = arith.constant 0 : i32
    return %c0_i32, %c0_i32_0 : i32, i32
  }
  func.func @transform_6(%arg0: i32) -> (i32, i32) {
    %c0_i32 = arith.constant 0 : i32
    %c0_i32_0 = arith.constant 0 : i32
    %c0_i32_1 = arith.constant 0 : i32
    return %c0_i32, %c0_i32_0 : i32, i32
  }
  func.func @transform_7(%arg0: i32) -> (i32, i32) {
    %c0_i32 = arith.constant 0 : i32
    %c0_i32_0 = arith.constant 0 : i32
    %c0_i32_1 = arith.constant 0 : i32
    return %c0_i32, %c0_i32_0 : i32, i32
  }
  func.func @transform_8(%arg0: i32) -> (i32, i32) {
    %c0_i32 = arith.constant 0 : i32
    %c0_i32_0 = arith.constant 0 : i32
    %c0_i32_1 = arith.constant 0 : i32
    return %c0_i32, %c0_i32_0 : i32, i32
  }
  func.func @transform_9(%arg0: i32) -> (i32, i32) {
    %c0_i32 = arith.constant 0 : i32
    %c0_i32_0 = arith.constant 0 : i32
    %c0_i32_1 = arith.constant 0 : i32
    return %c0_i32, %c0_i32_0 : i32, i32
  }
  func.func @transform_10(%arg0: i32) -> (i32, i32) {
    %c0_i32 = arith.constant 0 : i32
    %c0_i32_0 = arith.constant 0 : i32
    %c0_i32_1 = arith.constant 0 : i32
    return %c0_i32, %c0_i32_0 : i32, i32
  }
  func.func @transform_11(%arg0: i32) -> (i32, i32) {
    %c0_i32 = arith.constant 0 : i32
    %c0_i32_0 = arith.constant 0 : i32
    %c0_i32_1 = arith.constant 0 : i32
    return %c0_i32, %c0_i32_0 : i32, i32
  }
  func.func @transform_12(%arg0: i32) -> (i32, i32) {
    %c0_i32 = arith.constant 0 : i32
    %c0_i32_0 = arith.constant 0 : i32
    %c0_i32_1 = arith.constant 0 : i32
    return %c0_i32, %c0_i32_0 : i32, i32
  }
  func.func @transform_13(%arg0: i32) -> (i32, i32) {
    %c0_i32 = arith.constant 0 : i32
    %c0_i32_0 = arith.constant 0 : i32
    %c0_i32_1 = arith.constant 0 : i32
    return %c0_i32, %c0_i32_0 : i32, i32
  }
  func.func @transform_14(%arg0: i32) -> (i32, i32) {
    %c0_i32 = arith.constant 0 : i32
    %c0_i32_0 = arith.constant 0 : i32
    %c0_i32_1 = arith.constant 0 : i32
    return %c0_i32, %c0_i32_0 : i32, i32
  }
  func.func @transform_15(%arg0: i32) -> (i32, i32, i32) {
    %c0_i32 = arith.constant 0 : i32
    %c0_i32_0 = arith.constant 0 : i32
    %c0_i32_1 = arith.constant 0 : i32
    return %arg0, %c0_i32, %c0_i32_0 : i32, i32, i32
  }
}

</mosaic_0001>

<llo_original>
// kernel: tpu_custom_call.1
$region0: #{tpu_custom_call.1}
  #allocation0 [shape = 'u32[]', space=smem, size = 0x4, offset = 0x4, fixed_abs, tag = 'smem constant byte address 0x4 - core index']
  #allocation1 [shape = 'u32[144,128]{1,0:T(1,128)}', space=vmem, size = 0x12000, scoped, tag = 'internal scratch']
  #allocation2 [shape = 'f32[128,128]{1,0:T(8,128)}', space=vmem, size = 0x10000, scoped, tag = 'scratch operand']
  %s0 = inlined_call_operand.vmem [shape: f32[4,64,128], index: 0, kind: input, shape index: {}]
  %s1 = inlined_call_operand.vmem [shape: f32[4,1,64], index: 1, kind: input, shape index: {}]
  %s2 = inlined_call_operand.vmem [shape: f32[256,1], index: 2, kind: input, shape index: {}]
  %s3 = inlined_call_operand.vmem [shape: f32[1,128], index: 3, kind: input, shape index: {}]
  %s4 = inlined_call_operand.vmem [shape: f32[1,128], index: 4, kind: input, shape index: {}]
  %s5 = inlined_call_operand.hbm [shape: bf16[128,384], index: 5, kind: input, shape index: {}]
  %s6 = inlined_call_operand.vmem [shape: f32[1,384], index: 6, kind: input, shape index: {}]
  %s7 = inlined_call_operand.hbm [shape: bf16[128,128], index: 7, kind: input, shape index: {}]
  %s8 = inlined_call_operand.vmem [shape: f32[1,128], index: 8, kind: input, shape index: {}]
  %s9 = inlined_call_operand.vmem [shape: f32[1,128], index: 9, kind: input, shape index: {}]
  %s10 = inlined_call_operand.vmem [shape: f32[1,128], index: 10, kind: input, shape index: {}]
  %s11 = inlined_call_operand.hbm [shape: bf16[128,256], index: 11, kind: input, shape index: {}]
  %s12 = inlined_call_operand.vmem [shape: f32[1,256], index: 12, kind: input, shape index: {}]
  %s13 = inlined_call_operand.hbm [shape: bf16[256,128], index: 13, kind: input, shape index: {}]
  %s14 = inlined_call_operand.vmem [shape: f32[1,128], index: 14, kind: input, shape index: {}]
  %s15 = inlined_call_operand.hbm [shape: f32[4,64,128], index: 15, kind: output, shape index: {}]
  %s16 = sld [smem:[#allocation0]]
  $region109: #{tpu_custom_call.1} parent=0
    _
  %s18 = ssub.s32 1, %s16
  %s19 = scalar_select 0, %s18, %s16
  $region1: #{tpu_custom_call.1} parent=0
    #allocation3 [shape = 'u8[98304]{0}', space=vmem, size = 0x18000, scoped, tag = 'input window, operand 5, single buffered']
    #allocation4 [shape = 's32[2]{0}', space=sflag, size = 0x8, scoped, tag = 'scoped memory for tpu_custom_call.1']
    #allocation5 [shape = 's32[2]{0}', space=sflag, size = 0x8, scoped, tag = 'scoped memory for tpu_custom_call.1']
    #allocation6 [shape = 'u8[32768]{0}', space=vmem, size = 0x8000, scoped, tag = 'input window, operand 7, single buffered']
    #allocation7 [shape = 's32[1]{0}', space=sflag, size = 0x4, scoped, tag = 'scoped memory for tpu_custom_call.1']
    #allocation8 [shape = 'u8[65536]{0}', space=vmem, size = 0x10000, scoped, tag = 'input window, operand 11, single buffered']
    #allocation9 [shape = 'u8[65536]{0}', space=vmem, size = 0x10000, scoped, tag = 'input window, operand 13, single buffered']
    #allocation10 [shape = 's32[1]{0}', space=sflag, size = 0x4, scoped, tag = 'scoped memory for tpu_custom_call.1']
    #allocation11 [shape = 'u8[131072]{0}', space=vmem, size = 0x20000, scoped, tag = 'output window, operand 0']
    %20 = vsyncpa [#allocation4], 0
    %21 = vsyncpa [#allocation7], 0
    %22 = vsyncpa [#allocation10], 0
    %23 = vsyncpa [#allocation5], 0
    %s24 = scalar_lea.sflag [#allocation5], 1
    %25 = vsyncpa %s24, 0
    loop: start=0, step=1, limit=4
    $region2: #{tpu_custom_call.1} parent=1 // loop_pre_header
      _
    $region3: #{tpu_custom_call.1} parent=1 // loop_header
      %s27 = sphi 0, %s31
      %p28 = scmp.ge.s32.totalorder %s27, 4
      %s37 = sphi 0, %s39
      %s40 = sphi 0, %s37
      %s41 = sphi 0, %s40
      %s57 = sphi 0, %s41
      %s63 = sphi 0, %s65
      %s66 = sphi 0, %s63
      %s67 = sphi 0, %s66
      %s83 = sphi 0, %s67
      %s89 = sphi 0, %s91
      %s92 = sphi 0, %s89
      %s93 = sphi 0, %s92
      %s109 = sphi 0, %s93
      %s113 = sphi 0, %s113
      %s115 = sphi 0, %s113
      %s116 = sphi 0, %s115
      %s130 = sphi 0, %s116
      %s134 = sphi 0, %s134
      %s136 = sphi 0, %s134
      %s137 = sphi 0, %s136
      %s151 = sphi 0, %s137
      %s155 = sphi 0, %s155
      %s157 = sphi 0, %s155
      %s158 = sphi 0, %s157
      %s172 = sphi 0, %s158
      %s176 = sphi 0, %s176
      %s178 = sphi 0, %s176
      %s179 = sphi 0, %s178
      %s193 = sphi 0, %s179
      %s197 = sphi 0, %s197
      %s199 = sphi 0, %s197
      %s200 = sphi 0, %s199
      %s214 = sphi 0, %s200
      %s218 = sphi 0, %s218
      %s220 = sphi 0, %s218
      %s221 = sphi 0, %s220
      %s235 = sphi 0, %s221
      %s239 = sphi 0, %s239
      %s241 = sphi 0, %s239
      %s242 = sphi 0, %s241
      %s256 = sphi 0, %s242
      %s260 = sphi 0, %s260
      %s262 = sphi 0, %s260
      %s263 = sphi 0, %s262
      %s277 = sphi 0, %s263
      %s281 = sphi 0, %s281
      %s283 = sphi 0, %s281
      %s284 = sphi 0, %s283
      %s298 = sphi 0, %s284
      %s302 = sphi 0, %s302
      %s304 = sphi 0, %s302
      %s305 = sphi 0, %s304
      %s319 = sphi 0, %s305
      %s323 = sphi 0, %s323
      %s325 = sphi 0, %s323
      %s326 = sphi 0, %s325
      %s340 = sphi 0, %s326
      %s344 = sphi 0, %s344
      %s346 = sphi 0, %s344
      %s347 = sphi 0, %s346
      %s361 = sphi 0, %s347
      %s367 = sphi 0, %s369
      %s370 = sphi 0, %s367
      %s371 = sphi 0, %s370
      %s387 = sphi 0, %s371
    $region4: #{tpu_custom_call.1} parent=1 // loop_header_branch
      %30 = sbr.rel (%p28) target = $region8
    $region5: #{tpu_custom_call.1} parent=1 // loop_body
      %s32 = ssub.s32 %s27, 1
      %s33 = ssub.s32 %s27, 2
      %s34 = sadd.s32 %s27, 1
      %s35 = ssub.s32 %s27, %s34
      %p36 = scmp.eq.s32.totalorder %s35, 0
      %s38 = sadd.s32 %s37, 1
      %s39 = scalar_select %p36, %s37, %s38
      %p42 = pneg %p36
      %p43 = scmp.eq.s32.totalorder %s27, 1
      %p44 = por %p42, %p43
      %p45 = scmp.ne.s32.totalorder %s37, %s40
      %p46 = scmp.eq.s32.totalorder %s27, 0
      %p47 = por %p45, %p46
      %p48 = scmp.ne.s32.totalorder %s37, %s40
      %p49 = scmp.eq.s32.totalorder %s32, 1
      %p50 = por %p48, %p49
      %p51 = scmp.ne.s32.totalorder %s40, %s41
      %p52 = scmp.eq.s32.totalorder %s32, 0
      %p53 = por %p51, %p52
      %p54 = scmp.ne.s32.totalorder %s40, %s41
      %p55 = scmp.eq.s32.totalorder %s33, 1
      %p56 = por %p54, %p55
      %p58 = scmp.ne.s32.totalorder %s41, %s57
      %p59 = scmp.eq.s32.totalorder %s33, 0
      %p60 = por %p58, %p59
      %s61 = ssub.s32 %s27, %s34
      %p62 = scmp.eq.s32.totalorder %s61, 0
      %s64 = sadd.s32 %s63, 1
      %s65 = scalar_select %p62, %s63, %s64
      %p68 = pneg %p62
      %p69 = scmp.eq.s32.totalorder %s27, 1
      %p70 = por %p68, %p69
      %p71 = scmp.ne.s32.totalorder %s63, %s66
      %p72 = scmp.eq.s32.totalorder %s27, 0
      %p73 = por %p71, %p72
      %p74 = scmp.ne.s32.totalorder %s63, %s66
      %p75 = scmp.eq.s32.totalorder %s32, 1
      %p76 = por %p74, %p75
      %p77 = scmp.ne.s32.totalorder %s66, %s67
      %p78 = scmp.eq.s32.totalorder %s32, 0
      %p79 = por %p77, %p78
      %p80 = scmp.ne.s32.totalorder %s66, %s67
      %p81 = scmp.eq.s32.totalorder %s33, 1
      %p82 = por %p80, %p81
      %p84 = scmp.ne.s32.totalorder %s67, %s83
      %p85 = scmp.eq.s32.totalorder %s33, 0
      %p86 = por %p84, %p85
      %s87 = ssub.s32 %s27, %s34
      %p88 = scmp.eq.s32.totalorder %s87, 0
      %s90 = sadd.s32 %s89, 1
      %s91 = scalar_select %p88, %s89, %s90
      %p94 = pneg %p88
      %p95 = scmp.eq.s32.totalorder %s27, 1
      %p96 = por %p94, %p95
      %p97 = scmp.ne.s32.totalorder %s89, %s92
      %p98 = scmp.eq.s32.totalorder %s27, 0
      %p99 = por %p97, %p98
      %p100 = scmp.ne.s32.totalorder %s89, %s92
      %p101 = scmp.eq.s32.totalorder %s32, 1
      %p102 = por %p100, %p101
      %p103 = scmp.ne.s32.totalorder %s92, %s93
      %p104 = scmp.eq.s32.totalorder %s32, 0
      %p105 = por %p103, %p104
      %p106 = scmp.ne.s32.totalorder %s92, %s93
      %p107 = scmp.eq.s32.totalorder %s33, 1
      %p108 = por %p106, %p107
      %p110 = scmp.ne.s32.totalorder %s93, %s109
      %p111 = scmp.eq.s32.totalorder %s33, 0
      %p112 = por %p110, %p111
      %s114 = sadd.s32 %s113, 1
      %p117 = scmp.eq.s32.totalorder %s27, 1
      %p118 = scmp.ne.s32.totalorder %s113, %s115
      %p119 = scmp.eq.s32.totalorder %s27, 0
      %p120 = por %p118, %p119
      %p121 = scmp.ne.s32.totalorder %s113, %s115
      %p122 = scmp.eq.s32.totalorder %s32, 1
      %p123 = por %p121, %p122
      %p124 = scmp.ne.s32.totalorder %s115, %s116
      %p125 = scmp.eq.s32.totalorder %s32, 0
      %p126 = por %p124, %p125
      %p127 = scmp.ne.s32.totalorder %s115, %s116
      %p128 = scmp.eq.s32.totalorder %s33, 1
      %p129 = por %p127, %p128
      %p131 = scmp.ne.s32.totalorder %s116, %s130
      %p132 = scmp.eq.s32.totalorder %s33, 0
      %p133 = por %p131, %p132
      %s135 = sadd.s32 %s134, 1
      %p138 = scmp.eq.s32.totalorder %s27, 1
      %p139 = scmp.ne.s32.totalorder %s134, %s136
      %p140 = scmp.eq.s32.totalorder %s27, 0
      %p141 = por %p139, %p140
      %p142 = scmp.ne.s32.totalorder %s134, %s136
      %p143 = scmp.eq.s32.totalorder %s32, 1
      %p144 = por %p142, %p143
      %p145 = scmp.ne.s32.totalorder %s136, %s137
      %p146 = scmp.eq.s32.totalorder %s32, 0
      %p147 = por %p145, %p146
      %p148 = scmp.ne.s32.totalorder %s136, %s137
      %p149 = scmp.eq.s32.totalorder %s33, 1
      %p150 = por %p148, %p149
      %p152 = scmp.ne.s32.totalorder %s137, %s151
      %p153 = scmp.eq.s32.totalorder %s33, 0
      %p154 = por %p152, %p153
      %s156 = sadd.s32 %s155, 1
      %p159 = scmp.eq.s32.totalorder %s27, 1
      %p160 = scmp.ne.s32.totalorder %s155, %s157
      %p161 = scmp.eq.s32.totalorder %s27, 0
      %p162 = por %p160, %p161
      %p163 = scmp.ne.s32.totalorder %s155, %s157
      %p164 = scmp.eq.s32.totalorder %s32, 1
      %p165 = por %p163, %p164
      %p166 = scmp.ne.s32.totalorder %s157, %s158
      %p167 = scmp.eq.s32.totalorder %s32, 0
      %p168 = por %p166, %p167
      %p169 = scmp.ne.s32.totalorder %s157, %s158
      %p170 = scmp.eq.s32.totalorder %s33, 1
      %p171 = por %p169, %p170
      %p173 = scmp.ne.s32.totalorder %s158, %s172
      %p174 = scmp.eq.s32.totalorder %s33, 0
      %p175 = por %p173, %p174
      %s177 = sadd.s32 %s176, 1
      %p180 = scmp.eq.s32.totalorder %s27, 1
      %p181 = scmp.ne.s32.totalorder %s176, %s178
      %p182 = scmp.eq.s32.totalorder %s27, 0
      %p183 = por %p181, %p182
      %p184 = scmp.ne.s32.totalorder %s176, %s178
      %p185 = scmp.eq.s32.totalorder %s32, 1
      %p186 = por %p184, %p185
      %p187 = scmp.ne.s32.totalorder %s178, %s179
      %p188 = scmp.eq.s32.totalorder %s32, 0
      %p189 = por %p187, %p188
      %p190 = scmp.ne.s32.totalorder %s178, %s179
      %p191 = scmp.eq.s32.totalorder %s33, 1
      %p192 = por %p190, %p191
      %p194 = scmp.ne.s32.totalorder %s179, %s193
      %p195 = scmp.eq.s32.totalorder %s33, 0
      %p196 = por %p194, %p195
      %s198 = sadd.s32 %s197, 1
      %p201 = scmp.eq.s32.totalorder %s27, 1
      %p202 = scmp.ne.s32.totalorder %s197, %s199
      %p203 = scmp.eq.s32.totalorder %s27, 0
      %p204 = por %p202, %p203
      %p205 = scmp.ne.s32.totalorder %s197, %s199
      %p206 = scmp.eq.s32.totalorder %s32, 1
      %p207 = por %p205, %p206
      %p208 = scmp.ne.s32.totalorder %s199, %s200
      %p209 = scmp.eq.s32.totalorder %s32, 0
      %p210 = por %p208, %p209
      %p211 = scmp.ne.s32.totalorder %s199, %s200
      %p212 = scmp.eq.s32.totalorder %s33, 1
      %p213 = por %p211, %p212
      %p215 = scmp.ne.s32.totalorder %s200, %s214
      %p216 = scmp.eq.s32.totalorder %s33, 0
      %p217 = por %p215, %p216
      %s219 = sadd.s32 %s218, 1
      %p222 = scmp.eq.s32.totalorder %s27, 1
      %p223 = scmp.ne.s32.totalorder %s218, %s220
      %p224 = scmp.eq.s32.totalorder %s27, 0
      %p225 = por %p223, %p224
      %p226 = scmp.ne.s32.totalorder %s218, %s220
      %p227 = scmp.eq.s32.totalorder %s32, 1
      %p228 = por %p226, %p227
      %p229 = scmp.ne.s32.totalorder %s220, %s221
      %p230 = scmp.eq.s32.totalorder %s32, 0
      %p231 = por %p229, %p230
      %p232 = scmp.ne.s32.totalorder %s220, %s221
      %p233 = scmp.eq.s32.totalorder %s33, 1
      %p234 = por %p232, %p233
      %p236 = scmp.ne.s32.totalorder %s221, %s235
      %p237 = scmp.eq.s32.totalorder %s33, 0
      %p238 = por %p236, %p237
      %s240 = sadd.s32 %s239, 1
      %p243 = scmp.eq.s32.totalorder %s27, 1
      %p244 = scmp.ne.s32.totalorder %s239, %s241
      %p245 = scmp.eq.s32.totalorder %s27, 0
      %p246 = por %p244, %p245
      %p247 = scmp.ne.s32.totalorder %s239, %s241
      %p248 = scmp.eq.s32.totalorder %s32, 1
      %p249 = por %p247, %p248
      %p250 = scmp.ne.s32.totalorder %s241, %s242
      %p251 = scmp.eq.s32.totalorder %s32, 0
      %p252 = por %p250, %p251
      %p253 = scmp.ne.s32.totalorder %s241, %s242
      %p254 = scmp.eq.s32.totalorder %s33, 1
      %p255 = por %p253, %p254
      %p257 = scmp.ne.s32.totalorder %s242, %s256
      %p258 = scmp.eq.s32.totalorder %s33, 0
      %p259 = por %p257, %p258
      %s261 = sadd.s32 %s260, 1
      %p264 = scmp.eq.s32.totalorder %s27, 1
      %p265 = scmp.ne.s32.totalorder %s260, %s262
      %p266 = scmp.eq.s32.totalorder %s27, 0
      %p267 = por %p265, %p266
      %p268 = scmp.ne.s32.totalorder %s260, %s262
      %p269 = scmp.eq.s32.totalorder %s32, 1
      %p270 = por %p268, %p269
      %p271 = scmp.ne.s32.totalorder %s262, %s263
      %p272 = scmp.eq.s32.totalorder %s32, 0
      %p273 = por %p271, %p272
      %p274 = scmp.ne.s32.totalorder %s262, %s263
      %p275 = scmp.eq.s32.totalorder %s33, 1
      %p276 = por %p274, %p275
      %p278 = scmp.ne.s32.totalorder %s263, %s277
      %p279 = scmp.eq.s32.totalorder %s33, 0
      %p280 = por %p278, %p279
      %s282 = sadd.s32 %s281, 1
      %p285 = scmp.eq.s32.totalorder %s27, 1
      %p286 = scmp.ne.s32.totalorder %s281, %s283
      %p287 = scmp.eq.s32.totalorder %s27, 0
      %p288 = por %p286, %p287
      %p289 = scmp.ne.s32.totalorder %s281, %s283
      %p290 = scmp.eq.s32.totalorder %s32, 1
      %p291 = por %p289, %p290
      %p292 = scmp.ne.s32.totalorder %s283, %s284
      %p293 = scmp.eq.s32.totalorder %s32, 0
      %p294 = por %p292, %p293
      %p295 = scmp.ne.s32.totalorder %s283, %s284
      %p296 = scmp.eq.s32.totalorder %s33, 1
      %p297 = por %p295, %p296
      %p299 = scmp.ne.s32.totalorder %s284, %s298
      %p300 = scmp.eq.s32.totalorder %s33, 0
      %p301 = por %p299, %p300
      %s303 = sadd.s32 %s302, 1
      %p306 = scmp.eq.s32.totalorder %s27, 1
      %p307 = scmp.ne.s32.totalorder %s302, %s304
      %p308 = scmp.eq.s32.totalorder %s27, 0
      %p309 = por %p307, %p308
      %p310 = scmp.ne.s32.totalorder %s302, %s304
      %p311 = scmp.eq.s32.totalorder %s32, 1
      %p312 = por %p310, %p311
      %p313 = scmp.ne.s32.totalorder %s304, %s305
      %p314 = scmp.eq.s32.totalorder %s32, 0
      %p315 = por %p313, %p314
      %p316 = scmp.ne.s32.totalorder %s304, %s305
      %p317 = scmp.eq.s32.totalorder %s33, 1
      %p318 = por %p316, %p317
      %p320 = scmp.ne.s32.totalorder %s305, %s319
      %p321 = scmp.eq.s32.totalorder %s33, 0
      %p322 = por %p320, %p321
      %s324 = sadd.s32 %s323, 1
      %p327 = scmp.eq.s32.totalorder %s27, 1
      %p328 = scmp.ne.s32.totalorder %s323, %s325
      %p329 = scmp.eq.s32.totalorder %s27, 0
      %p330 = por %p328, %p329
      %p331 = scmp.ne.s32.totalorder %s323, %s325
      %p332 = scmp.eq.s32.totalorder %s32, 1
      %p333 = por %p331, %p332
      %p334 = scmp.ne.s32.totalorder %s325, %s326
      %p335 = scmp.eq.s32.totalorder %s32, 0
      %p336 = por %p334, %p335
      %p337 = scmp.ne.s32.totalorder %s325, %s326
      %p338 = scmp.eq.s32.totalorder %s33, 1
      %p339 = por %p337, %p338
      %p341 = scmp.ne.s32.totalorder %s326, %s340
      %p342 = scmp.eq.s32.totalorder %s33, 0
      %p343 = por %p341, %p342
      %s345 = sadd.s32 %s344, 1
      %p348 = scmp.eq.s32.totalorder %s27, 1
      %p349 = scmp.ne.s32.totalorder %s344, %s346
      %p350 = scmp.eq.s32.totalorder %s27, 0
      %p351 = por %p349, %p350
      %p352 = scmp.ne.s32.totalorder %s344, %s346
      %p353 = scmp.eq.s32.totalorder %s32, 1
      %p354 = por %p352, %p353
      %p355 = scmp.ne.s32.totalorder %s346, %s347
      %p356 = scmp.eq.s32.totalorder %s32, 0
      %p357 = por %p355, %p356
      %p358 = scmp.ne.s32.totalorder %s346, %s347
      %p359 = scmp.eq.s32.totalorder %s33, 1
      %p360 = por %p358, %p359
      %p362 = scmp.ne.s32.totalorder %s347, %s361
      %p363 = scmp.eq.s32.totalorder %s33, 0
      %p364 = por %p362, %p363
      %s365 = ssub.s32 %s27, %s34
      %p366 = scmp.eq.s32.totalorder %s365, 0
      %s368 = sadd.s32 %s367, 1
      %s369 = scalar_select %p366, %s367, %s368
      %p372 = pneg %p366
      %p373 = scmp.eq.s32.totalorder %s27, 1
      %p374 = por %p372, %p373
      %p375 = scmp.ne.s32.totalorder %s367, %s370
      %p376 = scmp.eq.s32.totalorder %s27, 0
      %p377 = por %p375, %p376
      %p378 = scmp.ne.s32.totalorder %s367, %s370
      %p379 = scmp.eq.s32.totalorder %s32, 1
      %p380 = por %p378, %p379
      %p381 = scmp.ne.s32.totalorder %s370, %s371
      %p382 = scmp.eq.s32.totalorder %s32, 0
      %p383 = por %p381, %p382
      %p384 = scmp.ne.s32.totalorder %s370, %s371
      %p385 = scmp.eq.s32.totalorder %s33, 1
      %p386 = por %p384, %p385
      %p388 = scmp.ne.s32.totalorder %s371, %s387
      %p389 = scmp.eq.s32.totalorder %s33, 0
      %p390 = por %p388, %p389
      %p391 = scmp.le.s32.totalorder 1, %s27
      %p392 = scmp.lt.s32.totalorder %s27, 3
      %p393 = pnand %p391, %p392
      %p394 = pneg %p393
      // Predicated region
      $region9: #{tpu_custom_call.1} parent=5 // pred_check
        _
      $region10: #{tpu_custom_call.1} parent=5 // pred_check_branch
        %396 = sbr.rel (%p393) target = $region12
      $region11: #{tpu_custom_call.1} parent=5 // pred_region
        %s397 = ssub.s32 %s27, 1
        // Predicated region
        $region13: #{tpu_custom_call.1} parent=11 // pred_check
          %p398 = pneg %p126
        $region14: #{tpu_custom_call.1} parent=11 // pred_check_branch
          %400 = sbr.rel (%p398) target = $region16
        $region15: #{tpu_custom_call.1} parent=11 // pred_region
          _
        $region16: #{tpu_custom_call.1} parent=11 // pred_fallthru
          _
        // Predicated region
        $region17: #{tpu_custom_call.1} parent=11 // pred_check
          %p401 = pneg %p147
        $region18: #{tpu_custom_call.1} parent=11 // pred_check_branch
          %403 = sbr.rel (%p401) target = $region20
        $region19: #{tpu_custom_call.1} parent=11 // pred_region
          _
        $region20: #{tpu_custom_call.1} parent=11 // pred_fallthru
          _
        // Predicated region
        $region21: #{tpu_custom_call.1} parent=11 // pred_check
          %p404 = pneg %p168
        $region22: #{tpu_custom_call.1} parent=11 // pred_check_branch
          %406 = sbr.rel (%p404) target = $region24
        $region23: #{tpu_custom_call.1} parent=11 // pred_region
          %s408 = ssub.s32 3072, 3072
          %409 = vsyncadd [#allocation4], %s408
          %s410 = sshll.u32 [#allocation3], 4
          %s411 = int_to_ptr.vmem [resolvable:$true] %s410
          %416 = dma.hbm_to_vmem [thread:$0]  %s5, 3072, %s411, [#allocation4], 192, 192, 12
        $region24: #{tpu_custom_call.1} parent=11 // pred_fallthru
          _
        // Predicated region
        $region25: #{tpu_custom_call.1} parent=11 // pred_check
          %p417 = pneg %p189
        $region26: #{tpu_custom_call.1} parent=11 // pred_check_branch
          %419 = sbr.rel (%p417) target = $region28
        $region27: #{tpu_custom_call.1} parent=11 // pred_region
          _
        $region28: #{tpu_custom_call.1} parent=11 // pred_fallthru
          _
        // Predicated region
        $region29: #{tpu_custom_call.1} parent=11 // pred_check
          %p420 = pneg %p210
        $region30: #{tpu_custom_call.1} parent=11 // pred_check_branch
          %422 = sbr.rel (%p420) target = $region32
        $region31: #{tpu_custom_call.1} parent=11 // pred_region
          %s424 = ssub.s32 1024, 1024
          %425 = vsyncadd [#allocation7], %s424
          %s426 = sshll.u32 [#allocation6], 4
          %s427 = int_to_ptr.vmem [resolvable:$true] %s426
          %432 = dma.hbm_to_vmem [thread:$0]  %s7, 1024, %s427, [#allocation7], 64, 64, 4
        $region32: #{tpu_custom_call.1} parent=11 // pred_fallthru
          _
        // Predicated region
        $region33: #{tpu_custom_call.1} parent=11 // pred_check
          %p433 = pneg %p231
        $region34: #{tpu_custom_call.1} parent=11 // pred_check_branch
          %435 = sbr.rel (%p433) target = $region36
        $region35: #{tpu_custom_call.1} parent=11 // pred_region
          _
        $region36: #{tpu_custom_call.1} parent=11 // pred_fallthru
          _
        // Predicated region
        $region37: #{tpu_custom_call.1} parent=11 // pred_check
          %p436 = pneg %p252
        $region38: #{tpu_custom_call.1} parent=11 // pred_check_branch
          %438 = sbr.rel (%p436) target = $region40
        $region39: #{tpu_custom_call.1} parent=11 // pred_region
          _
        $region40: #{tpu_custom_call.1} parent=11 // pred_fallthru
          _
        // Predicated region
        $region41: #{tpu_custom_call.1} parent=11 // pred_check
          %p439 = pneg %p273
        $region42: #{tpu_custom_call.1} parent=11 // pred_check_branch
          %441 = sbr.rel (%p439) target = $region44
        $region43: #{tpu_custom_call.1} parent=11 // pred_region
          _
        $region44: #{tpu_custom_call.1} parent=11 // pred_fallthru
          _
        // Predicated region
        $region45: #{tpu_custom_call.1} parent=11 // pred_check
          %p442 = pneg %p294
        $region46: #{tpu_custom_call.1} parent=11 // pred_check_branch
          %444 = sbr.rel (%p442) target = $region48
        $region47: #{tpu_custom_call.1} parent=11 // pred_region
          %s446 = ssub.s32 2048, 2048
          %447 = vsyncadd [#allocation7], %s446
          %s448 = sshll.u32 [#allocation8], 4
          %s449 = int_to_ptr.vmem [resolvable:$true] %s448
          %454 = dma.hbm_to_vmem [thread:$0]  %s11, 2048, %s449, [#allocation7], 128, 128, 8
        $region48: #{tpu_custom_call.1} parent=11 // pred_fallthru
          _
        // Predicated region
        $region49: #{tpu_custom_call.1} parent=11 // pred_check
          %p455 = pneg %p315
        $region50: #{tpu_custom_call.1} parent=11 // pred_check_branch
          %457 = sbr.rel (%p455) target = $region52
        $region51: #{tpu_custom_call.1} parent=11 // pred_region
          _
        $region52: #{tpu_custom_call.1} parent=11 // pred_fallthru
          _
        // Predicated region
        $region53: #{tpu_custom_call.1} parent=11 // pred_check
          %p458 = pneg %p336
        $region54: #{tpu_custom_call.1} parent=11 // pred_check_branch
          %460 = sbr.rel (%p458) target = $region56
        $region55: #{tpu_custom_call.1} parent=11 // pred_region
          %s462 = ssub.s32 2048, 2048
          %463 = vsyncadd [#allocation10], %s462
          %s464 = sshll.u32 [#allocation9], 4
          %s465 = int_to_ptr.vmem [resolvable:$true] %s464
          %470 = dma.hbm_to_vmem [thread:$0]  %s13, 2048, %s465, [#allocation10], 64, 64, 4
        $region56: #{tpu_custom_call.1} parent=11 // pred_fallthru
          _
        // Predicated region
        $region57: #{tpu_custom_call.1} parent=11 // pred_check
          %p471 = pneg %p357
        $region58: #{tpu_custom_call.1} parent=11 // pred_check_branch
          %473 = sbr.rel (%p471) target = $region60
        $region59: #{tpu_custom_call.1} parent=11 // pred_region
          _
        $region60: #{tpu_custom_call.1} parent=11 // pred_fallthru
          _
      $region12: #{tpu_custom_call.1} parent=5 // pred_fallthru
        _
      %p474 = scmp.lt.s32.totalorder %s27, 2
      // Predicated region
      $region61: #{tpu_custom_call.1} parent=5 // pred_check
        %p475 = pneg %p474
      $region62: #{tpu_custom_call.1} parent=5 // pred_check_branch
        %477 = sbr.rel (%p475) target = $region64
      $region63: #{tpu_custom_call.1} parent=5 // pred_region
        // Predicated region
        $region65: #{tpu_custom_call.1} parent=63 // pred_check
          %p478 = pneg %p47
        $region66: #{tpu_custom_call.1} parent=63 // pred_check_branch
          %480 = sbr.rel (%p478) target = $region68
        $region67: #{tpu_custom_call.1} parent=63 // pred_region
          %s481 = smul.u32 2, %s27
          %p482 = scmp.lt.s32.totalorder %s481, 3
          %s483 = scalar_select %p482, %s481, 3
          %s484 = smul.addr %s483, 8
          %s485 = smul.addr %s484, 8
          %s486 = scalar_lea.vmem %s0, %s485
          %s487 = smul.u32 2, %s27
        $region68: #{tpu_custom_call.1} parent=63 // pred_fallthru
          _
        // Predicated region
        $region69: #{tpu_custom_call.1} parent=63 // pred_check
          %p488 = pneg %p73
        $region70: #{tpu_custom_call.1} parent=63 // pred_check_branch
          %490 = sbr.rel (%p488) target = $region72
        $region71: #{tpu_custom_call.1} parent=63 // pred_region
          %s491 = smul.u32 2, %s27
          %p492 = scmp.lt.s32.totalorder %s491, 3
          %s493 = scalar_select %p492, %s491, 3
          %s494 = scalar_lea.vmem %s1, %s493
          %s495 = smul.u32 2, %s27
        $region72: #{tpu_custom_call.1} parent=63 // pred_fallthru
          _
        // Predicated region
        $region73: #{tpu_custom_call.1} parent=63 // pred_check
          %p496 = pneg %p99
        $region74: #{tpu_custom_call.1} parent=63 // pred_check_branch
          %498 = sbr.rel (%p496) target = $region76
        $region75: #{tpu_custom_call.1} parent=63 // pred_region
          %s499 = smul.u32 16, %s27
          %p500 = scmp.lt.s32.totalorder %s499, 31
          %s501 = scalar_select %p500, %s499, 31
          %s502 = smul.addr %s501, 8
          %s503 = scalar_lea.vmem %s2, %s502
          %s504 = smul.u32 16, %s27
        $region76: #{tpu_custom_call.1} parent=63 // pred_fallthru
          _
      $region64: #{tpu_custom_call.1} parent=5 // pred_fallthru
        _
      %p505 = scmp.le.s32.totalorder 1, %s27
      %p506 = scmp.lt.s32.totalorder %s27, 3
      %p507 = pnand %p505, %p506
      %p508 = pneg %p507
      // Predicated region
      $region77: #{tpu_custom_call.1} parent=5 // pred_check
        _
      $region78: #{tpu_custom_call.1} parent=5 // pred_check_branch
        %510 = sbr.rel (%p507) target = $region80
      $region79: #{tpu_custom_call.1} parent=5 // pred_region
        %s511 = ssub.s32 %s27, 1
        // Predicated region
        $region81: #{tpu_custom_call.1} parent=79 // pred_check
          %p512 = pneg %p168
        $region82: #{tpu_custom_call.1} parent=79 // pred_check_branch
          %514 = sbr.rel (%p512) target = $region84
        $region83: #{tpu_custom_call.1} parent=79 // pred_region
          %515 = dma.done [#allocation4], 3072
        $region84: #{tpu_custom_call.1} parent=79 // pred_fallthru
          _
        // Predicated region
        $region85: #{tpu_custom_call.1} parent=79 // pred_check
          %p516 = pneg %p210
        $region86: #{tpu_custom_call.1} parent=79 // pred_check_branch
          %518 = sbr.rel (%p516) target = $region88
        $region87: #{tpu_custom_call.1} parent=79 // pred_region
          %519 = dma.done [#allocation7], 1024
        $region88: #{tpu_custom_call.1} parent=79 // pred_fallthru
          _
        // Predicated region
        $region89: #{tpu_custom_call.1} parent=79 // pred_check
          %p520 = pneg %p294
        $region90: #{tpu_custom_call.1} parent=79 // pred_check_branch
          %522 = sbr.rel (%p520) target = $region92
        $region91: #{tpu_custom_call.1} parent=79 // pred_region
          %523 = dma.done [#allocation7], 2048
        $region92: #{tpu_custom_call.1} parent=79 // pred_fallthru
          _
        // Predicated region
        $region93: #{tpu_custom_call.1} parent=79 // pred_check
          %p524 = pneg %p336
        $region94: #{tpu_custom_call.1} parent=79 // pred_check_branch
          %526 = sbr.rel (%p524) target = $region96
        $region95: #{tpu_custom_call.1} parent=79 // pred_region
          %527 = dma.done [#allocation10], 2048
        $region96: #{tpu_custom_call.1} parent=79 // pred_fallthru
          _
        %s528 = smul.u32 2, %s32
        %p529 = scmp.lt.s32.totalorder %s528, 3
        %s530 = scalar_select %p529, %s528, 3
        %s531 = smul.addr %s530, 8
        %s532 = smul.addr %s531, 8
        %s533 = scalar_lea.vmem %s0, %s532
        %p534 = pneg %p53
        %p535 = pneg %p50
        %s536 = smul.u32 2, %s32
        %p537 = scmp.lt.s32.totalorder %s536, 3
        %s538 = scalar_select %p537, %s536, 3
        %s539 = scalar_lea.vmem %s1, %s538
        %p540 = pneg %p79
        %p541 = pneg %p76
        %s542 = smul.u32 16, %s32
        %p543 = scmp.lt.s32.totalorder %s542, 31
        %s544 = scalar_select %p543, %s542, 31
        %s545 = smul.addr %s544, 8
        %s546 = scalar_lea.vmem %s2, %s545
        %p547 = pneg %p105
        %p548 = pneg %p102
        %p549 = pneg %p126
        %p550 = pneg %p123
        %p551 = pneg %p147
        %p552 = pneg %p144
        %p553 = pneg %p168
        %p554 = pneg %p165
        %p555 = pneg %p189
        %p556 = pneg %p186
        %p557 = pneg %p210
        %p558 = pneg %p207
        %p559 = pneg %p231
        %p560 = pneg %p228
        %p561 = pneg %p252
        %p562 = pneg %p249
        %p563 = pneg %p273
        %p564 = pneg %p270
        %p565 = pneg %p294
        %p566 = pneg %p291
        %p567 = pneg %p315
        %p568 = pneg %p312
        %p569 = pneg %p336
        %p570 = pneg %p333
        %p571 = pneg %p357
        %p572 = pneg %p354
        %p573 = pneg %p383
        %p574 = pneg %p380
        %s575 = sand.u32 %s370, 1
        %s576 = scalar_lea.sflag [#allocation5], %s575
        %s577 = sand.u32 %s370, 1
        %s578 = smul.addr %s577, 128
        %s579 = scalar_lea.vmem [#allocation11], %s578
        %s580 = smul.u32 2, %s32
        %p581 = scmp.lt.s32.totalorder %s580, 3
        %s582 = scalar_select %p581, %s580, 3
        %s583 = smul.addr %s582, 8
        %s584 = smul.addr %s583, 8
        %s585 = scalar_lea.vmem %s0, %s584
        %s586 = smul.u32 2, %s32
        %s587 = smul.u32 2, %s32
        %p588 = scmp.lt.s32.totalorder %s587, 3
        %s589 = scalar_select %p588, %s587, 3
        %s590 = scalar_lea.vmem %s1, %s589
        %s591 = smul.u32 2, %s32
        %s592 = smul.u32 16, %s32
        %p593 = scmp.lt.s32.totalorder %s592, 31
        %s594 = scalar_select %p593, %s592, 31
        %s595 = smul.addr %s594, 8
        %s596 = scalar_lea.vmem %s2, %s595
        %s597 = smul.u32 16, %s32
        %s598 = smul.u32 2, %s32
        %v600 = vld [vmem:[%s590] sm:$0x1]
        %v601 = vld [vmem:[%s590 + $0x1] sm:$0x1]
        %v602 = vsub.f32 1.0, %v600
        %v603 = vsub.f32 1.0, %v601
        %v604 = vmul.f32 %v602, -1e+30
        %v605 = vmul.f32 %v603, -1e+30
        %v606 = vld [vmem:[%s596] sm:$0xff]
        %v607 = vld [vmem:[%s596 + $0x8] sm:$0xff]
        %v608 = vld [vmem:[%s596 + $0x10] sm:$0xff]
        %v609 = vld [vmem:[%s596 + $0x18] sm:$0xff]
        %v610 = vld [vmem:[%s596 + $0x20] sm:$0xff]
        %v611 = vld [vmem:[%s596 + $0x28] sm:$0xff]
        %v612 = vld [vmem:[%s596 + $0x30] sm:$0xff]
        %v613 = vld [vmem:[%s596 + $0x38] sm:$0xff]
        %v614 = vld [vmem:[%s596 + $0x40] sm:$0xff]
        %v615 = vld [vmem:[%s596 + $0x48] sm:$0xff]
        %v616 = vld [vmem:[%s596 + $0x50] sm:$0xff]
        %v617 = vld [vmem:[%s596 + $0x58] sm:$0xff]
        %v618 = vld [vmem:[%s596 + $0x60] sm:$0xff]
        %v619 = vld [vmem:[%s596 + $0x68] sm:$0xff]
        %v620 = vld [vmem:[%s596 + $0x70] sm:$0xff]
        %v621 = vld [vmem:[%s596 + $0x78] sm:$0xff]
        %vm622 = vcmp.ne.f32.partialorder %v606, 0.0
        %vm623 = vcmp.ne.f32.partialorder %v607, 0.0
        %vm624 = vcmp.ne.f32.partialorder %v608, 0.0
        %vm625 = vcmp.ne.f32.partialorder %v609, 0.0
        %vm626 = vcmp.ne.f32.partialorder %v610, 0.0
        %vm627 = vcmp.ne.f32.partialorder %v611, 0.0
        %vm628 = vcmp.ne.f32.partialorder %v612, 0.0
        %vm629 = vcmp.ne.f32.partialorder %v613, 0.0
        %vm630 = vcmp.ne.f32.partialorder %v614, 0.0
        %vm631 = vcmp.ne.f32.partialorder %v615, 0.0
        %vm632 = vcmp.ne.f32.partialorder %v616, 0.0
        %vm633 = vcmp.ne.f32.partialorder %v617, 0.0
        %vm634 = vcmp.ne.f32.partialorder %v618, 0.0
        %vm635 = vcmp.ne.f32.partialorder %v619, 0.0
        %vm636 = vcmp.ne.f32.partialorder %v620, 0.0
        %vm637 = vcmp.ne.f32.partialorder %v621, 0.0
        %v638 = vsel %vm622, 1, 0
        %v639 = vsel %vm623, 1, 0
        %v640 = vsel %vm624, 1, 0
        %v641 = vsel %vm625, 1, 0
        %v642 = vsel %vm626, 1, 0
        %v643 = vsel %vm627, 1, 0
        %v644 = vsel %vm628, 1, 0
        %v645 = vsel %vm629, 1, 0
        %v646 = vsel %vm630, 1, 0
        %v647 = vsel %vm631, 1, 0
        %v648 = vsel %vm632, 1, 0
        %v649 = vsel %vm633, 1, 0
        %v650 = vsel %vm634, 1, 0
        %v651 = vsel %vm635, 1, 0
        %v652 = vsel %vm636, 1, 0
        %v653 = vsel %vm637, 1, 0
        %v654 = vcvt.s32.f32 %v638
        %v655 = vcvt.s32.f32 %v639
        %v656 = vcvt.s32.f32 %v640
        %v657 = vcvt.s32.f32 %v641
        %v658 = vcvt.s32.f32 %v642
        %v659 = vcvt.s32.f32 %v643
        %v660 = vcvt.s32.f32 %v644
        %v661 = vcvt.s32.f32 %v645
        %v662 = vcvt.s32.f32 %v646
        %v663 = vcvt.s32.f32 %v647
        %v664 = vcvt.s32.f32 %v648
        %v665 = vcvt.s32.f32 %v649
        %v666 = vcvt.s32.f32 %v650
        %v667 = vcvt.s32.f32 %v651
        %v668 = vcvt.s32.f32 %v652
        %v669 = vcvt.s32.f32 %v653
        %v670 = vld [vmem:[%s585] sm:$0xff]
        %v671 = vld [vmem:[%s585 + $0x8] sm:$0xff]
        %v672 = vld [vmem:[%s585 + $0x10] sm:$0xff]
        %v673 = vld [vmem:[%s585 + $0x18] sm:$0xff]
        %v674 = vld [vmem:[%s585 + $0x20] sm:$0xff]
        %v675 = vld [vmem:[%s585 + $0x28] sm:$0xff]
        %v676 = vld [vmem:[%s585 + $0x30] sm:$0xff]
        %v677 = vld [vmem:[%s585 + $0x38] sm:$0xff]
        %v678 = vld [vmem:[%s585 + $0x40] sm:$0xff]
        %v679 = vld [vmem:[%s585 + $0x48] sm:$0xff]
        %v680 = vld [vmem:[%s585 + $0x50] sm:$0xff]
        %v681 = vld [vmem:[%s585 + $0x58] sm:$0xff]
        %v682 = vld [vmem:[%s585 + $0x60] sm:$0xff]
        %v683 = vld [vmem:[%s585 + $0x68] sm:$0xff]
        %v684 = vld [vmem:[%s585 + $0x70] sm:$0xff]
        %v685 = vld [vmem:[%s585 + $0x78] sm:$0xff]
        %v686 = vld [vmem:[%s3] sm:$0x1]
        %v687 = vld [vmem:[%s4] sm:$0x1]
        %688 = vadd.xlane.f32.xlu0 %v670
        %v689 = vpop.xlane.xlu0 %688
        %690 = vadd.xlane.f32.xlu0 %v671
        %v691 = vpop.xlane.xlu0 %690
        %692 = vadd.xlane.f32.xlu0 %v672
        %v693 = vpop.xlane.xlu0 %692
        %694 = vadd.xlane.f32.xlu0 %v673
        %v695 = vpop.xlane.xlu0 %694
        %696 = vadd.xlane.f32.xlu0 %v674
        %v697 = vpop.xlane.xlu0 %696
        %698 = vadd.xlane.f32.xlu0 %v675
        %v699 = vpop.xlane.xlu0 %698
        %700 = vadd.xlane.f32.xlu0 %v676
        %v701 = vpop.xlane.xlu0 %700
        %702 = vadd.xlane.f32.xlu0 %v677
        %v703 = vpop.xlane.xlu0 %702
        %704 = vadd.xlane.f32.xlu0 %v678
        %v705 = vpop.xlane.xlu0 %704
        %706 = vadd.xlane.f32.xlu0 %v679
        %v707 = vpop.xlane.xlu0 %706
        %708 = vadd.xlane.f32.xlu0 %v680
        %v709 = vpop.xlane.xlu0 %708
        %710 = vadd.xlane.f32.xlu0 %v681
        %v711 = vpop.xlane.xlu0 %710
        %712 = vadd.xlane.f32.xlu0 %v682
        %v713 = vpop.xlane.xlu0 %712
        %714 = vadd.xlane.f32.xlu0 %v683
        %v715 = vpop.xlane.xlu0 %714
        %716 = vadd.xlane.f32.xlu0 %v684
        %v717 = vpop.xlane.xlu0 %716
        %718 = vadd.xlane.f32.xlu0 %v685
        %v719 = vpop.xlane.xlu0 %718
        %v720 = vrcp.pop 128.0
        %v721 = vmul.f32 %v689, %v720
        %v722 = vmul.f32 %v691, %v720
        %v723 = vmul.f32 %v693, %v720
        %v724 = vmul.f32 %v695, %v720
        %v725 = vmul.f32 %v697, %v720
        %v726 = vmul.f32 %v699, %v720
        %v727 = vmul.f32 %v701, %v720
        %v728 = vmul.f32 %v703, %v720
        %v729 = vmul.f32 %v705, %v720
        %v730 = vmul.f32 %v707, %v720
        %v731 = vmul.f32 %v709, %v720
        %v732 = vmul.f32 %v711, %v720
        %v733 = vmul.f32 %v713, %v720
        %v734 = vmul.f32 %v715, %v720
        %v735 = vmul.f32 %v717, %v720
        %v736 = vmul.f32 %v719, %v720
        %v737 = vsub.f32 %v670, %v721
        %v738 = vsub.f32 %v671, %v722
        %v739 = vsub.f32 %v672, %v723
        %v740 = vsub.f32 %v673, %v724
        %v741 = vsub.f32 %v674, %v725
        %v742 = vsub.f32 %v675, %v726
        %v743 = vsub.f32 %v676, %v727
        %v744 = vsub.f32 %v677, %v728
        %v745 = vsub.f32 %v678, %v729
        %v746 = vsub.f32 %v679, %v730
        %v747 = vsub.f32 %v680, %v731
        %v748 = vsub.f32 %v681, %v732
        %v749 = vsub.f32 %v682, %v733
        %v750 = vsub.f32 %v683, %v734
        %v751 = vsub.f32 %v684, %v735
        %v752 = vsub.f32 %v685, %v736
        %v753 = vmul.f32 %v737, %v737
        %v754 = vmul.f32 %v738, %v738
        %v755 = vmul.f32 %v739, %v739
        %v756 = vmul.f32 %v740, %v740
        %v757 = vmul.f32 %v741, %v741
        %v758 = vmul.f32 %v742, %v742
        %v759 = vmul.f32 %v743, %v743
        %v760 = vmul.f32 %v744, %v744
        %v761 = vmul.f32 %v745, %v745
        %v762 = vmul.f32 %v746, %v746
        %v763 = vmul.f32 %v747, %v747
        %v764 = vmul.f32 %v748, %v748
        %v765 = vmul.f32 %v749, %v749
        %v766 = vmul.f32 %v750, %v750
        %v767 = vmul.f32 %v751, %v751
        %v768 = vmul.f32 %v752, %v752
        %769 = vadd.xlane.f32.xlu0 %v753
        %v770 = vpop.xlane.xlu0 %769
        %771 = vadd.xlane.f32.xlu0 %v754
        %v772 = vpop.xlane.xlu0 %771
        %773 = vadd.xlane.f32.xlu0 %v755
        %v774 = vpop.xlane.xlu0 %773
        %775 = vadd.xlane.f32.xlu0 %v756
        %v776 = vpop.xlane.xlu0 %775
        %777 = vadd.xlane.f32.xlu0 %v757
        %v778 = vpop.xlane.xlu0 %777
        %779 = vadd.xlane.f32.xlu0 %v758
        %v780 = vpop.xlane.xlu0 %779
        %781 = vadd.xlane.f32.xlu0 %v759
        %v782 = vpop.xlane.xlu0 %781
        %783 = vadd.xlane.f32.xlu0 %v760
        %v784 = vpop.xlane.xlu0 %783
        %785 = vadd.xlane.f32.xlu0 %v761
        %v786 = vpop.xlane.xlu0 %785
        %787 = vadd.xlane.f32.xlu0 %v762
        %v788 = vpop.xlane.xlu0 %787
        %789 = vadd.xlane.f32.xlu0 %v763
        %v790 = vpop.xlane.xlu0 %789
        %791 = vadd.xlane.f32.xlu0 %v764
        %v792 = vpop.xlane.xlu0 %791
        %793 = vadd.xlane.f32.xlu0 %v765
        %v794 = vpop.xlane.xlu0 %793
        %795 = vadd.xlane.f32.xlu0 %v766
        %v796 = vpop.xlane.xlu0 %795
        %797 = vadd.xlane.f32.xlu0 %v767
        %v798 = vpop.xlane.xlu0 %797
        %799 = vadd.xlane.f32.xlu0 %v768
        %v800 = vpop.xlane.xlu0 %799
        %v801 = vmul.f32 %v770, %v720
        %v802 = vmul.f32 %v772, %v720
        %v803 = vmul.f32 %v774, %v720
        %v804 = vmul.f32 %v776, %v720
        %v805 = vmul.f32 %v778, %v720
        %v806 = vmul.f32 %v780, %v720
        %v807 = vmul.f32 %v782, %v720
        %v808 = vmul.f32 %v784, %v720
        %v809 = vmul.f32 %v786, %v720
        %v810 = vmul.f32 %v788, %v720
        %v811 = vmul.f32 %v790, %v720
        %v812 = vmul.f32 %v792, %v720
        %v813 = vmul.f32 %v794, %v720
        %v814 = vmul.f32 %v796, %v720
        %v815 = vmul.f32 %v798, %v720
        %v816 = vmul.f32 %v800, %v720
        %v817 = vadd.f32 %v801, 1e-05
        %v818 = vadd.f32 %v802, 1e-05
        %v819 = vadd.f32 %v803, 1e-05
        %v820 = vadd.f32 %v804, 1e-05
        %v821 = vadd.f32 %v805, 1e-05
        %v822 = vadd.f32 %v806, 1e-05
        %v823 = vadd.f32 %v807, 1e-05
        %v824 = vadd.f32 %v808, 1e-05
        %v825 = vadd.f32 %v809, 1e-05
        %v826 = vadd.f32 %v810, 1e-05
        %v827 = vadd.f32 %v811, 1e-05
        %v828 = vadd.f32 %v812, 1e-05
        %v829 = vadd.f32 %v813, 1e-05
        %v830 = vadd.f32 %v814, 1e-05
        %v831 = vadd.f32 %v815, 1e-05
        %v832 = vadd.f32 %v816, 1e-05
        %v833 = vrsqrt.pop %v817
        %v834 = vmul.f32 %v817, %v833
        %vm835 = vcmp.eq.f32.partialorder %v817, inf
        %v836 = vsel %vm835, %v817, %v834
        %vm837 = vcmp.eq.f32.partialorder %v817, 0.0
        %v838 = vand.u32 %v817, 2147483648
        %v839 = vsel %vm837, %v838, %v836
        %v840 = vrsqrt.pop %v818
        %v841 = vmul.f32 %v818, %v840
        %vm842 = vcmp.eq.f32.partialorder %v818, inf
        %v843 = vsel %vm842, %v818, %v841
        %vm844 = vcmp.eq.f32.partialorder %v818, 0.0
        %v845 = vand.u32 %v818, 2147483648
        %v846 = vsel %vm844, %v845, %v843
        %v847 = vrsqrt.pop %v819
        %v848 = vmul.f32 %v819, %v847
        %vm849 = vcmp.eq.f32.partialorder %v819, inf
        %v850 = vsel %vm849, %v819, %v848
        %vm851 = vcmp.eq.f32.partialorder %v819, 0.0
        %v852 = vand.u32 %v819, 2147483648
        %v853 = vsel %vm851, %v852, %v850
        %v854 = vrsqrt.pop %v820
        %v855 = vmul.f32 %v820, %v854
        %vm856 = vcmp.eq.f32.partialorder %v820, inf
        %v857 = vsel %vm856, %v820, %v855
        %vm858 = vcmp.eq.f32.partialorder %v820, 0.0
        %v859 = vand.u32 %v820, 2147483648
        %v860 = vsel %vm858, %v859, %v857
        %v861 = vrsqrt.pop %v821
        %v862 = vmul.f32 %v821, %v861
        %vm863 = vcmp.eq.f32.partialorder %v821, inf
        %v864 = vsel %vm863, %v821, %v862
        %vm865 = vcmp.eq.f32.partialorder %v821, 0.0
        %v866 = vand.u32 %v821, 2147483648
        %v867 = vsel %vm865, %v866, %v864
        %v868 = vrsqrt.pop %v822
        %v869 = vmul.f32 %v822, %v868
        %vm870 = vcmp.eq.f32.partialorder %v822, inf
        %v871 = vsel %vm870, %v822, %v869
        %vm872 = vcmp.eq.f32.partialorder %v822, 0.0
        %v873 = vand.u32 %v822, 2147483648
        %v874 = vsel %vm872, %v873, %v871
        %v875 = vrsqrt.pop %v823
        %v876 = vmul.f32 %v823, %v875
        %vm877 = vcmp.eq.f32.partialorder %v823, inf
        %v878 = vsel %vm877, %v823, %v876
        %vm879 = vcmp.eq.f32.partialorder %v823, 0.0
        %v880 = vand.u32 %v823, 2147483648
        %v881 = vsel %vm879, %v880, %v878
        %v882 = vrsqrt.pop %v824
        %v883 = vmul.f32 %v824, %v882
        %vm884 = vcmp.eq.f32.partialorder %v824, inf
        %v885 = vsel %vm884, %v824, %v883
        %vm886 = vcmp.eq.f32.partialorder %v824, 0.0
        %v887 = vand.u32 %v824, 2147483648
        %v888 = vsel %vm886, %v887, %v885
        %v889 = vrsqrt.pop %v825
        %v890 = vmul.f32 %v825, %v889
        %vm891 = vcmp.eq.f32.partialorder %v825, inf
        %v892 = vsel %vm891, %v825, %v890
        %vm893 = vcmp.eq.f32.partialorder %v825, 0.0
        %v894 = vand.u32 %v825, 2147483648
        %v895 = vsel %vm893, %v894, %v892
        %v896 = vrsqrt.pop %v826
        %v897 = vmul.f32 %v826, %v896
        %vm898 = vcmp.eq.f32.partialorder %v826, inf
        %v899 = vsel %vm898, %v826, %v897
        %vm900 = vcmp.eq.f32.partialorder %v826, 0.0
        %v901 = vand.u32 %v826, 2147483648
        %v902 = vsel %vm900, %v901, %v899
        %v903 = vrsqrt.pop %v827
        %v904 = vmul.f32 %v827, %v903
        %vm905 = vcmp.eq.f32.partialorder %v827, inf
        %v906 = vsel %vm905, %v827, %v904
        %vm907 = vcmp.eq.f32.partialorder %v827, 0.0
        %v908 = vand.u32 %v827, 2147483648
        %v909 = vsel %vm907, %v908, %v906
        %v910 = vrsqrt.pop %v828
        %v911 = vmul.f32 %v828, %v910
        %vm912 = vcmp.eq.f32.partialorder %v828, inf
        %v913 = vsel %vm912, %v828, %v911
        %vm914 = vcmp.eq.f32.partialorder %v828, 0.0
        %v915 = vand.u32 %v828, 2147483648
        %v916 = vsel %vm914, %v915, %v913
        %v917 = vrsqrt.pop %v829
        %v918 = vmul.f32 %v829, %v917
        %vm919 = vcmp.eq.f32.partialorder %v829, inf
        %v920 = vsel %vm919, %v829, %v918
        %vm921 = vcmp.eq.f32.partialorder %v829, 0.0
        %v922 = vand.u32 %v829, 2147483648
        %v923 = vsel %vm921, %v922, %v920
        %v924 = vrsqrt.pop %v830
        %v925 = vmul.f32 %v830, %v924
        %vm926 = vcmp.eq.f32.partialorder %v830, inf
        %v927 = vsel %vm926, %v830, %v925
        %vm928 = vcmp.eq.f32.partialorder %v830, 0.0
        %v929 = vand.u32 %v830, 2147483648
        %v930 = vsel %vm928, %v929, %v927
        %v931 = vrsqrt.pop %v831
        %v932 = vmul.f32 %v831, %v931
        %vm933 = vcmp.eq.f32.partialorder %v831, inf
        %v934 = vsel %vm933, %v831, %v932
        %vm935 = vcmp.eq.f32.partialorder %v831, 0.0
        %v936 = vand.u32 %v831, 2147483648
        %v937 = vsel %vm935, %v936, %v934
        %v938 = vrsqrt.pop %v832
        %v939 = vmul.f32 %v832, %v938
        %vm940 = vcmp.eq.f32.partialorder %v832, inf
        %v941 = vsel %vm940, %v832, %v939
        %vm942 = vcmp.eq.f32.partialorder %v832, 0.0
        %v943 = vand.u32 %v832, 2147483648
        %v944 = vsel %vm942, %v943, %v941
        %v945 = vrcp.pop %v839
        %v946 = vmul.f32 %v737, %v945
        %v947 = vrcp.pop %v846
        %v948 = vmul.f32 %v738, %v947
        %v949 = vrcp.pop %v853
        %v950 = vmul.f32 %v739, %v949
        %v951 = vrcp.pop %v860
        %v952 = vmul.f32 %v740, %v951
        %v953 = vrcp.pop %v867
        %v954 = vmul.f32 %v741, %v953
        %v955 = vrcp.pop %v874
        %v956 = vmul.f32 %v742, %v955
        %v957 = vrcp.pop %v881
        %v958 = vmul.f32 %v743, %v957
        %v959 = vrcp.pop %v888
        %v960 = vmul.f32 %v744, %v959
        %v961 = vrcp.pop %v895
        %v962 = vmul.f32 %v745, %v961
        %v963 = vrcp.pop %v902
        %v964 = vmul.f32 %v746, %v963
        %v965 = vrcp.pop %v909
        %v966 = vmul.f32 %v747, %v965
        %v967 = vrcp.pop %v916
        %v968 = vmul.f32 %v748, %v967
        %v969 = vrcp.pop %v923
        %v970 = vmul.f32 %v749, %v969
        %v971 = vrcp.pop %v930
        %v972 = vmul.f32 %v750, %v971
        %v973 = vrcp.pop %v937
        %v974 = vmul.f32 %v751, %v973
        %v975 = vrcp.pop %v944
        %v976 = vmul.f32 %v752, %v975
        %v978 = vlaneseq
        %v979 = vshrl.u32 %v978, 7
        %v980 = vsub.s32 0, %v979
        %v981 = vrot.slane %v686, %v980
        %v983 = vmul.f32 %v946, %v981
        %v984 = vmul.f32 %v948, %v981
        %v985 = vmul.f32 %v950, %v981
        %v986 = vmul.f32 %v952, %v981
        %v987 = vmul.f32 %v954, %v981
        %v988 = vmul.f32 %v956, %v981
        %v989 = vmul.f32 %v958, %v981
        %v990 = vmul.f32 %v960, %v981
        %v991 = vmul.f32 %v962, %v981
        %v992 = vmul.f32 %v964, %v981
        %v993 = vmul.f32 %v966, %v981
        %v994 = vmul.f32 %v968, %v981
        %v995 = vmul.f32 %v970, %v981
        %v996 = vmul.f32 %v972, %v981
        %v997 = vmul.f32 %v974, %v981
        %v998 = vmul.f32 %v976, %v981
        %v1000 = vlaneseq
        %v1001 = vshrl.u32 %v1000, 7
        %v1002 = vsub.s32 0, %v1001
        %v1003 = vrot.slane %v687, %v1002
        %v1005 = vadd.f32 %v983, %v1003
        %v1006 = vadd.f32 %v984, %v1003
        %v1007 = vadd.f32 %v985, %v1003
        %v1008 = vadd.f32 %v986, %v1003
        %v1009 = vadd.f32 %v987, %v1003
        %v1010 = vadd.f32 %v988, %v1003
        %v1011 = vadd.f32 %v989, %v1003
        %v1012 = vadd.f32 %v990, %v1003
        %v1013 = vadd.f32 %v991, %v1003
        %v1014 = vadd.f32 %v992, %v1003
        %v1015 = vadd.f32 %v993, %v1003
        %v1016 = vadd.f32 %v994, %v1003
        %v1017 = vadd.f32 %v995, %v1003
        %v1018 = vadd.f32 %v996, %v1003
        %v1019 = vadd.f32 %v997, %v1003
        %v1020 = vadd.f32 %v998, %v1003
        %v1021 = vpack.c.bf16 %v1006, %v1005
        %v1022 = vpack.c.bf16 %v1008, %v1007
        %v1023 = vpack.c.bf16 %v1010, %v1009
        %v1024 = vpack.c.bf16 %v1012, %v1011
        %v1025 = vpack.c.bf16 %v1014, %v1013
        %v1026 = vpack.c.bf16 %v1016, %v1015
        %v1027 = vpack.c.bf16 %v1018, %v1017
        %v1028 = vpack.c.bf16 %v1020, %v1019
        %v1029 = vld [vmem:[#allocation3] sm:$0xff]
        %v1030 = vld [vmem:[#allocation3 + $0x8] sm:$0xf]
        %v1031 = vld [vmem:[#allocation3 + $0xc] sm:$0xff]
        %v1032 = vld [vmem:[#allocation3 + $0x14] sm:$0xf]
        %v1033 = vld [vmem:[#allocation3 + $0x18] sm:$0xff]
        %v1034 = vld [vmem:[#allocation3 + $0x20] sm:$0xf]
        %v1035 = vld [vmem:[#allocation3 + $0x24] sm:$0xff]
        %v1036 = vld [vmem:[#allocation3 + $0x2c] sm:$0xf]
        %v1037 = vld [vmem:[#allocation3 + $0x30] sm:$0xff]
        %v1038 = vld [vmem:[#allocation3 + $0x38] sm:$0xf]
        %v1039 = vld [vmem:[#allocation3 + $0x3c] sm:$0xff]
        %v1040 = vld [vmem:[#allocation3 + $0x44] sm:$0xf]
        %v1041 = vld [vmem:[#allocation3 + $0x48] sm:$0xff]
        %v1042 = vld [vmem:[#allocation3 + $0x50] sm:$0xf]
        %v1043 = vld [vmem:[#allocation3 + $0x54] sm:$0xff]
        %v1044 = vld [vmem:[#allocation3 + $0x5c] sm:$0xf]
        %v1045 = vld [vmem:[#allocation3 + $0x60] sm:$0xff]
        %v1046 = vld [vmem:[#allocation3 + $0x68] sm:$0xf]
        %v1047 = vld [vmem:[#allocation3 + $0x6c] sm:$0xff]
        %v1048 = vld [vmem:[#allocation3 + $0x74] sm:$0xf]
        %v1049 = vld [vmem:[#allocation3 + $0x78] sm:$0xff]
        %v1050 = vld [vmem:[#allocation3 + $0x80] sm:$0xf]
        %v1051 = vld [vmem:[#allocation3 + $0x84] sm:$0xff]
        %v1052 = vld [vmem:[#allocation3 + $0x8c] sm:$0xf]
        %v1053 = vld [vmem:[#allocation3 + $0x90] sm:$0xff]
        %v1054 = vld [vmem:[#allocation3 + $0x98] sm:$0xf]
        %v1055 = vld [vmem:[#allocation3 + $0x9c] sm:$0xff]
        %v1056 = vld [vmem:[#allocation3 + $0xa4] sm:$0xf]
        %v1057 = vld [vmem:[#allocation3 + $0xa8] sm:$0xff]
        %v1058 = vld [vmem:[#allocation3 + $0xb0] sm:$0xf]
        %v1059 = vld [vmem:[#allocation3 + $0xb4] sm:$0xff]
        %v1060 = vld [vmem:[#allocation3 + $0xbc] sm:$0xf]
        %v1061 = vld [vmem:[%s6] sm:$0x7]
        %v1063 = vlaneseq
        %v1064 = vshrl.u32 %v1063, 7
        %v1065 = vsub.s32 0, %v1064
        %v1066 = vrot.slane %v1061, %v1065
        %v1067 = vlaneseq
        %v1068 = vshrl.u32 %v1067, 7
        %v1069 = vsub.s32 1, %v1068
        %v1070 = vrot.slane %v1061, %v1069
        %v1071 = vlaneseq
        %v1072 = vshrl.u32 %v1071, 7
        %v1073 = vsub.s32 2, %v1072
        %v1074 = vrot.slane %v1061, %v1073
        %v1110 = vunpack.c.l.b16 %v1029
        %v1111 = vunpack.c.h.b16 %v1029
        %v1112 = vunpack.c.l.b16 %v1030
        %v1113 = vunpack.c.l.b16 %v1031
        %v1114 = vunpack.c.h.b16 %v1031
        %v1115 = vunpack.c.l.b16 %v1032
        %v1116 = vunpack.c.l.b16 %v1033
        %v1117 = vunpack.c.h.b16 %v1033
        %v1118 = vunpack.c.l.b16 %v1034
        %v1119 = vunpack.c.l.b16 %v1035
        %v1120 = vunpack.c.h.b16 %v1035
        %v1121 = vunpack.c.l.b16 %v1036
        %v1122 = vunpack.c.l.b16 %v1037
        %v1123 = vunpack.c.h.b16 %v1037
        %v1124 = vunpack.c.l.b16 %v1038
        %v1125 = vunpack.c.l.b16 %v1039
        %v1126 = vunpack.c.h.b16 %v1039
        %v1127 = vunpack.c.l.b16 %v1040
        %v1128 = vunpack.c.l.b16 %v1041
        %v1129 = vunpack.c.h.b16 %v1041
        %v1130 = vunpack.c.l.b16 %v1042
        %v1131 = vunpack.c.l.b16 %v1043
        %v1132 = vunpack.c.h.b16 %v1043
        %v1133 = vunpack.c.l.b16 %v1044
        %v1134 = vunpack.c.l.b16 %v1045
        %v1135 = vunpack.c.h.b16 %v1045
        %v1136 = vunpack.c.l.b16 %v1046
        %v1137 = vunpack.c.l.b16 %v1047
        %v1138 = vunpack.c.h.b16 %v1047
        %v1139 = vunpack.c.l.b16 %v1048
        %v1140 = vunpack.c.l.b16 %v1049
        %v1141 = vunpack.c.h.b16 %v1049
        %v1142 = vunpack.c.l.b16 %v1050
        %v1143 = vunpack.c.l.b16 %v1051
        %v1144 = vunpack.c.h.b16 %v1051
        %v1145 = vunpack.c.l.b16 %v1052
        %v1146 = vunpack.c.l.b16 %v1053
        %v1147 = vunpack.c.h.b16 %v1053
        %v1148 = vunpack.c.l.b16 %v1054
        %v1149 = vunpack.c.l.b16 %v1055
        %v1150 = vunpack.c.h.b16 %v1055
        %v1151 = vunpack.c.l.b16 %v1056
        %v1152 = vunpack.c.l.b16 %v1057
        %v1153 = vunpack.c.h.b16 %v1057
        %v1154 = vunpack.c.l.b16 %v1058
        %v1155 = vunpack.c.l.b16 %v1059
        %v1156 = vunpack.c.h.b16 %v1059
        %v1157 = vunpack.c.l.b16 %v1060
        %v1158 = vpack.c.b16 %v1113, %v1110
        %v1159 = vpack.c.b16 %v1114, %v1111
        %v1160 = vpack.c.b16 %v1115, %v1112
        %v1161 = vpack.c.b16 %v1119, %v1116
        %v1162 = vpack.c.b16 %v1120, %v1117
        %v1163 = vpack.c.b16 %v1121, %v1118
        %v1164 = vpack.c.b16 %v1125, %v1122
        %v1165 = vpack.c.b16 %v1126, %v1123
        %v1166 = vpack.c.b16 %v1127, %v1124
        %v1167 = vpack.c.b16 %v1131, %v1128
        %v1168 = vpack.c.b16 %v1132, %v1129
        %v1169 = vpack.c.b16 %v1133, %v1130
        %v1170 = vpack.c.b16 %v1137, %v1134
        %v1171 = vpack.c.b16 %v1138, %v1135
        %v1172 = vpack.c.b16 %v1139, %v1136
        %v1173 = vpack.c.b16 %v1143, %v1140
        %v1174 = vpack.c.b16 %v1144, %v1141
        %v1175 = vpack.c.b16 %v1145, %v1142
        %v1176 = vpack.c.b16 %v1149, %v1146
        %v1177 = vpack.c.b16 %v1150, %v1147
        %v1178 = vpack.c.b16 %v1151, %v1148
        %v1179 = vpack.c.b16 %v1155, %v1152
        %v1180 = vpack.c.b16 %v1156, %v1153
        %v1181 = vpack.c.b16 %v1157, %v1154
        %1206 = vmatprep.subr.bf16.mxu0 %v1159
        %1207 = vmatpush1.bf16.msra.mxu0 %v1158
        %1208 = vmatprep.subr.bf16.mxu0 %v1162
        %1209 = vmatpush1.bf16.msra.mxu0 %v1161
        %1210 = vmatprep.subr.bf16.mxu0 %v1165
        %1211 = vmatpush1.bf16.msra.mxu0 %v1164
        %1212 = vmatprep.subr.bf16.mxu0 %v1168
        %1213 = vmatpush1.bf16.msra.mxu0 %v1167
        %1214 = vmatprep.subr.bf16.mxu0 %v1171
        %1215 = vmatpush1.bf16.msra.mxu0 %v1170
        %1216 = vmatprep.subr.bf16.mxu0 %v1174
        %1217 = vmatpush1.bf16.msra.mxu0 %v1173
        %1218 = vmatprep.subr.bf16.mxu0 %v1177
        %1219 = vmatpush1.bf16.msra.mxu0 %v1176
        %1220 = vmatprep.subr.bf16.mxu0 %v1180
        %1221 = vmatpush1.bf16.msra.mxu0 %v1179
        %1222 = vmatprep.subr.bf16.mxu0 0
        %1223 = vmatpush1.bf16.msra.mxu0 0
        %1224 = vmatprep.subr.bf16.mxu0 0
        %1225 = vmatpush1.bf16.msra.mxu0 0
        %1226 = vmatprep.subr.bf16.mxu0 0
        %1227 = vmatpush1.bf16.msra.mxu0 0
        %1228 = vmatprep.subr.bf16.mxu0 0
        %1229 = vmatpush1.bf16.msra.mxu0 0
        %1230 = vmatprep.subr.bf16.mxu0 0
        %1231 = vmatpush1.bf16.msra.mxu0 0
        %1232 = vmatprep.subr.bf16.mxu0 0
        %1233 = vmatpush1.bf16.msra.mxu0 0
        %1234 = vmatprep.subr.bf16.mxu0 0
        %1235 = vmatpush1.bf16.msra.mxu0 0
        %1236 = vmatprep.subr.bf16.mxu0 0
        %1237 = vmatpush1.bf16.msra.mxu0 0
        %1238 = vmatprep.mubr.bf16.mxu0 0
        %1239 = vmatmul.mubr.bf16.gmra.mrb[0].mxu0 %v1021
        %v1240 = vpop.f32.mrb[0].mxu0
        %v1241 = vadd.f32 %v1066, %v1240
        %v1242 = vpop.f32.mrb[0].mxu0
        %v1243 = vadd.f32 %v1070, %v1242
        %v1244 = vpop.f32.mrb[0].mxu0
        %v1245 = vadd.f32 %v1066, %v1244
        %v1246 = vpop.f32.mrb[0].mxu0
        %v1247 = vadd.f32 %v1070, %v1246
        %1248 = vmatprep.mubr.bf16.mxu0 0
        %1249 = vmatmul.mubr.bf16.gmra.mrb[0].mxu0 %v1022
        %v1250 = vpop.f32.mrb[0].mxu0
        %v1251 = vadd.f32 %v1066, %v1250
        %v1252 = vpop.f32.mrb[0].mxu0
        %v1253 = vadd.f32 %v1070, %v1252
        %v1254 = vpop.f32.mrb[0].mxu0
        %v1255 = vadd.f32 %v1066, %v1254
        %v1256 = vpop.f32.mrb[0].mxu0
        %v1257 = vadd.f32 %v1070, %v1256
        %1258 = vmatprep.mubr.bf16.mxu0 0
        %1259 = vmatmul.mubr.bf16.gmra.mrb[0].mxu0 %v1023
        %v1260 = vpop.f32.mrb[0].mxu0
        %v1261 = vadd.f32 %v1066, %v1260
        %v1262 = vpop.f32.mrb[0].mxu0
        %v1263 = vadd.f32 %v1070, %v1262
        %v1264 = vpop.f32.mrb[0].mxu0
        %v1265 = vadd.f32 %v1066, %v1264
        %v1266 = vpop.f32.mrb[0].mxu0
        %v1267 = vadd.f32 %v1070, %v1266
        %1268 = vmatprep.mubr.bf16.mxu0 0
        %1269 = vmatmul.mubr.bf16.gmra.mrb[0].mxu0 %v1024
        %v1270 = vpop.f32.mrb[0].mxu0
        %v1271 = vadd.f32 %v1066, %v1270
        %v1272 = vpop.f32.mrb[0].mxu0
        %v1273 = vadd.f32 %v1070, %v1272
        %v1274 = vpop.f32.mrb[0].mxu0
        %v1275 = vadd.f32 %v1066, %v1274
        %v1276 = vpop.f32.mrb[0].mxu0
        %v1277 = vadd.f32 %v1070, %v1276
        %1278 = vmatprep.mubr.bf16.mxu0 0
        %1279 = vmatmul.mubr.bf16.gmra.mrb[0].mxu0 %v1025
        %v1280 = vpop.f32.mrb[0].mxu0
        %v1281 = vadd.f32 %v1066, %v1280
        %v1282 = vpop.f32.mrb[0].mxu0
        %v1283 = vadd.f32 %v1070, %v1282
        %v1284 = vpop.f32.mrb[0].mxu0
        %v1285 = vadd.f32 %v1066, %v1284
        %v1286 = vpop.f32.mrb[0].mxu0
        %v1287 = vadd.f32 %v1070, %v1286
        %1288 = vmatprep.mubr.bf16.mxu0 0
        %1289 = vmatmul.mubr.bf16.gmra.mrb[0].mxu0 %v1026
        %v1290 = vpop.f32.mrb[0].mxu0
        %v1291 = vadd.f32 %v1066, %v1290
        %v1292 = vpop.f32.mrb[0].mxu0
        %v1293 = vadd.f32 %v1070, %v1292
        %v1294 = vpop.f32.mrb[0].mxu0
        %v1295 = vadd.f32 %v1066, %v1294
        %v1296 = vpop.f32.mrb[0].mxu0
        %v1297 = vadd.f32 %v1070, %v1296
        %1298 = vmatprep.mubr.bf16.mxu0 0
        %1299 = vmatmul.mubr.bf16.gmra.mrb[0].mxu0 %v1027
        %v1300 = vpop.f32.mrb[0].mxu0
        %v1301 = vadd.f32 %v1066, %v1300
        %v1302 = vpop.f32.mrb[0].mxu0
        %v1303 = vadd.f32 %v1070, %v1302
        %v1304 = vpop.f32.mrb[0].mxu0
        %v1305 = vadd.f32 %v1066, %v1304
        %v1306 = vpop.f32.mrb[0].mxu0
        %v1307 = vadd.f32 %v1070, %v1306
        %1308 = vmatprep.mubr.bf16.mxu0 0
        %1309 = vmatmul.mubr.bf16.gmra.mrb[0].mxu0 %v1028
        %v1310 = vpop.f32.mrb[0].mxu0
        %v1311 = vadd.f32 %v1066, %v1310
        %v1312 = vpop.f32.mrb[0].mxu0
        %v1313 = vadd.f32 %v1070, %v1312
        %v1314 = vpop.f32.mrb[0].mxu0
        %v1315 = vadd.f32 %v1066, %v1314
        %v1316 = vpop.f32.mrb[0].mxu0
        %v1317 = vadd.f32 %v1070, %v1316
        %1318 = vdwg.mxu0
        %1319 = vmatprep.subr.bf16.mxu0 0
        %1320 = vmatpush1.bf16.msra.mxu0 %v1160
        %1321 = vmatprep.subr.bf16.mxu0 0
        %1322 = vmatpush1.bf16.msra.mxu0 %v1163
        %1323 = vmatprep.subr.bf16.mxu0 0
        %1324 = vmatpush1.bf16.msra.mxu0 %v1166
        %1325 = vmatprep.subr.bf16.mxu0 0
        %1326 = vmatpush1.bf16.msra.mxu0 %v1169
        %1327 = vmatprep.subr.bf16.mxu0 0
        %1328 = vmatpush1.bf16.msra.mxu0 %v1172
        %1329 = vmatprep.subr.bf16.mxu0 0
        %1330 = vmatpush1.bf16.msra.mxu0 %v1175
        %1331 = vmatprep.subr.bf16.mxu0 0
        %1332 = vmatpush1.bf16.msra.mxu0 %v1178
        %1333 = vmatprep.subr.bf16.mxu0 0
        %1334 = vmatpush1.bf16.msra.mxu0 %v1181
        %1335 = vmatprep.subr.bf16.mxu0 0
        %1336 = vmatpush1.bf16.msra.mxu0 0
        %1337 = vmatprep.subr.bf16.mxu0 0
        %1338 = vmatpush1.bf16.msra.mxu0 0
        %1339 = vmatprep.subr.bf16.mxu0 0
        %1340 = vmatpush1.bf16.msra.mxu0 0
        %1341 = vmatprep.subr.bf16.mxu0 0
        %1342 = vmatpush1.bf16.msra.mxu0 0
        %1343 = vmatprep.subr.bf16.mxu0 0
        %1344 = vmatpush1.bf16.msra.mxu0 0
        %1345 = vmatprep.subr.bf16.mxu0 0
        %1346 = vmatpush1.bf16.msra.mxu0 0
        %1347 = vmatprep.subr.bf16.mxu0 0
        %1348 = vmatpush1.bf16.msra.mxu0 0
        %1349 = vmatprep.subr.bf16.mxu0 0
        %1350 = vmatpush1.bf16.msra.mxu0 0
        %1351 = vmatprep.mubr.bf16.mxu0 0
        %1352 = vmatmul.mubr.bf16.gmra.mrb[0].mxu0 %v1021
        %v1353 = vpop.f32.mrb[0].mxu0
        %v1354 = vadd.f32 %v1074, %v1353
        %v1355 = vpop.f32.mrb[0].mxu0
        %v1356 = vpop.f32.mrb[0].mxu0
        %v1357 = vadd.f32 %v1074, %v1356
        %v1358 = vpop.f32.mrb[0].mxu0
        %1359 = vmatprep.mubr.bf16.mxu0 0
        %1360 = vmatmul.mubr.bf16.gmra.mrb[0].mxu0 %v1022
        %v1361 = vpop.f32.mrb[0].mxu0
        %v1362 = vadd.f32 %v1074, %v1361
        %v1363 = vpop.f32.mrb[0].mxu0
        %v1364 = vpop.f32.mrb[0].mxu0
        %v1365 = vadd.f32 %v1074, %v1364
        %v1366 = vpop.f32.mrb[0].mxu0
        %1367 = vmatprep.mubr.bf16.mxu0 0
        %1368 = vmatmul.mubr.bf16.gmra.mrb[0].mxu0 %v1023
        %v1369 = vpop.f32.mrb[0].mxu0
        %v1370 = vadd.f32 %v1074, %v1369
        %v1371 = vpop.f32.mrb[0].mxu0
        %v1372 = vpop.f32.mrb[0].mxu0
        %v1373 = vadd.f32 %v1074, %v1372
        %v1374 = vpop.f32.mrb[0].mxu0
        %1375 = vmatprep.mubr.bf16.mxu0 0
        %1376 = vmatmul.mubr.bf16.gmra.mrb[0].mxu0 %v1024
        %v1377 = vpop.f32.mrb[0].mxu0
        %v1378 = vadd.f32 %v1074, %v1377
        %v1379 = vpop.f32.mrb[0].mxu0
        %v1380 = vpop.f32.mrb[0].mxu0
        %v1381 = vadd.f32 %v1074, %v1380
        %v1382 = vpop.f32.mrb[0].mxu0
        %1383 = vmatprep.mubr.bf16.mxu0 0
        %1384 = vmatmul.mubr.bf16.gmra.mrb[0].mxu0 %v1025
        %v1385 = vpop.f32.mrb[0].mxu0
        %v1386 = vadd.f32 %v1074, %v1385
        %v1387 = vpop.f32.mrb[0].mxu0
        %v1388 = vpop.f32.mrb[0].mxu0
        %v1389 = vadd.f32 %v1074, %v1388
        %v1390 = vpop.f32.mrb[0].mxu0
        %1391 = vmatprep.mubr.bf16.mxu0 0
        %1392 = vmatmul.mubr.bf16.gmra.mrb[0].mxu0 %v1026
        %v1393 = vpop.f32.mrb[0].mxu0
        %v1394 = vadd.f32 %v1074, %v1393
        %v1395 = vpop.f32.mrb[0].mxu0
        %v1396 = vpop.f32.mrb[0].mxu0
        %v1397 = vadd.f32 %v1074, %v1396
        %v1398 = vpop.f32.mrb[0].mxu0
        %1399 = vmatprep.mubr.bf16.mxu0 0
        %1400 = vmatmul.mubr.bf16.gmra.mrb[0].mxu0 %v1027
        %v1401 = vpop.f32.mrb[0].mxu0
        %v1402 = vadd.f32 %v1074, %v1401
        %v1403 = vpop.f32.mrb[0].mxu0
        %v1404 = vpop.f32.mrb[0].mxu0
        %v1405 = vadd.f32 %v1074, %v1404
        %v1406 = vpop.f32.mrb[0].mxu0
        %1407 = vmatprep.mubr.bf16.mxu0 0
        %1408 = vmatmul.mubr.bf16.gmra.mrb[0].mxu0 %v1028
        %v1409 = vpop.f32.mrb[0].mxu0
        %v1410 = vadd.f32 %v1074, %v1409
        %v1411 = vpop.f32.mrb[0].mxu0
        %v1412 = vpop.f32.mrb[0].mxu0
        %v1413 = vadd.f32 %v1074, %v1412
        %v1414 = vpop.f32.mrb[0].mxu0
        %1415 = vdwg.mxu0
        %v1416 = vpack.c.bf16 %v1245, %v1241
        %v1417 = vpack.c.bf16 %v1247, %v1243
        %v1418 = vpack.c.bf16 %v1357, %v1354
        %v1419 = vpack.c.bf16 %v1255, %v1251
        %v1420 = vpack.c.bf16 %v1257, %v1253
        %v1421 = vpack.c.bf16 %v1365, %v1362
        %v1422 = vpack.c.bf16 %v1265, %v1261
        %v1423 = vpack.c.bf16 %v1267, %v1263
        %v1424 = vpack.c.bf16 %v1373, %v1370
        %v1425 = vpack.c.bf16 %v1275, %v1271
        %v1426 = vpack.c.bf16 %v1277, %v1273
        %v1427 = vpack.c.bf16 %v1381, %v1378
        %v1428 = vpack.c.bf16 %v1285, %v1281
        %v1429 = vpack.c.bf16 %v1287, %v1283
        %v1430 = vpack.c.bf16 %v1389, %v1386
        %v1431 = vpack.c.bf16 %v1295, %v1291
        %v1432 = vpack.c.bf16 %v1297, %v1293
        %v1433 = vpack.c.bf16 %v1397, %v1394
        %v1434 = vpack.c.bf16 %v1305, %v1301
        %v1435 = vpack.c.bf16 %v1307, %v1303
        %v1436 = vpack.c.bf16 %v1405, %v1402
        %v1437 = vpack.c.bf16 %v1315, %v1311
        %v1438 = vpack.c.bf16 %v1317, %v1313
        %v1439 = vpack.c.bf16 %v1413, %v1410
        %v1441 = vlaneseq
        %v1442 = vshrl.u32 %v1441, 7
        %v1443 = vsub.s32 0, %v1442
        %v1444 = vrot.slane %v604, %v1443
        %vm1446 = vcmask 261120
        %v1448 = vsel %vm1446, %v1416, 0
        %v1451 = vsel %vm1446, %v1419, 0
        %v1454 = vsel %vm1446, %v1422, 0
        %v1457 = vsel %vm1446, %v1425, 0
        %v1460 = vsel %vm1446, %v1417, 0
        %v1463 = vsel %vm1446, %v1420, 0
        %v1466 = vsel %vm1446, %v1423, 0
        %v1469 = vsel %vm1446, %v1426, 0
        %1471 = vmatprep.subr.bf16.mxu0 0
        %1472 = vmatpush1.bf16.xpose.msra.mxu0 %v1460
        %1473 = vmatprep.subr.bf16.mxu0 0
        %1474 = vmatpush1.bf16.xpose.msra.mxu0 %v1463
        %1475 = vmatprep.subr.bf16.mxu0 0
        %1476 = vmatpush1.bf16.xpose.msra.mxu0 %v1466
        %1477 = vmatprep.subr.bf16.mxu0 0
        %1478 = vmatpush1.bf16.xpose.msra.mxu0 %v1469
        %1479 = vmatprep.subr.bf16.mxu0 0
        %1480 = vmatpush1.bf16.xpose.msra.mxu0 0
        %1481 = vmatprep.subr.bf16.mxu0 0
        %1482 = vmatpush1.bf16.xpose.msra.mxu0 0
        %1483 = vmatprep.subr.bf16.mxu0 0
        %1484 = vmatpush1.bf16.xpose.msra.mxu0 0
        %1485 = vmatprep.subr.bf16.mxu0 0
        %1486 = vmatpush1.bf16.xpose.msra.mxu0 0
        %1487 = vmatprep.subr.bf16.mxu0 0
        %1488 = vmatpush1.bf16.xpose.msra.mxu0 0
        %1489 = vmatprep.subr.bf16.mxu0 0
        %1490 = vmatpush1.bf16.xpose.msra.mxu0 0
        %1491 = vmatprep.subr.bf16.mxu0 0
        %1492 = vmatpush1.bf16.xpose.msra.mxu0 0
        %1493 = vmatprep.subr.bf16.mxu0 0
        %1494 = vmatpush1.bf16.xpose.msra.mxu0 0
        %1495 = vmatprep.subr.bf16.mxu0 0
        %1496 = vmatpush1.bf16.xpose.msra.mxu0 0
        %1497 = vmatprep.subr.bf16.mxu0 0
        %1498 = vmatpush1.bf16.xpose.msra.mxu0 0
        %1499 = vmatprep.subr.bf16.mxu0 0
        %1500 = vmatpush1.bf16.xpose.msra.mxu0 0
        %1501 = vmatprep.subr.bf16.mxu0 0
        %1502 = vmatpush1.bf16.xpose.msra.mxu0 0
        %1503 = vmatprep.mubr.bf16.mxu0 0
        %1504 = vmatmul.mubr.bf16.gmra.mrb[0].mxu0 %v1448
        %v1505 = vpop.f32.mrb[0].mxu0
        %v1506 = vadd.f32 %v1444, %v1505
        %v1507 = vpop.f32.mrb[0].mxu0
        %v1508 = vpop.f32.mrb[0].mxu0
        %v1509 = vadd.f32 %v1444, %v1508
        %v1510 = vpop.f32.mrb[0].mxu0
        %1511 = vmatprep.mubr.bf16.mxu0 0
        %1512 = vmatmul.mubr.bf16.gmra.mrb[0].mxu0 %v1451
        %v1513 = vpop.f32.mrb[0].mxu0
        %v1514 = vadd.f32 %v1444, %v1513
        %v1515 = vpop.f32.mrb[0].mxu0
        %v1516 = vpop.f32.mrb[0].mxu0
        %v1517 = vadd.f32 %v1444, %v1516
        %v1518 = vpop.f32.mrb[0].mxu0
        %1519 = vmatprep.mubr.bf16.mxu0 0
        %1520 = vmatmul.mubr.bf16.gmra.mrb[0].mxu0 %v1454
        %v1521 = vpop.f32.mrb[0].mxu0
        %v1522 = vadd.f32 %v1444, %v1521
        %v1523 = vpop.f32.mrb[0].mxu0
        %v1524 = vpop.f32.mrb[0].mxu0
        %v1525 = vadd.f32 %v1444, %v1524
        %v1526 = vpop.f32.mrb[0].mxu0
        %1527 = vmatprep.mubr.bf16.mxu0 0
        %1528 = vmatmul.mubr.bf16.gmra.mrb[0].mxu0 %v1457
        %v1529 = vpop.f32.mrb[0].mxu0
        %v1530 = vadd.f32 %v1444, %v1529
        %v1531 = vpop.f32.mrb[0].mxu0
        %v1532 = vpop.f32.mrb[0].mxu0
        %v1533 = vadd.f32 %v1444, %v1532
        %v1534 = vpop.f32.mrb[0].mxu0
        %1535 = vdwg.mxu0
        %vm1536 = vcmask 523264
        %v1537 = vsel %vm1536, %v1506, -inf
        %1538 = vmax.xlane.f32.xlu0 %v1537
        %v1539 = vpop.xlane.xlu0 %1538
        %v1540 = vsel %vm1536, %v1509, -inf
        %1541 = vmax.xlane.f32.xlu0 %v1540
        %v1542 = vpop.xlane.xlu0 %1541
        %v1543 = vsel %vm1536, %v1514, -inf
        %1544 = vmax.xlane.f32.xlu0 %v1543
        %v1545 = vpop.xlane.xlu0 %1544
        %v1546 = vsel %vm1536, %v1517, -inf
        %1547 = vmax.xlane.f32.xlu0 %v1546
        %v1548 = vpop.xlane.xlu0 %1547
        %v1549 = vsel %vm1536, %v1522, -inf
        %1550 = vmax.xlane.f32.xlu0 %v1549
        %v1551 = vpop.xlane.xlu0 %1550
        %v1552 = vsel %vm1536, %v1525, -inf
        %1553 = vmax.xlane.f32.xlu0 %v1552
        %v1554 = vpop.xlane.xlu0 %1553
        %v1555 = vsel %vm1536, %v1530, -inf
        %1556 = vmax.xlane.f32.xlu0 %v1555
        %v1557 = vpop.xlane.xlu0 %1556
        %v1558 = vsel %vm1536, %v1533, -inf
        %1559 = vmax.xlane.f32.xlu0 %v1558
        %v1560 = vpop.xlane.xlu0 %1559
        %v1561 = vsub.f32 %v1506, %v1539
        %v1562 = vsub.f32 %v1509, %v1542
        %v1563 = vsub.f32 %v1514, %v1545
        %v1564 = vsub.f32 %v1517, %v1548
        %v1565 = vsub.f32 %v1522, %v1551
        %v1566 = vsub.f32 %v1525, %v1554
        %v1567 = vsub.f32 %v1530, %v1557
        %v1568 = vsub.f32 %v1533, %v1560
        %v1569 = vmul.f32 %v1561, 1.442695
        %v1570 = vpow.pop %v1569
        %v1571 = vmul.f32 %v1562, 1.442695
        %v1572 = vpow.pop %v1571
        %v1573 = vmul.f32 %v1563, 1.442695
        %v1574 = vpow.pop %v1573
        %v1575 = vmul.f32 %v1564, 1.442695
        %v1576 = vpow.pop %v1575
        %v1577 = vmul.f32 %v1565, 1.442695
        %v1578 = vpow.pop %v1577
        %v1579 = vmul.f32 %v1566, 1.442695
        %v1580 = vpow.pop %v1579
        %v1581 = vmul.f32 %v1567, 1.442695
        %v1582 = vpow.pop %v1581
        %v1583 = vmul.f32 %v1568, 1.442695
        %v1584 = vpow.pop %v1583
        %v1585 = vsel %vm1536, %v1570, 0.0
        %1586 = vadd.xlane.f32.xlu0 %v1585
        %v1587 = vpop.xlane.xlu0 %1586
        %v1588 = vsel %vm1536, %v1572, 0.0
        %1589 = vadd.xlane.f32.xlu0 %v1588
        %v1590 = vpop.xlane.xlu0 %1589
        %v1591 = vsel %vm1536, %v1574, 0.0
        %1592 = vadd.xlane.f32.xlu0 %v1591
        %v1593 = vpop.xlane.xlu0 %1592
        %v1594 = vsel %vm1536, %v1576, 0.0
        %1595 = vadd.xlane.f32.xlu0 %v1594
        %v1596 = vpop.xlane.xlu0 %1595
        %v1597 = vsel %vm1536, %v1578, 0.0
        %1598 = vadd.xlane.f32.xlu0 %v1597
        %v1599 = vpop.xlane.xlu0 %1598
        %v1600 = vsel %vm1536, %v1580, 0.0
        %1601 = vadd.xlane.f32.xlu0 %v1600
        %v1602 = vpop.xlane.xlu0 %1601
        %v1603 = vsel %vm1536, %v1582, 0.0
        %1604 = vadd.xlane.f32.xlu0 %v1603
        %v1605 = vpop.xlane.xlu0 %1604
        %v1606 = vsel %vm1536, %v1584, 0.0
        %1607 = vadd.xlane.f32.xlu0 %v1606
        %v1608 = vpop.xlane.xlu0 %1607
        %v1609 = vrcp.pop %v1587
        %v1610 = vrcp.pop %v1590
        %v1611 = vrcp.pop %v1593
        %v1612 = vrcp.pop %v1596
        %v1613 = vrcp.pop %v1599
        %v1614 = vrcp.pop %v1602
        %v1615 = vrcp.pop %v1605
        %v1616 = vrcp.pop %v1608
        %v1617 = vmul.f32 %v1570, %v1609
        %v1618 = vmul.f32 %v1572, %v1610
        %v1619 = vmul.f32 %v1574, %v1611
        %v1620 = vmul.f32 %v1576, %v1612
        %v1621 = vmul.f32 %v1578, %v1613
        %v1622 = vmul.f32 %v1580, %v1614
        %v1623 = vmul.f32 %v1582, %v1615
        %v1624 = vmul.f32 %v1584, %v1616
        %v1625 = vpack.c.bf16 %v1618, %v1617
        %v1626 = vpack.c.bf16 %v1620, %v1619
        %v1627 = vpack.c.bf16 %v1622, %v1621
        %v1628 = vpack.c.bf16 %v1624, %v1623
        %v1630 = vsel %vm1536, %v1625, 0
        %v1633 = vsel %vm1536, %v1626, 0
        %v1636 = vsel %vm1536, %v1627, 0
        %v1639 = vsel %vm1536, %v1628, 0
        %1641 = vmatprep.subr.bf16.mxu0 0
        %1642 = vmatpush1.bf16.msra.mxu0 %v1418
        %1643 = vmatprep.subr.bf16.mxu0 0
        %1644 = vmatpush1.bf16.msra.mxu0 %v1421
        %1645 = vmatprep.subr.bf16.mxu0 0
        %1646 = vmatpush1.bf16.msra.mxu0 %v1424
        %1647 = vmatprep.subr.bf16.mxu0 0
        %1648 = vmatpush1.bf16.msra.mxu0 %v1427
        %1649 = vmatprep.subr.bf16.mxu0 0
        %1650 = vmatpush1.bf16.msra.mxu0 0
        %1651 = vmatprep.subr.bf16.mxu0 0
        %1652 = vmatpush1.bf16.msra.mxu0 0
        %1653 = vmatprep.subr.bf16.mxu0 0
        %1654 = vmatpush1.bf16.msra.mxu0 0
        %1655 = vmatprep.subr.bf16.mxu0 0
        %1656 = vmatpush1.bf16.msra.mxu0 0
        %1657 = vmatprep.subr.bf16.mxu0 0
        %1658 = vmatpush1.bf16.msra.mxu0 0
        %1659 = vmatprep.subr.bf16.mxu0 0
        %1660 = vmatpush1.bf16.msra.mxu0 0
        %1661 = vmatprep.subr.bf16.mxu0 0
        %1662 = vmatpush1.bf16.msra.mxu0 0
        %1663 = vmatprep.subr.bf16.mxu0 0
        %1664 = vmatpush1.bf16.msra.mxu0 0
        %1665 = vmatprep.subr.bf16.mxu0 0
        %1666 = vmatpush1.bf16.msra.mxu0 0
        %1667 = vmatprep.subr.bf16.mxu0 0
        %1668 = vmatpush1.bf16.msra.mxu0 0
        %1669 = vmatprep.subr.bf16.mxu0 0
        %1670 = vmatpush1.bf16.msra.mxu0 0
        %1671 = vmatprep.subr.bf16.mxu0 0
        %1672 = vmatpush1.bf16.msra.mxu0 0
        %1673 = vmatprep.mubr.bf16.mxu0 0
        %1674 = vmatmul.mubr.bf16.gmra.mrb[0].mxu0 %v1630
        %v1675 = vpop.f32.mrb[0].mxu0
        %v1676 = vadd.f32 0.0, %v1675
        %v1677 = vpop.f32.mrb[0].mxu0
        %v1678 = vpop.f32.mrb[0].mxu0
        %v1679 = vadd.f32 0.0, %v1678
        %v1680 = vpop.f32.mrb[0].mxu0
        %1681 = vmatprep.mubr.bf16.mxu0 0
        %1682 = vmatmul.mubr.bf16.gmra.mrb[0].mxu0 %v1633
        %v1683 = vpop.f32.mrb[0].mxu0
        %v1684 = vadd.f32 0.0, %v1683
        %v1685 = vpop.f32.mrb[0].mxu0
        %v1686 = vpop.f32.mrb[0].mxu0
        %v1687 = vadd.f32 0.0, %v1686
        %v1688 = vpop.f32.mrb[0].mxu0
        %1689 = vmatprep.mubr.bf16.mxu0 0
        %1690 = vmatmul.mubr.bf16.gmra.mrb[0].mxu0 %v1636
        %v1691 = vpop.f32.mrb[0].mxu0
        %v1692 = vadd.f32 0.0, %v1691
        %v1693 = vpop.f32.mrb[0].mxu0
        %v1694 = vpop.f32.mrb[0].mxu0
        %v1695 = vadd.f32 0.0, %v1694
        %v1696 = vpop.f32.mrb[0].mxu0
        %1697 = vmatprep.mubr.bf16.mxu0 0
        %1698 = vmatmul.mubr.bf16.gmra.mrb[0].mxu0 %v1639
        %v1699 = vpop.f32.mrb[0].mxu0
        %v1700 = vadd.f32 0.0, %v1699
        %v1701 = vpop.f32.mrb[0].mxu0
        %v1702 = vpop.f32.mrb[0].mxu0
        %v1703 = vadd.f32 0.0, %v1702
        %v1704 = vpop.f32.mrb[0].mxu0
        %1705 = vdwg.mxu0
        %1706 = vst.msk [vmem:[#allocation2] sm:$0xff] %vm1446, %v1676
        %1707 = vst.msk [vmem:[#allocation2 + $0x8] sm:$0xff] %vm1446, %v1679
        %1708 = vst.msk [vmem:[#allocation2 + $0x10] sm:$0xff] %vm1446, %v1684
        %1709 = vst.msk [vmem:[#allocation2 + $0x18] sm:$0xff] %vm1446, %v1687
        %1710 = vst.msk [vmem:[#allocation2 + $0x20] sm:$0xff] %vm1446, %v1692
        %1711 = vst.msk [vmem:[#allocation2 + $0x28] sm:$0xff] %vm1446, %v1695
        %1712 = vst.msk [vmem:[#allocation2 + $0x30] sm:$0xff] %vm1446, %v1700
        %1713 = vst.msk [vmem:[#allocation2 + $0x38] sm:$0xff] %vm1446, %v1703
        %1718 = vrot.lane.b32.xlu0 %v1416, 96
        %v1719 = vpop.permute.xlu0 %1718
        %1720 = vrot.lane.b32.xlu0 %v1419, 96
        %v1721 = vpop.permute.xlu0 %1720
        %1722 = vrot.lane.b32.xlu0 %v1422, 96
        %v1723 = vpop.permute.xlu0 %1722
        %1724 = vrot.lane.b32.xlu0 %v1425, 96
        %v1725 = vpop.permute.xlu0 %1724
        %1730 = vrot.lane.b32.xlu0 %v1417, 96
        %v1731 = vpop.permute.xlu0 %1730
        %1732 = vrot.lane.b32.xlu0 %v1420, 96
        %v1733 = vpop.permute.xlu0 %1732
        %1734 = vrot.lane.b32.xlu0 %v1423, 96
        %v1735 = vpop.permute.xlu0 %1734
        %1736 = vrot.lane.b32.xlu0 %v1426, 96
        %v1737 = vpop.permute.xlu0 %1736
        %v1739 = vsel %vm1446, %v1719, 0
        %v1742 = vsel %vm1446, %v1721, 0
        %v1745 = vsel %vm1446, %v1723, 0
        %v1748 = vsel %vm1446, %v1725, 0
        %v1751 = vsel %vm1446, %v1731, 0
        %v1754 = vsel %vm1446, %v1733, 0
        %v1757 = vsel %vm1446, %v1735, 0
        %v1760 = vsel %vm1446, %v1737, 0
        %1762 = vmatprep.subr.bf16.mxu0 0
        %1763 = vmatpush1.bf16.xpose.msra.mxu0 %v1751
        %1764 = vmatprep.subr.bf16.mxu0 0
        %1765 = vmatpush1.bf16.xpose.msra.mxu0 %v1754
        %1766 = vmatprep.subr.bf16.mxu0 0
        %1767 = vmatpush1.bf16.xpose.msra.mxu0 %v1757
        %1768 = vmatprep.subr.bf16.mxu0 0
        %1769 = vmatpush1.bf16.xpose.msra.mxu0 %v1760
        %1770 = vmatprep.subr.bf16.mxu0 0
        %1771 = vmatpush1.bf16.xpose.msra.mxu0 0
        %1772 = vmatprep.subr.bf16.mxu0 0
        %1773 = vmatpush1.bf16.xpose.msra.mxu0 0
        %1774 = vmatprep.subr.bf16.mxu0 0
        %1775 = vmatpush1.bf16.xpose.msra.mxu0 0
        %1776 = vmatprep.subr.bf16.mxu0 0
        %1777 = vmatpush1.bf16.xpose.msra.mxu0 0
        %1778 = vmatprep.subr.bf16.mxu0 0
        %1779 = vmatpush1.bf16.xpose.msra.mxu0 0
        %1780 = vmatprep.subr.bf16.mxu0 0
        %1781 = vmatpush1.bf16.xpose.msra.mxu0 0
        %1782 = vmatprep.subr.bf16.mxu0 0
        %1783 = vmatpush1.bf16.xpose.msra.mxu0 0
        %1784 = vmatprep.subr.bf16.mxu0 0
        %1785 = vmatpush1.bf16.xpose.msra.mxu0 0
        %1786 = vmatprep.subr.bf16.mxu0 0
        %1787 = vmatpush1.bf16.xpose.msra.mxu0 0
        %1788 = vmatprep.subr.bf16.mxu0 0
        %1789 = vmatpush1.bf16.xpose.msra.mxu0 0
        %1790 = vmatprep.subr.bf16.mxu0 0
        %1791 = vmatpush1.bf16.xpose.msra.mxu0 0
        %1792 = vmatprep.subr.bf16.mxu0 0
        %1793 = vmatpush1.bf16.xpose.msra.mxu0 0
        %1794 = vmatprep.mubr.bf16.mxu0 0
        %1795 = vmatmul.mubr.bf16.gmra.mrb[0].mxu0 %v1739
        %v1796 = vpop.f32.mrb[0].mxu0
        %v1797 = vadd.f32 %v1444, %v1796
        %v1798 = vpop.f32.mrb[0].mxu0
        %v1799 = vpop.f32.mrb[0].mxu0
        %v1800 = vadd.f32 %v1444, %v1799
        %v1801 = vpop.f32.mrb[0].mxu0
        %1802 = vmatprep.mubr.bf16.mxu0 0
        %1803 = vmatmul.mubr.bf16.gmra.mrb[0].mxu0 %v1742
        %v1804 = vpop.f32.mrb[0].mxu0
        %v1805 = vadd.f32 %v1444, %v1804
        %v1806 = vpop.f32.mrb[0].mxu0
        %v1807 = vpop.f32.mrb[0].mxu0
        %v1808 = vadd.f32 %v1444, %v1807
        %v1809 = vpop.f32.mrb[0].mxu0
        %1810 = vmatprep.mubr.bf16.mxu0 0
        %1811 = vmatmul.mubr.bf16.gmra.mrb[0].mxu0 %v1745
        %v1812 = vpop.f32.mrb[0].mxu0
        %v1813 = vadd.f32 %v1444, %v1812
        %v1814 = vpop.f32.mrb[0].mxu0
        %v1815 = vpop.f32.mrb[0].mxu0
        %v1816 = vadd.f32 %v1444, %v1815
        %v1817 = vpop.f32.mrb[0].mxu0
        %1818 = vmatprep.mubr.bf16.mxu0 0
        %1819 = vmatmul.mubr.bf16.gmra.mrb[0].mxu0 %v1748
        %v1820 = vpop.f32.mrb[0].mxu0
        %v1821 = vadd.f32 %v1444, %v1820
        %v1822 = vpop.f32.mrb[0].mxu0
        %v1823 = vpop.f32.mrb[0].mxu0
        %v1824 = vadd.f32 %v1444, %v1823
        %v1825 = vpop.f32.mrb[0].mxu0
        %1826 = vdwg.mxu0
        %v1827 = vsel %vm1536, %v1797, -inf
        %1828 = vmax.xlane.f32.xlu0 %v1827
        %v1829 = vpop.xlane.xlu0 %1828
        %v1830 = vsel %vm1536, %v1800, -inf
        %1831 = vmax.xlane.f32.xlu0 %v1830
        %v1832 = vpop.xlane.xlu0 %1831
        %v1833 = vsel %vm1536, %v1805, -inf
        %1834 = vmax.xlane.f32.xlu0 %v1833
        %v1835 = vpop.xlane.xlu0 %1834
        %v1836 = vsel %vm1536, %v1808, -inf
        %1837 = vmax.xlane.f32.xlu0 %v1836
        %v1838 = vpop.xlane.xlu0 %1837
        %v1839 = vsel %vm1536, %v1813, -inf
        %1840 = vmax.xlane.f32.xlu0 %v1839
        %v1841 = vpop.xlane.xlu0 %1840
        %v1842 = vsel %vm1536, %v1816, -inf
        %1843 = vmax.xlane.f32.xlu0 %v1842
        %v1844 = vpop.xlane.xlu0 %1843
        %v1845 = vsel %vm1536, %v1821, -inf
        %1846 = vmax.xlane.f32.xlu0 %v1845
        %v1847 = vpop.xlane.xlu0 %1846
        %v1848 = vsel %vm1536, %v1824, -inf
        %1849 = vmax.xlane.f32.xlu0 %v1848
        %v1850 = vpop.xlane.xlu0 %1849
        %v1851 = vsub.f32 %v1797, %v1829
        %v1852 = vsub.f32 %v1800, %v1832
        %v1853 = vsub.f32 %v1805, %v1835
        %v1854 = vsub.f32 %v1808, %v1838
        %v1855 = vsub.f32 %v1813, %v1841
        %v1856 = vsub.f32 %v1816, %v1844
        %v1857 = vsub.f32 %v1821, %v1847
        %v1858 = vsub.f32 %v1824, %v1850
        %v1859 = vmul.f32 %v1851, 1.442695
        %v1860 = vpow.pop %v1859
        %v1861 = vmul.f32 %v1852, 1.442695
        %v1862 = vpow.pop %v1861
        %v1863 = vmul.f32 %v1853, 1.442695
        %v1864 = vpow.pop %v1863
        %v1865 = vmul.f32 %v1854, 1.442695
        %v1866 = vpow.pop %v1865
        %v1867 = vmul.f32 %v1855, 1.442695
        %v1868 = vpow.pop %v1867
        %v1869 = vmul.f32 %v1856, 1.442695
        %v1870 = vpow.pop %v1869
        %v1871 = vmul.f32 %v1857, 1.442695
        %v1872 = vpow.pop %v1871
        %v1873 = vmul.f32 %v1858, 1.442695
        %v1874 = vpow.pop %v1873
        %v1875 = vsel %vm1536, %v1860, 0.0
        %1876 = vadd.xlane.f32.xlu0 %v1875
        %v1877 = vpop.xlane.xlu0 %1876
        %v1878 = vsel %vm1536, %v1862, 0.0
        %1879 = vadd.xlane.f32.xlu0 %v1878
        %v1880 = vpop.xlane.xlu0 %1879
        %v1881 = vsel %vm1536, %v1864, 0.0
        %1882 = vadd.xlane.f32.xlu0 %v1881
        %v1883 = vpop.xlane.xlu0 %1882
        %v1884 = vsel %vm1536, %v1866, 0.0
        %1885 = vadd.xlane.f32.xlu0 %v1884
        %v1886 = vpop.xlane.xlu0 %1885
        %v1887 = vsel %vm1536, %v1868, 0.0
        %1888 = vadd.xlane.f32.xlu0 %v1887
        %v1889 = vpop.xlane.xlu0 %1888
        %v1890 = vsel %vm1536, %v1870, 0.0
        %1891 = vadd.xlane.f32.xlu0 %v1890
        %v1892 = vpop.xlane.xlu0 %1891
        %v1893 = vsel %vm1536, %v1872, 0.0
        %1894 = vadd.xlane.f32.xlu0 %v1893
        %v1895 = vpop.xlane.xlu0 %1894
        %v1896 = vsel %vm1536, %v1874, 0.0
        %1897 = vadd.xlane.f32.xlu0 %v1896
        %v1898 = vpop.xlane.xlu0 %1897
        %v1899 = vrcp.pop %v1877
        %v1900 = vrcp.pop %v1880
        %v1901 = vrcp.pop %v1883
        %v1902 = vrcp.pop %v1886
        %v1903 = vrcp.pop %v1889
        %v1904 = vrcp.pop %v1892
        %v1905 = vrcp.pop %v1895
        %v1906 = vrcp.pop %v1898
        %v1907 = vmul.f32 %v1860, %v1899
        %v1908 = vmul.f32 %v1862, %v1900
        %v1909 = vmul.f32 %v1864, %v1901
        %v1910 = vmul.f32 %v1866, %v1902
        %v1911 = vmul.f32 %v1868, %v1903
        %v1912 = vmul.f32 %v1870, %v1904
        %v1913 = vmul.f32 %v1872, %v1905
        %v1914 = vmul.f32 %v1874, %v1906
        %v1915 = vpack.c.bf16 %v1908, %v1907
        %v1916 = vpack.c.bf16 %v1910, %v1909
        %v1917 = vpack.c.bf16 %v1912, %v1911
        %v1918 = vpack.c.bf16 %v1914, %v1913
        %1923 = vrot.lane.b32.xlu0 %v1418, 96
        %v1924 = vpop.permute.xlu0 %1923
        %1925 = vrot.lane.b32.xlu0 %v1421, 96
        %v1926 = vpop.permute.xlu0 %1925
        %1927 = vrot.lane.b32.xlu0 %v1424, 96
        %v1928 = vpop.permute.xlu0 %1927
        %1929 = vrot.lane.b32.xlu0 %v1427, 96
        %v1930 = vpop.permute.xlu0 %1929
        %v1936 = vsel %vm1536, %v1915, 0
        %v1939 = vsel %vm1536, %v1916, 0
        %v1942 = vsel %vm1536, %v1917, 0
        %v1945 = vsel %vm1536, %v1918, 0
        %1947 = vmatprep.subr.bf16.mxu0 0
        %1948 = vmatpush1.bf16.msra.mxu0 %v1924
        %1949 = vmatprep.subr.bf16.mxu0 0
        %1950 = vmatpush1.bf16.msra.mxu0 %v1926
        %1951 = vmatprep.subr.bf16.mxu0 0
        %1952 = vmatpush1.bf16.msra.mxu0 %v1928
        %1953 = vmatprep.subr.bf16.mxu0 0
        %1954 = vmatpush1.bf16.msra.mxu0 %v1930
        %1955 = vmatprep.subr.bf16.mxu0 0
        %1956 = vmatpush1.bf16.msra.mxu0 0
        %1957 = vmatprep.subr.bf16.mxu0 0
        %1958 = vmatpush1.bf16.msra.mxu0 0
        %1959 = vmatprep.subr.bf16.mxu0 0
        %1960 = vmatpush1.bf16.msra.mxu0 0
        %1961 = vmatprep.subr.bf16.mxu0 0
        %1962 = vmatpush1.bf16.msra.mxu0 0
        %1963 = vmatprep.subr.bf16.mxu0 0
        %1964 = vmatpush1.bf16.msra.mxu0 0
        %1965 = vmatprep.subr.bf16.mxu0 0
        %1966 = vmatpush1.bf16.msra.mxu0 0
        %1967 = vmatprep.subr.bf16.mxu0 0
        %1968 = vmatpush1.bf16.msra.mxu0 0
        %1969 = vmatprep.subr.bf16.mxu0 0
        %1970 = vmatpush1.bf16.msra.mxu0 0
        %1971 = vmatprep.subr.bf16.mxu0 0
        %1972 = vmatpush1.bf16.msra.mxu0 0
        %1973 = vmatprep.subr.bf16.mxu0 0
        %1974 = vmatpush1.bf16.msra.mxu0 0
        %1975 = vmatprep.subr.bf16.mxu0 0
        %1976 = vmatpush1.bf16.msra.mxu0 0
        %1977 = vmatprep.subr.bf16.mxu0 0
        %1978 = vmatpush1.bf16.msra.mxu0 0
        %1979 = vmatprep.mubr.bf16.mxu0 0
        %1980 = vmatmul.mubr.bf16.gmra.mrb[0].mxu0 %v1936
        %v1981 = vpop.f32.mrb[0].mxu0
        %v1982 = vadd.f32 0.0, %v1981
        %v1983 = vpop.f32.mrb[0].mxu0
        %v1984 = vpop.f32.mrb[0].mxu0
        %v1985 = vadd.f32 0.0, %v1984
        %v1986 = vpop.f32.mrb[0].mxu0
        %1987 = vmatprep.mubr.bf16.mxu0 0
        %1988 = vmatmul.mubr.bf16.gmra.mrb[0].mxu0 %v1939
        %v1989 = vpop.f32.mrb[0].mxu0
        %v1990 = vadd.f32 0.0, %v1989
        %v1991 = vpop.f32.mrb[0].mxu0
        %v1992 = vpop.f32.mrb[0].mxu0
        %v1993 = vadd.f32 0.0, %v1992
        %v1994 = vpop.f32.mrb[0].mxu0
        %1995 = vmatprep.mubr.bf16.mxu0 0
        %1996 = vmatmul.mubr.bf16.gmra.mrb[0].mxu0 %v1942
        %v1997 = vpop.f32.mrb[0].mxu0
        %v1998 = vadd.f32 0.0, %v1997
        %v1999 = vpop.f32.mrb[0].mxu0
        %v2000 = vpop.f32.mrb[0].mxu0
        %v2001 = vadd.f32 0.0, %v2000
        %v2002 = vpop.f32.mrb[0].mxu0
        %2003 = vmatprep.mubr.bf16.mxu0 0
        %2004 = vmatmul.mubr.bf16.gmra.mrb[0].mxu0 %v1945
        %v2005 = vpop.f32.mrb[0].mxu0
        %v2006 = vadd.f32 0.0, %v2005
        %v2007 = vpop.f32.mrb[0].mxu0
        %v2008 = vpop.f32.mrb[0].mxu0
        %v2009 = vadd.f32 0.0, %v2008
        %v2010 = vpop.f32.mrb[0].mxu0
        %2011 = vdwg.mxu0
        %2020 = vrot.lane.b32.xlu0 %v1982, 32
        %v2021 = vpop.permute.xlu0 %2020
        %2022 = vrot.lane.b32.xlu0 %v1985, 32
        %v2023 = vpop.permute.xlu0 %2022
        %2024 = vrot.lane.b32.xlu0 %v1990, 32
        %v2025 = vpop.permute.xlu0 %2024
        %2026 = vrot.lane.b32.xlu0 %v1993, 32
        %v2027 = vpop.permute.xlu0 %2026
        %2028 = vrot.lane.b32.xlu0 %v1998, 32
        %v2029 = vpop.permute.xlu0 %2028
        %2030 = vrot.lane.b32.xlu0 %v2001, 32
        %v2031 = vpop.permute.xlu0 %2030
        %2032 = vrot.lane.b32.xlu0 %v2006, 32
        %v2033 = vpop.permute.xlu0 %2032
        %2034 = vrot.lane.b32.xlu0 %v2009, 32
        %v2035 = vpop.permute.xlu0 %2034
        %vm2044 = vcmask 523520
        %2045 = vst.msk [vmem:[#allocation2] sm:$0xff] %vm2044, %v2021
        %2046 = vst.msk [vmem:[#allocation2 + $0x8] sm:$0xff] %vm2044, %v2023
        %2047 = vst.msk [vmem:[#allocation2 + $0x10] sm:$0xff] %vm2044, %v2025
        %2048 = vst.msk [vmem:[#allocation2 + $0x18] sm:$0xff] %vm2044, %v2027
        %2049 = vst.msk [vmem:[#allocation2 + $0x20] sm:$0xff] %vm2044, %v2029
        %2050 = vst.msk [vmem:[#allocation2 + $0x28] sm:$0xff] %vm2044, %v2031
        %2051 = vst.msk [vmem:[#allocation2 + $0x30] sm:$0xff] %vm2044, %v2033
        %2052 = vst.msk [vmem:[#allocation2 + $0x38] sm:$0xff] %vm2044, %v2035
        %2053 = vrot.lane.b32.xlu0 %v1416, 64
        %v2054 = vpop.permute.xlu0 %2053
        %2055 = vrot.lane.b32.xlu0 %v1419, 64
        %v2056 = vpop.permute.xlu0 %2055
        %2057 = vrot.lane.b32.xlu0 %v1422, 64
        %v2058 = vpop.permute.xlu0 %2057
        %2059 = vrot.lane.b32.xlu0 %v1425, 64
        %v2060 = vpop.permute.xlu0 %2059
        %2061 = vrot.lane.b32.xlu0 %v1417, 64
        %v2062 = vpop.permute.xlu0 %2061
        %2063 = vrot.lane.b32.xlu0 %v1420, 64
        %v2064 = vpop.permute.xlu0 %2063
        %2065 = vrot.lane.b32.xlu0 %v1423, 64
        %v2066 = vpop.permute.xlu0 %2065
        %2067 = vrot.lane.b32.xlu0 %v1426, 64
        %v2068 = vpop.permute.xlu0 %2067
        %v2070 = vsel %vm1446, %v2054, 0
        %v2073 = vsel %vm1446, %v2056, 0
        %v2076 = vsel %vm1446, %v2058, 0
        %v2079 = vsel %vm1446, %v2060, 0
        %v2082 = vsel %vm1446, %v2062, 0
        %v2085 = vsel %vm1446, %v2064, 0
        %v2088 = vsel %vm1446, %v2066, 0
        %v2091 = vsel %vm1446, %v2068, 0
        %2093 = vmatprep.subr.bf16.mxu0 0
        %2094 = vmatpush1.bf16.xpose.msra.mxu0 %v2082
        %2095 = vmatprep.subr.bf16.mxu0 0
        %2096 = vmatpush1.bf16.xpose.msra.mxu0 %v2085
        %2097 = vmatprep.subr.bf16.mxu0 0
        %2098 = vmatpush1.bf16.xpose.msra.mxu0 %v2088
        %2099 = vmatprep.subr.bf16.mxu0 0
        %2100 = vmatpush1.bf16.xpose.msra.mxu0 %v2091
        %2101 = vmatprep.subr.bf16.mxu0 0
        %2102 = vmatpush1.bf16.xpose.msra.mxu0 0
        %2103 = vmatprep.subr.bf16.mxu0 0
        %2104 = vmatpush1.bf16.xpose.msra.mxu0 0
        %2105 = vmatprep.subr.bf16.mxu0 0
        %2106 = vmatpush1.bf16.xpose.msra.mxu0 0
        %2107 = vmatprep.subr.bf16.mxu0 0
        %2108 = vmatpush1.bf16.xpose.msra.mxu0 0
        %2109 = vmatprep.subr.bf16.mxu0 0
        %2110 = vmatpush1.bf16.xpose.msra.mxu0 0
        %2111 = vmatprep.subr.bf16.mxu0 0
        %2112 = vmatpush1.bf16.xpose.msra.mxu0 0
        %2113 = vmatprep.subr.bf16.mxu0 0
        %2114 = vmatpush1.bf16.xpose.msra.mxu0 0
        %2115 = vmatprep.subr.bf16.mxu0 0
        %2116 = vmatpush1.bf16.xpose.msra.mxu0 0
        %2117 = vmatprep.subr.bf16.mxu0 0
        %2118 = vmatpush1.bf16.xpose.msra.mxu0 0
        %2119 = vmatprep.subr.bf16.mxu0 0
        %2120 = vmatpush1.bf16.xpose.msra.mxu0 0
        %2121 = vmatprep.subr.bf16.mxu0 0
        %2122 = vmatpush1.bf16.xpose.msra.mxu0 0
        %2123 = vmatprep.subr.bf16.mxu0 0
        %2124 = vmatpush1.bf16.xpose.msra.mxu0 0
        %2125 = vmatprep.mubr.bf16.mxu0 0
        %2126 = vmatmul.mubr.bf16.gmra.mrb[0].mxu0 %v2070
        %v2127 = vpop.f32.mrb[0].mxu0
        %v2128 = vadd.f32 %v1444, %v2127
        %v2129 = vpop.f32.mrb[0].mxu0
        %v2130 = vpop.f32.mrb[0].mxu0
        %v2131 = vadd.f32 %v1444, %v2130
        %v2132 = vpop.f32.mrb[0].mxu0
        %2133 = vmatprep.mubr.bf16.mxu0 0
        %2134 = vmatmul.mubr.bf16.gmra.mrb[0].mxu0 %v2073
        %v2135 = vpop.f32.mrb[0].mxu0
        %v2136 = vadd.f32 %v1444, %v2135
        %v2137 = vpop.f32.mrb[0].mxu0
        %v2138 = vpop.f32.mrb[0].mxu0
        %v2139 = vadd.f32 %v1444, %v2138
        %v2140 = vpop.f32.mrb[0].mxu0
        %2141 = vmatprep.mubr.bf16.mxu0 0
        %2142 = vmatmul.mubr.bf16.gmra.mrb[0].mxu0 %v2076
        %v2143 = vpop.f32.mrb[0].mxu0
        %v2144 = vadd.f32 %v1444, %v2143
        %v2145 = vpop.f32.mrb[0].mxu0
        %v2146 = vpop.f32.mrb[0].mxu0
        %v2147 = vadd.f32 %v1444, %v2146
        %v2148 = vpop.f32.mrb[0].mxu0
        %2149 = vmatprep.mubr.bf16.mxu0 0
        %2150 = vmatmul.mubr.bf16.gmra.mrb[0].mxu0 %v2079
        %v2151 = vpop.f32.mrb[0].mxu0
        %v2152 = vadd.f32 %v1444, %v2151
        %v2153 = vpop.f32.mrb[0].mxu0
        %v2154 = vpop.f32.mrb[0].mxu0
        %v2155 = vadd.f32 %v1444, %v2154
        %v2156 = vpop.f32.mrb[0].mxu0
        %2157 = vdwg.mxu0
        %v2158 = vsel %vm1536, %v2128, -inf
        %2159 = vmax.xlane.f32.xlu0 %v2158
        %v2160 = vpop.xlane.xlu0 %2159
        %v2161 = vsel %vm1536, %v2131, -inf
        %2162 = vmax.xlane.f32.xlu0 %v2161
        %v2163 = vpop.xlane.xlu0 %2162
        %v2164 = vsel %vm1536, %v2136, -inf
        %2165 = vmax.xlane.f32.xlu0 %v2164
        %v2166 = vpop.xlane.xlu0 %2165
        %v2167 = vsel %vm1536, %v2139, -inf
        %2168 = vmax.xlane.f32.xlu0 %v2167
        %v2169 = vpop.xlane.xlu0 %2168
        %v2170 = vsel %vm1536, %v2144, -inf
        %2171 = vmax.xlane.f32.xlu0 %v2170
        %v2172 = vpop.xlane.xlu0 %2171
        %v2173 = vsel %vm1536, %v2147, -inf
        %2174 = vmax.xlane.f32.xlu0 %v2173
        %v2175 = vpop.xlane.xlu0 %2174
        %v2176 = vsel %vm1536, %v2152, -inf
        %2177 = vmax.xlane.f32.xlu0 %v2176
        %v2178 = vpop.xlane.xlu0 %2177
        %v2179 = vsel %vm1536, %v2155, -inf
        %2180 = vmax.xlane.f32.xlu0 %v2179
        %v2181 = vpop.xlane.xlu0 %2180
        %v2182 = vsub.f32 %v2128, %v2160
        %v2183 = vsub.f32 %v2131, %v2163
        %v2184 = vsub.f32 %v2136, %v2166
        %v2185 = vsub.f32 %v2139, %v2169
        %v2186 = vsub.f32 %v2144, %v2172
        %v2187 = vsub.f32 %v2147, %v2175
        %v2188 = vsub.f32 %v2152, %v2178
        %v2189 = vsub.f32 %v2155, %v2181
        %v2190 = vmul.f32 %v2182, 1.442695
        %v2191 = vpow.pop %v2190
        %v2192 = vmul.f32 %v2183, 1.442695
        %v2193 = vpow.pop %v2192
        %v2194 = vmul.f32 %v2184, 1.442695
        %v2195 = vpow.pop %v2194
        %v2196 = vmul.f32 %v2185, 1.442695
        %v2197 = vpow.pop %v2196
        %v2198 = vmul.f32 %v2186, 1.442695
        %v2199 = vpow.pop %v2198
        %v2200 = vmul.f32 %v2187, 1.442695
        %v2201 = vpow.pop %v2200
        %v2202 = vmul.f32 %v2188, 1.442695
        %v2203 = vpow.pop %v2202
        %v2204 = vmul.f32 %v2189, 1.442695
        %v2205 = vpow.pop %v2204
        %v2206 = vsel %vm1536, %v2191, 0.0
        %2207 = vadd.xlane.f32.xlu0 %v2206
        %v2208 = vpop.xlane.xlu0 %2207
        %v2209 = vsel %vm1536, %v2193, 0.0
        %2210 = vadd.xlane.f32.xlu0 %v2209
        %v2211 = vpop.xlane.xlu0 %2210
        %v2212 = vsel %vm1536, %v2195, 0.0
        %2213 = vadd.xlane.f32.xlu0 %v2212
        %v2214 = vpop.xlane.xlu0 %2213
        %v2215 = vsel %vm1536, %v2197, 0.0
        %2216 = vadd.xlane.f32.xlu0 %v2215
        %v2217 = vpop.xlane.xlu0 %2216
        %v2218 = vsel %vm1536, %v2199, 0.0
        %2219 = vadd.xlane.f32.xlu0 %v2218
        %v2220 = vpop.xlane.xlu0 %2219
        %v2221 = vsel %vm1536, %v2201, 0.0
        %2222 = vadd.xlane.f32.xlu0 %v2221
        %v2223 = vpop.xlane.xlu0 %2222
        %v2224 = vsel %vm1536, %v2203, 0.0
        %2225 = vadd.xlane.f32.xlu0 %v2224
        %v2226 = vpop.xlane.xlu0 %2225
        %v2227 = vsel %vm1536, %v2205, 0.0
        %2228 = vadd.xlane.f32.xlu0 %v2227
        %v2229 = vpop.xlane.xlu0 %2228
        %v2230 = vrcp.pop %v2208
        %v2231 = vrcp.pop %v2211
        %v2232 = vrcp.pop %v2214
        %v2233 = vrcp.pop %v2217
        %v2234 = vrcp.pop %v2220
        %v2235 = vrcp.pop %v2223
        %v2236 = vrcp.pop %v2226
        %v2237 = vrcp.pop %v2229
        %v2238 = vmul.f32 %v2191, %v2230
        %v2239 = vmul.f32 %v2193, %v2231
        %v2240 = vmul.f32 %v2195, %v2232
        %v2241 = vmul.f32 %v2197, %v2233
        %v2242 = vmul.f32 %v2199, %v2234
        %v2243 = vmul.f32 %v2201, %v2235
        %v2244 = vmul.f32 %v2203, %v2236
        %v2245 = vmul.f32 %v2205, %v2237
        %v2246 = vpack.c.bf16 %v2239, %v2238
        %v2247 = vpack.c.bf16 %v2241, %v2240
        %v2248 = vpack.c.bf16 %v2243, %v2242
        %v2249 = vpack.c.bf16 %v2245, %v2244
        %2250 = vrot.lane.b32.xlu0 %v1418, 64
        %v2251 = vpop.permute.xlu0 %2250
        %2252 = vrot.lane.b32.xlu0 %v1421, 64
        %v2253 = vpop.permute.xlu0 %2252
        %2254 = vrot.lane.b32.xlu0 %v1424, 64
        %v2255 = vpop.permute.xlu0 %2254
        %2256 = vrot.lane.b32.xlu0 %v1427, 64
        %v2257 = vpop.permute.xlu0 %2256
        %v2263 = vsel %vm1536, %v2246, 0
        %v2266 = vsel %vm1536, %v2247, 0
        %v2269 = vsel %vm1536, %v2248, 0
        %v2272 = vsel %vm1536, %v2249, 0
        %2274 = vmatprep.subr.bf16.mxu0 0
        %2275 = vmatpush1.bf16.msra.mxu0 %v2251
        %2276 = vmatprep.subr.bf16.mxu0 0
        %2277 = vmatpush1.bf16.msra.mxu0 %v2253
        %2278 = vmatprep.subr.bf16.mxu0 0
        %2279 = vmatpush1.bf16.msra.mxu0 %v2255
        %2280 = vmatprep.subr.bf16.mxu0 0
        %2281 = vmatpush1.bf16.msra.mxu0 %v2257
        %2282 = vmatprep.subr.bf16.mxu0 0
        %2283 = vmatpush1.bf16.msra.mxu0 0
        %2284 = vmatprep.subr.bf16.mxu0 0
        %2285 = vmatpush1.bf16.msra.mxu0 0
        %2286 = vmatprep.subr.bf16.mxu0 0
        %2287 = vmatpush1.bf16.msra.mxu0 0
        %2288 = vmatprep.subr.bf16.mxu0 0
        %2289 = vmatpush1.bf16.msra.mxu0 0
        %2290 = vmatprep.subr.bf16.mxu0 0
        %2291 = vmatpush1.bf16.msra.mxu0 0
        %2292 = vmatprep.subr.bf16.mxu0 0
        %2293 = vmatpush1.bf16.msra.mxu0 0
        %2294 = vmatprep.subr.bf16.mxu0 0
        %2295 = vmatpush1.bf16.msra.mxu0 0
        %2296 = vmatprep.subr.bf16.mxu0 0
        %2297 = vmatpush1.bf16.msra.mxu0 0
        %2298 = vmatprep.subr.bf16.mxu0 0
        %2299 = vmatpush1.bf16.msra.mxu0 0
        %2300 = vmatprep.subr.bf16.mxu0 0
        %2301 = vmatpush1.bf16.msra.mxu0 0
        %2302 = vmatprep.subr.bf16.mxu0 0
        %2303 = vmatpush1.bf16.msra.mxu0 0
        %2304 = vmatprep.subr.bf16.mxu0 0
        %2305 = vmatpush1.bf16.msra.mxu0 0
        %2306 = vmatprep.mubr.bf16.mxu0 0
        %2307 = vmatmul.mubr.bf16.gmra.mrb[0].mxu0 %v2263
        %v2308 = vpop.f32.mrb[0].mxu0
        %v2309 = vadd.f32 0.0, %v2308
        %v2310 = vpop.f32.mrb[0].mxu0
        %v2311 = vpop.f32.mrb[0].mxu0
        %v2312 = vadd.f32 0.0, %v2311
        %v2313 = vpop.f32.mrb[0].mxu0
        %2314 = vmatprep.mubr.bf16.mxu0 0
        %2315 = vmatmul.mubr.bf16.gmra.mrb[0].mxu0 %v2266
        %v2316 = vpop.f32.mrb[0].mxu0
        %v2317 = vadd.f32 0.0, %v2316
        %v2318 = vpop.f32.mrb[0].mxu0
        %v2319 = vpop.f32.mrb[0].mxu0
        %v2320 = vadd.f32 0.0, %v2319
        %v2321 = vpop.f32.mrb[0].mxu0
        %2322 = vmatprep.mubr.bf16.mxu0 0
        %2323 = vmatmul.mubr.bf16.gmra.mrb[0].mxu0 %v2269
        %v2324 = vpop.f32.mrb[0].mxu0
        %v2325 = vadd.f32 0.0, %v2324
        %v2326 = vpop.f32.mrb[0].mxu0
        %v2327 = vpop.f32.mrb[0].mxu0
        %v2328 = vadd.f32 0.0, %v2327
        %v2329 = vpop.f32.mrb[0].mxu0
        %2330 = vmatprep.mubr.bf16.mxu0 0
        %2331 = vmatmul.mubr.bf16.gmra.mrb[0].mxu0 %v2272
        %v2332 = vpop.f32.mrb[0].mxu0
        %v2333 = vadd.f32 0.0, %v2332
        %v2334 = vpop.f32.mrb[0].mxu0
        %v2335 = vpop.f32.mrb[0].mxu0
        %v2336 = vadd.f32 0.0, %v2335
        %v2337 = vpop.f32.mrb[0].mxu0
        %2338 = vdwg.mxu0
        %2347 = vrot.lane.b32.xlu0 %v2309, 64
        %v2348 = vpop.permute.xlu0 %2347
        %2349 = vrot.lane.b32.xlu0 %v2312, 64
        %v2350 = vpop.permute.xlu0 %2349
        %2351 = vrot.lane.b32.xlu0 %v2317, 64
        %v2352 = vpop.permute.xlu0 %2351
        %2353 = vrot.lane.b32.xlu0 %v2320, 64
        %v2354 = vpop.permute.xlu0 %2353
        %2355 = vrot.lane.b32.xlu0 %v2325, 64
        %v2356 = vpop.permute.xlu0 %2355
        %2357 = vrot.lane.b32.xlu0 %v2328, 64
        %v2358 = vpop.permute.xlu0 %2357
        %2359 = vrot.lane.b32.xlu0 %v2333, 64
        %v2360 = vpop.permute.xlu0 %2359
        %2361 = vrot.lane.b32.xlu0 %v2336, 64
        %v2362 = vpop.permute.xlu0 %2361
        %vm2371 = vcmask 785920
        %2372 = vst.msk [vmem:[#allocation2] sm:$0xff] %vm2371, %v2348
        %2373 = vst.msk [vmem:[#allocation2 + $0x8] sm:$0xff] %vm2371, %v2350
        %2374 = vst.msk [vmem:[#allocation2 + $0x10] sm:$0xff] %vm2371, %v2352
        %2375 = vst.msk [vmem:[#allocation2 + $0x18] sm:$0xff] %vm2371, %v2354
        %2376 = vst.msk [vmem:[#allocation2 + $0x20] sm:$0xff] %vm2371, %v2356
        %2377 = vst.msk [vmem:[#allocation2 + $0x28] sm:$0xff] %vm2371, %v2358
        %2378 = vst.msk [vmem:[#allocation2 + $0x30] sm:$0xff] %vm2371, %v2360
        %2379 = vst.msk [vmem:[#allocation2 + $0x38] sm:$0xff] %vm2371, %v2362
        %2380 = vrot.lane.b32.xlu0 %v1416, 32
        %v2381 = vpop.permute.xlu0 %2380
        %2382 = vrot.lane.b32.xlu0 %v1419, 32
        %v2383 = vpop.permute.xlu0 %2382
        %2384 = vrot.lane.b32.xlu0 %v1422, 32
        %v2385 = vpop.permute.xlu0 %2384
        %2386 = vrot.lane.b32.xlu0 %v1425, 32
        %v2387 = vpop.permute.xlu0 %2386
        %2388 = vrot.lane.b32.xlu0 %v1417, 32
        %v2389 = vpop.permute.xlu0 %2388
        %2390 = vrot.lane.b32.xlu0 %v1420, 32
        %v2391 = vpop.permute.xlu0 %2390
        %2392 = vrot.lane.b32.xlu0 %v1423, 32
        %v2393 = vpop.permute.xlu0 %2392
        %2394 = vrot.lane.b32.xlu0 %v1426, 32
        %v2395 = vpop.permute.xlu0 %2394
        %v2397 = vsel %vm1446, %v2381, 0
        %v2400 = vsel %vm1446, %v2383, 0
        %v2403 = vsel %vm1446, %v2385, 0
        %v2406 = vsel %vm1446, %v2387, 0
        %v2409 = vsel %vm1446, %v2389, 0
        %v2412 = vsel %vm1446, %v2391, 0
        %v2415 = vsel %vm1446, %v2393, 0
        %v2418 = vsel %vm1446, %v2395, 0
        %2420 = vmatprep.subr.bf16.mxu0 0
        %2421 = vmatpush1.bf16.xpose.msra.mxu0 %v2409
        %2422 = vmatprep.subr.bf16.mxu0 0
        %2423 = vmatpush1.bf16.xpose.msra.mxu0 %v2412
        %2424 = vmatprep.subr.bf16.mxu0 0
        %2425 = vmatpush1.bf16.xpose.msra.mxu0 %v2415
        %2426 = vmatprep.subr.bf16.mxu0 0
        %2427 = vmatpush1.bf16.xpose.msra.mxu0 %v2418
        %2428 = vmatprep.subr.bf16.mxu0 0
        %2429 = vmatpush1.bf16.xpose.msra.mxu0 0
        %2430 = vmatprep.subr.bf16.mxu0 0
        %2431 = vmatpush1.bf16.xpose.msra.mxu0 0
        %2432 = vmatprep.subr.bf16.mxu0 0
        %2433 = vmatpush1.bf16.xpose.msra.mxu0 0
        %2434 = vmatprep.subr.bf16.mxu0 0
        %2435 = vmatpush1.bf16.xpose.msra.mxu0 0
        %2436 = vmatprep.subr.bf16.mxu0 0
        %2437 = vmatpush1.bf16.xpose.msra.mxu0 0
        %2438 = vmatprep.subr.bf16.mxu0 0
        %2439 = vmatpush1.bf16.xpose.msra.mxu0 0
        %2440 = vmatprep.subr.bf16.mxu0 0
        %2441 = vmatpush1.bf16.xpose.msra.mxu0 0
        %2442 = vmatprep.subr.bf16.mxu0 0
        %2443 = vmatpush1.bf16.xpose.msra.mxu0 0
        %2444 = vmatprep.subr.bf16.mxu0 0
        %2445 = vmatpush1.bf16.xpose.msra.mxu0 0
        %2446 = vmatprep.subr.bf16.mxu0 0
        %2447 = vmatpush1.bf16.xpose.msra.mxu0 0
        %2448 = vmatprep.subr.bf16.mxu0 0
        %2449 = vmatpush1.bf16.xpose.msra.mxu0 0
        %2450 = vmatprep.subr.bf16.mxu0 0
        %2451 = vmatpush1.bf16.xpose.msra.mxu0 0
        %2452 = vmatprep.mubr.bf16.mxu0 0
        %2453 = vmatmul.mubr.bf16.gmra.mrb[0].mxu0 %v2397
        %v2454 = vpop.f32.mrb[0].mxu0
        %v2455 = vadd.f32 %v1444, %v2454
        %v2456 = vpop.f32.mrb[0].mxu0
        %v2457 = vpop.f32.mrb[0].mxu0
        %v2458 = vadd.f32 %v1444, %v2457
        %v2459 = vpop.f32.mrb[0].mxu0
        %2460 = vmatprep.mubr.bf16.mxu0 0
        %2461 = vmatmul.mubr.bf16.gmra.mrb[0].mxu0 %v2400
        %v2462 = vpop.f32.mrb[0].mxu0
        %v2463 = vadd.f32 %v1444, %v2462
        %v2464 = vpop.f32.mrb[0].mxu0
        %v2465 = vpop.f32.mrb[0].mxu0
        %v2466 = vadd.f32 %v1444, %v2465
        %v2467 = vpop.f32.mrb[0].mxu0
        %2468 = vmatprep.mubr.bf16.mxu0 0
        %2469 = vmatmul.mubr.bf16.gmra.mrb[0].mxu0 %v2403
        %v2470 = vpop.f32.mrb[0].mxu0
        %v2471 = vadd.f32 %v1444, %v2470
        %v2472 = vpop.f32.mrb[0].mxu0
        %v2473 = vpop.f32.mrb[0].mxu0
        %v2474 = vadd.f32 %v1444, %v2473
        %v2475 = vpop.f32.mrb[0].mxu0
        %2476 = vmatprep.mubr.bf16.mxu0 0
        %2477 = vmatmul.mubr.bf16.gmra.mrb[0].mxu0 %v2406
        %v2478 = vpop.f32.mrb[0].mxu0
        %v2479 = vadd.f32 %v1444, %v2478
        %v2480 = vpop.f32.mrb[0].mxu0
        %v2481 = vpop.f32.mrb[0].mxu0
        %v2482 = vadd.f32 %v1444, %v2481
        %v2483 = vpop.f32.mrb[0].mxu0
        %2484 = vdwg.mxu0
        %v2485 = vsel %vm1536, %v2455, -inf
        %2486 = vmax.xlane.f32.xlu0 %v2485
        %v2487 = vpop.xlane.xlu0 %2486
        %v2488 = vsel %vm1536, %v2458, -inf
        %2489 = vmax.xlane.f32.xlu0 %v2488
        %v2490 = vpop.xlane.xlu0 %2489
        %v2491 = vsel %vm1536, %v2463, -inf
        %2492 = vmax.xlane.f32.xlu0 %v2491
        %v2493 = vpop.xlane.xlu0 %2492
        %v2494 = vsel %vm1536, %v2466, -inf
        %2495 = vmax.xlane.f32.xlu0 %v2494
        %v2496 = vpop.xlane.xlu0 %2495
        %v2497 = vsel %vm1536, %v2471, -inf
        %2498 = vmax.xlane.f32.xlu0 %v2497
        %v2499 = vpop.xlane.xlu0 %2498
        %v2500 = vsel %vm1536, %v2474, -inf
        %2501 = vmax.xlane.f32.xlu0 %v2500
        %v2502 = vpop.xlane.xlu0 %2501
        %v2503 = vsel %vm1536, %v2479, -inf
        %2504 = vmax.xlane.f32.xlu0 %v2503
        %v2505 = vpop.xlane.xlu0 %2504
        %v2506 = vsel %vm1536, %v2482, -inf
        %2507 = vmax.xlane.f32.xlu0 %v2506
        %v2508 = vpop.xlane.xlu0 %2507
        %v2509 = vsub.f32 %v2455, %v2487
        %v2510 = vsub.f32 %v2458, %v2490
        %v2511 = vsub.f32 %v2463, %v2493
        %v2512 = vsub.f32 %v2466, %v2496
        %v2513 = vsub.f32 %v2471, %v2499
        %v2514 = vsub.f32 %v2474, %v2502
        %v2515 = vsub.f32 %v2479, %v2505
        %v2516 = vsub.f32 %v2482, %v2508
        %v2517 = vmul.f32 %v2509, 1.442695
        %v2518 = vpow.pop %v2517
        %v2519 = vmul.f32 %v2510, 1.442695
        %v2520 = vpow.pop %v2519
        %v2521 = vmul.f32 %v2511, 1.442695
        %v2522 = vpow.pop %v2521
        %v2523 = vmul.f32 %v2512, 1.442695
        %v2524 = vpow.pop %v2523
        %v2525 = vmul.f32 %v2513, 1.442695
        %v2526 = vpow.pop %v2525
        %v2527 = vmul.f32 %v2514, 1.442695
        %v2528 = vpow.pop %v2527
        %v2529 = vmul.f32 %v2515, 1.442695
        %v2530 = vpow.pop %v2529
        %v2531 = vmul.f32 %v2516, 1.442695
        %v2532 = vpow.pop %v2531
        %v2533 = vsel %vm1536, %v2518, 0.0
        %2534 = vadd.xlane.f32.xlu0 %v2533
        %v2535 = vpop.xlane.xlu0 %2534
        %v2536 = vsel %vm1536, %v2520, 0.0
        %2537 = vadd.xlane.f32.xlu0 %v2536
        %v2538 = vpop.xlane.xlu0 %2537
        %v2539 = vsel %vm1536, %v2522, 0.0
        %2540 = vadd.xlane.f32.xlu0 %v2539
        %v2541 = vpop.xlane.xlu0 %2540
        %v2542 = vsel %vm1536, %v2524, 0.0
        %2543 = vadd.xlane.f32.xlu0 %v2542
        %v2544 = vpop.xlane.xlu0 %2543
        %v2545 = vsel %vm1536, %v2526, 0.0
        %2546 = vadd.xlane.f32.xlu0 %v2545
        %v2547 = vpop.xlane.xlu0 %2546
        %v2548 = vsel %vm1536, %v2528, 0.0
        %2549 = vadd.xlane.f32.xlu0 %v2548
        %v2550 = vpop.xlane.xlu0 %2549
        %v2551 = vsel %vm1536, %v2530, 0.0
        %2552 = vadd.xlane.f32.xlu0 %v2551
        %v2553 = vpop.xlane.xlu0 %2552
        %v2554 = vsel %vm1536, %v2532, 0.0
        %2555 = vadd.xlane.f32.xlu0 %v2554
        %v2556 = vpop.xlane.xlu0 %2555
        %v2557 = vrcp.pop %v2535
        %v2558 = vrcp.pop %v2538
        %v2559 = vrcp.pop %v2541
        %v2560 = vrcp.pop %v2544
        %v2561 = vrcp.pop %v2547
        %v2562 = vrcp.pop %v2550
        %v2563 = vrcp.pop %v2553
        %v2564 = vrcp.pop %v2556
        %v2565 = vmul.f32 %v2518, %v2557
        %v2566 = vmul.f32 %v2520, %v2558
        %v2567 = vmul.f32 %v2522, %v2559
        %v2568 = vmul.f32 %v2524, %v2560
        %v2569 = vmul.f32 %v2526, %v2561
        %v2570 = vmul.f32 %v2528, %v2562
        %v2571 = vmul.f32 %v2530, %v2563
        %v2572 = vmul.f32 %v2532, %v2564
        %v2573 = vpack.c.bf16 %v2566, %v2565
        %v2574 = vpack.c.bf16 %v2568, %v2567
        %v2575 = vpack.c.bf16 %v2570, %v2569
        %v2576 = vpack.c.bf16 %v2572, %v2571
        %2577 = vrot.lane.b32.xlu0 %v1418, 32
        %v2578 = vpop.permute.xlu0 %2577
        %2579 = vrot.lane.b32.xlu0 %v1421, 32
        %v2580 = vpop.permute.xlu0 %2579
        %2581 = vrot.lane.b32.xlu0 %v1424, 32
        %v2582 = vpop.permute.xlu0 %2581
        %2583 = vrot.lane.b32.xlu0 %v1427, 32
        %v2584 = vpop.permute.xlu0 %2583
        %v2590 = vsel %vm1536, %v2573, 0
        %v2593 = vsel %vm1536, %v2574, 0
        %v2596 = vsel %vm1536, %v2575, 0
        %v2599 = vsel %vm1536, %v2576, 0
        %2601 = vmatprep.subr.bf16.mxu0 0
        %2602 = vmatpush1.bf16.msra.mxu0 %v2578
        %2603 = vmatprep.subr.bf16.mxu0 0
        %2604 = vmatpush1.bf16.msra.mxu0 %v2580
        %2605 = vmatprep.subr.bf16.mxu0 0
        %2606 = vmatpush1.bf16.msra.mxu0 %v2582
        %2607 = vmatprep.subr.bf16.mxu0 0
        %2608 = vmatpush1.bf16.msra.mxu0 %v2584
        %2609 = vmatprep.subr.bf16.mxu0 0
        %2610 = vmatpush1.bf16.msra.mxu0 0
        %2611 = vmatprep.subr.bf16.mxu0 0
        %2612 = vmatpush1.bf16.msra.mxu0 0
        %2613 = vmatprep.subr.bf16.mxu0 0
        %2614 = vmatpush1.bf16.msra.mxu0 0
        %2615 = vmatprep.subr.bf16.mxu0 0
        %2616 = vmatpush1.bf16.msra.mxu0 0
        %2617 = vmatprep.subr.bf16.mxu0 0
        %2618 = vmatpush1.bf16.msra.mxu0 0
        %2619 = vmatprep.subr.bf16.mxu0 0
        %2620 = vmatpush1.bf16.msra.mxu0 0
        %2621 = vmatprep.subr.bf16.mxu0 0
        %2622 = vmatpush1.bf16.msra.mxu0 0
        %2623 = vmatprep.subr.bf16.mxu0 0
        %2624 = vmatpush1.bf16.msra.mxu0 0
        %2625 = vmatprep.subr.bf16.mxu0 0
        %2626 = vmatpush1.bf16.msra.mxu0 0
        %2627 = vmatprep.subr.bf16.mxu0 0
        %2628 = vmatpush1.bf16.msra.mxu0 0
        %2629 = vmatprep.subr.bf16.mxu0 0
        %2630 = vmatpush1.bf16.msra.mxu0 0
        %2631 = vmatprep.subr.bf16.mxu0 0
        %2632 = vmatpush1.bf16.msra.mxu0 0
        %2633 = vmatprep.mubr.bf16.mxu0 0
        %2634 = vmatmul.mubr.bf16.gmra.mrb[0].mxu0 %v2590
        %v2635 = vpop.f32.mrb[0].mxu0
        %v2636 = vadd.f32 0.0, %v2635
        %v2637 = vpop.f32.mrb[0].mxu0
        %v2638 = vpop.f32.mrb[0].mxu0
        %v2639 = vadd.f32 0.0, %v2638
        %v2640 = vpop.f32.mrb[0].mxu0
        %2641 = vmatprep.mubr.bf16.mxu0 0
        %2642 = vmatmul.mubr.bf16.gmra.mrb[0].mxu0 %v2593
        %v2643 = vpop.f32.mrb[0].mxu0
        %v2644 = vadd.f32 0.0, %v2643
        %v2645 = vpop.f32.mrb[0].mxu0
        %v2646 = vpop.f32.mrb[0].mxu0
        %v2647 = vadd.f32 0.0, %v2646
        %v2648 = vpop.f32.mrb[0].mxu0
        %2649 = vmatprep.mubr.bf16.mxu0 0
        %2650 = vmatmul.mubr.bf16.gmra.mrb[0].mxu0 %v2596
        %v2651 = vpop.f32.mrb[0].mxu0
        %v2652 = vadd.f32 0.0, %v2651
        %v2653 = vpop.f32.mrb[0].mxu0
        %v2654 = vpop.f32.mrb[0].mxu0
        %v2655 = vadd.f32 0.0, %v2654
        %v2656 = vpop.f32.mrb[0].mxu0
        %2657 = vmatprep.mubr.bf16.mxu0 0
        %2658 = vmatmul.mubr.bf16.gmra.mrb[0].mxu0 %v2599
        %v2659 = vpop.f32.mrb[0].mxu0
        %v2660 = vadd.f32 0.0, %v2659
        %v2661 = vpop.f32.mrb[0].mxu0
        %v2662 = vpop.f32.mrb[0].mxu0
        %v2663 = vadd.f32 0.0, %v2662
        %v2664 = vpop.f32.mrb[0].mxu0
        %2665 = vdwg.mxu0
        %2674 = vrot.lane.b32.xlu0 %v2636, 96
        %v2675 = vpop.permute.xlu0 %2674
        %2676 = vrot.lane.b32.xlu0 %v2639, 96
        %v2677 = vpop.permute.xlu0 %2676
        %2678 = vrot.lane.b32.xlu0 %v2644, 96
        %v2679 = vpop.permute.xlu0 %2678
        %2680 = vrot.lane.b32.xlu0 %v2647, 96
        %v2681 = vpop.permute.xlu0 %2680
        %2682 = vrot.lane.b32.xlu0 %v2652, 96
        %v2683 = vpop.permute.xlu0 %2682
        %2684 = vrot.lane.b32.xlu0 %v2655, 96
        %v2685 = vpop.permute.xlu0 %2684
        %2686 = vrot.lane.b32.xlu0 %v2660, 96
        %v2687 = vpop.permute.xlu0 %2686
        %2688 = vrot.lane.b32.xlu0 %v2663, 96
        %v2689 = vpop.permute.xlu0 %2688
        %vm2698 = vcmask 1048320
        %2699 = vst.msk [vmem:[#allocation2] sm:$0xff] %vm2698, %v2675
        %2700 = vst.msk [vmem:[#allocation2 + $0x8] sm:$0xff] %vm2698, %v2677
        %2701 = vst.msk [vmem:[#allocation2 + $0x10] sm:$0xff] %vm2698, %v2679
        %2702 = vst.msk [vmem:[#allocation2 + $0x18] sm:$0xff] %vm2698, %v2681
        %2703 = vst.msk [vmem:[#allocation2 + $0x20] sm:$0xff] %vm2698, %v2683
        %2704 = vst.msk [vmem:[#allocation2 + $0x28] sm:$0xff] %vm2698, %v2685
        %2705 = vst.msk [vmem:[#allocation2 + $0x30] sm:$0xff] %vm2698, %v2687
        %2706 = vst.msk [vmem:[#allocation2 + $0x38] sm:$0xff] %vm2698, %v2689
        %v2708 = vlaneseq
        %v2709 = vshrl.u32 %v2708, 7
        %v2710 = vsub.s32 0, %v2709
        %v2711 = vrot.slane %v605, %v2710
        %v2714 = vsel %vm1446, %v1428, 0
        %v2717 = vsel %vm1446, %v1431, 0
        %v2720 = vsel %vm1446, %v1434, 0
        %v2723 = vsel %vm1446, %v1437, 0
        %v2726 = vsel %vm1446, %v1429, 0
        %v2729 = vsel %vm1446, %v1432, 0
        %v2732 = vsel %vm1446, %v1435, 0
        %v2735 = vsel %vm1446, %v1438, 0
        %2737 = vmatprep.subr.bf16.mxu0 0
        %2738 = vmatpush1.bf16.xpose.msra.mxu0 %v2726
        %2739 = vmatprep.subr.bf16.mxu0 0
        %2740 = vmatpush1.bf16.xpose.msra.mxu0 %v2729
        %2741 = vmatprep.subr.bf16.mxu0 0
        %2742 = vmatpush1.bf16.xpose.msra.mxu0 %v2732
        %2743 = vmatprep.subr.bf16.mxu0 0
        %2744 = vmatpush1.bf16.xpose.msra.mxu0 %v2735
        %2745 = vmatprep.subr.bf16.mxu0 0
        %2746 = vmatpush1.bf16.xpose.msra.mxu0 0
        %2747 = vmatprep.subr.bf16.mxu0 0
        %2748 = vmatpush1.bf16.xpose.msra.mxu0 0
        %2749 = vmatprep.subr.bf16.mxu0 0
        %2750 = vmatpush1.bf16.xpose.msra.mxu0 0
        %2751 = vmatprep.subr.bf16.mxu0 0
        %2752 = vmatpush1.bf16.xpose.msra.mxu0 0
        %2753 = vmatprep.subr.bf16.mxu0 0
        %2754 = vmatpush1.bf16.xpose.msra.mxu0 0
        %2755 = vmatprep.subr.bf16.mxu0 0
        %2756 = vmatpush1.bf16.xpose.msra.mxu0 0
        %2757 = vmatprep.subr.bf16.mxu0 0
        %2758 = vmatpush1.bf16.xpose.msra.mxu0 0
        %2759 = vmatprep.subr.bf16.mxu0 0
        %2760 = vmatpush1.bf16.xpose.msra.mxu0 0
        %2761 = vmatprep.subr.bf16.mxu0 0
        %2762 = vmatpush1.bf16.xpose.msra.mxu0 0
        %2763 = vmatprep.subr.bf16.mxu0 0
        %2764 = vmatpush1.bf16.xpose.msra.mxu0 0
        %2765 = vmatprep.subr.bf16.mxu0 0
        %2766 = vmatpush1.bf16.xpose.msra.mxu0 0
        %2767 = vmatprep.subr.bf16.mxu0 0
        %2768 = vmatpush1.bf16.xpose.msra.mxu0 0
        %2769 = vmatprep.mubr.bf16.mxu0 0
        %2770 = vmatmul.mubr.bf16.gmra.mrb[0].mxu0 %v2714
        %v2771 = vpop.f32.mrb[0].mxu0
        %v2772 = vadd.f32 %v2711, %v2771
        %v2773 = vpop.f32.mrb[0].mxu0
        %v2774 = vpop.f32.mrb[0].mxu0
        %v2775 = vadd.f32 %v2711, %v2774
        %v2776 = vpop.f32.mrb[0].mxu0
        %2777 = vmatprep.mubr.bf16.mxu0 0
        %2778 = vmatmul.mubr.bf16.gmra.mrb[0].mxu0 %v2717
        %v2779 = vpop.f32.mrb[0].mxu0
        %v2780 = vadd.f32 %v2711, %v2779
        %v2781 = vpop.f32.mrb[0].mxu0
        %v2782 = vpop.f32.mrb[0].mxu0
        %v2783 = vadd.f32 %v2711, %v2782
        %v2784 = vpop.f32.mrb[0].mxu0
        %2785 = vmatprep.mubr.bf16.mxu0 0
        %2786 = vmatmul.mubr.bf16.gmra.mrb[0].mxu0 %v2720
        %v2787 = vpop.f32.mrb[0].mxu0
        %v2788 = vadd.f32 %v2711, %v2787
        %v2789 = vpop.f32.mrb[0].mxu0
        %v2790 = vpop.f32.mrb[0].mxu0
        %v2791 = vadd.f32 %v2711, %v2790
        %v2792 = vpop.f32.mrb[0].mxu0
        %2793 = vmatprep.mubr.bf16.mxu0 0
        %2794 = vmatmul.mubr.bf16.gmra.mrb[0].mxu0 %v2723
        %v2795 = vpop.f32.mrb[0].mxu0
        %v2796 = vadd.f32 %v2711, %v2795
        %v2797 = vpop.f32.mrb[0].mxu0
        %v2798 = vpop.f32.mrb[0].mxu0
        %v2799 = vadd.f32 %v2711, %v2798
        %v2800 = vpop.f32.mrb[0].mxu0
        %2801 = vdwg.mxu0
        %v2802 = vsel %vm1536, %v2772, -inf
        %2803 = vmax.xlane.f32.xlu0 %v2802
        %v2804 = vpop.xlane.xlu0 %2803
        %v2805 = vsel %vm1536, %v2775, -inf
        %2806 = vmax.xlane.f32.xlu0 %v2805
        %v2807 = vpop.xlane.xlu0 %2806
        %v2808 = vsel %vm1536, %v2780, -inf
        %2809 = vmax.xlane.f32.xlu0 %v2808
        %v2810 = vpop.xlane.xlu0 %2809
        %v2811 = vsel %vm1536, %v2783, -inf
        %2812 = vmax.xlane.f32.xlu0 %v2811
        %v2813 = vpop.xlane.xlu0 %2812
        %v2814 = vsel %vm1536, %v2788, -inf
        %2815 = vmax.xlane.f32.xlu0 %v2814
        %v2816 = vpop.xlane.xlu0 %2815
        %v2817 = vsel %vm1536, %v2791, -inf
        %2818 = vmax.xlane.f32.xlu0 %v2817
        %v2819 = vpop.xlane.xlu0 %2818
        %v2820 = vsel %vm1536, %v2796, -inf
        %2821 = vmax.xlane.f32.xlu0 %v2820
        %v2822 = vpop.xlane.xlu0 %2821
        %v2823 = vsel %vm1536, %v2799, -inf
        %2824 = vmax.xlane.f32.xlu0 %v2823
        %v2825 = vpop.xlane.xlu0 %2824
        %v2826 = vsub.f32 %v2772, %v2804
        %v2827 = vsub.f32 %v2775, %v2807
        %v2828 = vsub.f32 %v2780, %v2810
        %v2829 = vsub.f32 %v2783, %v2813
        %v2830 = vsub.f32 %v2788, %v2816
        %v2831 = vsub.f32 %v2791, %v2819
        %v2832 = vsub.f32 %v2796, %v2822
        %v2833 = vsub.f32 %v2799, %v2825
        %v2834 = vmul.f32 %v2826, 1.442695
        %v2835 = vpow.pop %v2834
        %v2836 = vmul.f32 %v2827, 1.442695
        %v2837 = vpow.pop %v2836
        %v2838 = vmul.f32 %v2828, 1.442695
        %v2839 = vpow.pop %v2838
        %v2840 = vmul.f32 %v2829, 1.442695
        %v2841 = vpow.pop %v2840
        %v2842 = vmul.f32 %v2830, 1.442695
        %v2843 = vpow.pop %v2842
        %v2844 = vmul.f32 %v2831, 1.442695
        %v2845 = vpow.pop %v2844
        %v2846 = vmul.f32 %v2832, 1.442695
        %v2847 = vpow.pop %v2846
        %v2848 = vmul.f32 %v2833, 1.442695
        %v2849 = vpow.pop %v2848
        %v2850 = vsel %vm1536, %v2835, 0.0
        %2851 = vadd.xlane.f32.xlu0 %v2850
        %v2852 = vpop.xlane.xlu0 %2851
        %v2853 = vsel %vm1536, %v2837, 0.0
        %2854 = vadd.xlane.f32.xlu0 %v2853
        %v2855 = vpop.xlane.xlu0 %2854
        %v2856 = vsel %vm1536, %v2839, 0.0
        %2857 = vadd.xlane.f32.xlu0 %v2856
        %v2858 = vpop.xlane.xlu0 %2857
        %v2859 = vsel %vm1536, %v2841, 0.0
        %2860 = vadd.xlane.f32.xlu0 %v2859
        %v2861 = vpop.xlane.xlu0 %2860
        %v2862 = vsel %vm1536, %v2843, 0.0
        %2863 = vadd.xlane.f32.xlu0 %v2862
        %v2864 = vpop.xlane.xlu0 %2863
        %v2865 = vsel %vm1536, %v2845, 0.0
        %2866 = vadd.xlane.f32.xlu0 %v2865
        %v2867 = vpop.xlane.xlu0 %2866
        %v2868 = vsel %vm1536, %v2847, 0.0
        %2869 = vadd.xlane.f32.xlu0 %v2868
        %v2870 = vpop.xlane.xlu0 %2869
        %v2871 = vsel %vm1536, %v2849, 0.0
        %2872 = vadd.xlane.f32.xlu0 %v2871
        %v2873 = vpop.xlane.xlu0 %2872
        %v2874 = vrcp.pop %v2852
        %v2875 = vrcp.pop %v2855
        %v2876 = vrcp.pop %v2858
        %v2877 = vrcp.pop %v2861
        %v2878 = vrcp.pop %v2864
        %v2879 = vrcp.pop %v2867
        %v2880 = vrcp.pop %v2870
        %v2881 = vrcp.pop %v2873
        %v2882 = vmul.f32 %v2835, %v2874
        %v2883 = vmul.f32 %v2837, %v2875
        %v2884 = vmul.f32 %v2839, %v2876
        %v2885 = vmul.f32 %v2841, %v2877
        %v2886 = vmul.f32 %v2843, %v2878
        %v2887 = vmul.f32 %v2845, %v2879
        %v2888 = vmul.f32 %v2847, %v2880
        %v2889 = vmul.f32 %v2849, %v2881
        %v2890 = vpack.c.bf16 %v2883, %v2882
        %v2891 = vpack.c.bf16 %v2885, %v2884
        %v2892 = vpack.c.bf16 %v2887, %v2886
        %v2893 = vpack.c.bf16 %v2889, %v2888
        %v2895 = vsel %vm1536, %v2890, 0
        %v2898 = vsel %vm1536, %v2891, 0
        %v2901 = vsel %vm1536, %v2892, 0
        %v2904 = vsel %vm1536, %v2893, 0
        %2906 = vmatprep.subr.bf16.mxu0 0
        %2907 = vmatpush1.bf16.msra.mxu0 %v1430
        %2908 = vmatprep.subr.bf16.mxu0 0
        %2909 = vmatpush1.bf16.msra.mxu0 %v1433
        %2910 = vmatprep.subr.bf16.mxu0 0
        %2911 = vmatpush1.bf16.msra.mxu0 %v1436
        %2912 = vmatprep.subr.bf16.mxu0 0
        %2913 = vmatpush1.bf16.msra.mxu0 %v1439
        %2914 = vmatprep.subr.bf16.mxu0 0
        %2915 = vmatpush1.bf16.msra.mxu0 0
        %2916 = vmatprep.subr.bf16.mxu0 0
        %2917 = vmatpush1.bf16.msra.mxu0 0
        %2918 = vmatprep.subr.bf16.mxu0 0
        %2919 = vmatpush1.bf16.msra.mxu0 0
        %2920 = vmatprep.subr.bf16.mxu0 0
        %2921 = vmatpush1.bf16.msra.mxu0 0
        %2922 = vmatprep.subr.bf16.mxu0 0
        %2923 = vmatpush1.bf16.msra.mxu0 0
        %2924 = vmatprep.subr.bf16.mxu0 0
        %2925 = vmatpush1.bf16.msra.mxu0 0
        %2926 = vmatprep.subr.bf16.mxu0 0
        %2927 = vmatpush1.bf16.msra.mxu0 0
        %2928 = vmatprep.subr.bf16.mxu0 0
        %2929 = vmatpush1.bf16.msra.mxu0 0
        %2930 = vmatprep.subr.bf16.mxu0 0
        %2931 = vmatpush1.bf16.msra.mxu0 0
        %2932 = vmatprep.subr.bf16.mxu0 0
        %2933 = vmatpush1.bf16.msra.mxu0 0
        %2934 = vmatprep.subr.bf16.mxu0 0
        %2935 = vmatpush1.bf16.msra.mxu0 0
        %2936 = vmatprep.subr.bf16.mxu0 0
        %2937 = vmatpush1.bf16.msra.mxu0 0
        %2938 = vmatprep.mubr.bf16.mxu0 0
        %2939 = vmatmul.mubr.bf16.gmra.mrb[0].mxu0 %v2895
        %v2940 = vpop.f32.mrb[0].mxu0
        %v2941 = vadd.f32 0.0, %v2940
        %v2942 = vpop.f32.mrb[0].mxu0
        %v2943 = vpop.f32.mrb[0].mxu0
        %v2944 = vadd.f32 0.0, %v2943
        %v2945 = vpop.f32.mrb[0].mxu0
        %2946 = vmatprep.mubr.bf16.mxu0 0
        %2947 = vmatmul.mubr.bf16.gmra.mrb[0].mxu0 %v2898
        %v2948 = vpop.f32.mrb[0].mxu0
        %v2949 = vadd.f32 0.0, %v2948
        %v2950 = vpop.f32.mrb[0].mxu0
        %v2951 = vpop.f32.mrb[0].mxu0
        %v2952 = vadd.f32 0.0, %v2951
        %v2953 = vpop.f32.mrb[0].mxu0
        %2954 = vmatprep.mubr.bf16.mxu0 0
        %2955 = vmatmul.mubr.bf16.gmra.mrb[0].mxu0 %v2901
        %v2956 = vpop.f32.mrb[0].mxu0
        %v2957 = vadd.f32 0.0, %v2956
        %v2958 = vpop.f32.mrb[0].mxu0
        %v2959 = vpop.f32.mrb[0].mxu0
        %v2960 = vadd.f32 0.0, %v2959
        %v2961 = vpop.f32.mrb[0].mxu0
        %2962 = vmatprep.mubr.bf16.mxu0 0
        %2963 = vmatmul.mubr.bf16.gmra.mrb[0].mxu0 %v2904
        %v2964 = vpop.f32.mrb[0].mxu0
        %v2965 = vadd.f32 0.0, %v2964
        %v2966 = vpop.f32.mrb[0].mxu0
        %v2967 = vpop.f32.mrb[0].mxu0
        %v2968 = vadd.f32 0.0, %v2967
        %v2969 = vpop.f32.mrb[0].mxu0
        %2970 = vdwg.mxu0
        %2971 = vst.msk [vmem:[#allocation2 + $0x40] sm:$0xff] %vm1446, %v2941
        %2972 = vst.msk [vmem:[#allocation2 + $0x48] sm:$0xff] %vm1446, %v2944
        %2973 = vst.msk [vmem:[#allocation2 + $0x50] sm:$0xff] %vm1446, %v2949
        %2974 = vst.msk [vmem:[#allocation2 + $0x58] sm:$0xff] %vm1446, %v2952
        %2975 = vst.msk [vmem:[#allocation2 + $0x60] sm:$0xff] %vm1446, %v2957
        %2976 = vst.msk [vmem:[#allocation2 + $0x68] sm:$0xff] %vm1446, %v2960
        %2977 = vst.msk [vmem:[#allocation2 + $0x70] sm:$0xff] %vm1446, %v2965
        %2978 = vst.msk [vmem:[#allocation2 + $0x78] sm:$0xff] %vm1446, %v2968
        %2983 = vrot.lane.b32.xlu0 %v1428, 96
        %v2984 = vpop.permute.xlu0 %2983
        %2985 = vrot.lane.b32.xlu0 %v1431, 96
        %v2986 = vpop.permute.xlu0 %2985
        %2987 = vrot.lane.b32.xlu0 %v1434, 96
        %v2988 = vpop.permute.xlu0 %2987
        %2989 = vrot.lane.b32.xlu0 %v1437, 96
        %v2990 = vpop.permute.xlu0 %2989
        %2995 = vrot.lane.b32.xlu0 %v1429, 96
        %v2996 = vpop.permute.xlu0 %2995
        %2997 = vrot.lane.b32.xlu0 %v1432, 96
        %v2998 = vpop.permute.xlu0 %2997
        %2999 = vrot.lane.b32.xlu0 %v1435, 96
        %v3000 = vpop.permute.xlu0 %2999
        %3001 = vrot.lane.b32.xlu0 %v1438, 96
        %v3002 = vpop.permute.xlu0 %3001
        %v3004 = vsel %vm1446, %v2984, 0
        %v3007 = vsel %vm1446, %v2986, 0
        %v3010 = vsel %vm1446, %v2988, 0
        %v3013 = vsel %vm1446, %v2990, 0
        %v3016 = vsel %vm1446, %v2996, 0
        %v3019 = vsel %vm1446, %v2998, 0
        %v3022 = vsel %vm1446, %v3000, 0
        %v3025 = vsel %vm1446, %v3002, 0
        %3027 = vmatprep.subr.bf16.mxu0 0
        %3028 = vmatpush1.bf16.xpose.msra.mxu0 %v3016
        %3029 = vmatprep.subr.bf16.mxu0 0
        %3030 = vmatpush1.bf16.xpose.msra.mxu0 %v3019
        %3031 = vmatprep.subr.bf16.mxu0 0
        %3032 = vmatpush1.bf16.xpose.msra.mxu0 %v3022
        %3033 = vmatprep.subr.bf16.mxu0 0
        %3034 = vmatpush1.bf16.xpose.msra.mxu0 %v3025
        %3035 = vmatprep.subr.bf16.mxu0 0
        %3036 = vmatpush1.bf16.xpose.msra.mxu0 0
        %3037 = vmatprep.subr.bf16.mxu0 0
        %3038 = vmatpush1.bf16.xpose.msra.mxu0 0
        %3039 = vmatprep.subr.bf16.mxu0 0
        %3040 = vmatpush1.bf16.xpose.msra.mxu0 0
        %3041 = vmatprep.subr.bf16.mxu0 0
        %3042 = vmatpush1.bf16.xpose.msra.mxu0 0
        %3043 = vmatprep.subr.bf16.mxu0 0
        %3044 = vmatpush1.bf16.xpose.msra.mxu0 0
        %3045 = vmatprep.subr.bf16.mxu0 0
        %3046 = vmatpush1.bf16.xpose.msra.mxu0 0
        %3047 = vmatprep.subr.bf16.mxu0 0
        %3048 = vmatpush1.bf16.xpose.msra.mxu0 0
        %3049 = vmatprep.subr.bf16.mxu0 0
        %3050 = vmatpush1.bf16.xpose.msra.mxu0 0
        %3051 = vmatprep.subr.bf16.mxu0 0
        %3052 = vmatpush1.bf16.xpose.msra.mxu0 0
        %3053 = vmatprep.subr.bf16.mxu0 0
        %3054 = vmatpush1.bf16.xpose.msra.mxu0 0
        %3055 = vmatprep.subr.bf16.mxu0 0
        %3056 = vmatpush1.bf16.xpose.msra.mxu0 0
        %3057 = vmatprep.subr.bf16.mxu0 0
        %3058 = vmatpush1.bf16.xpose.msra.mxu0 0
        %3059 = vmatprep.mubr.bf16.mxu0 0
        %3060 = vmatmul.mubr.bf16.gmra.mrb[0].mxu0 %v3004
        %v3061 = vpop.f32.mrb[0].mxu0
        %v3062 = vadd.f32 %v2711, %v3061
        %v3063 = vpop.f32.mrb[0].mxu0
        %v3064 = vpop.f32.mrb[0].mxu0
        %v3065 = vadd.f32 %v2711, %v3064
        %v3066 = vpop.f32.mrb[0].mxu0
        %3067 = vmatprep.mubr.bf16.mxu0 0
        %3068 = vmatmul.mubr.bf16.gmra.mrb[0].mxu0 %v3007
        %v3069 = vpop.f32.mrb[0].mxu0
        %v3070 = vadd.f32 %v2711, %v3069
        %v3071 = vpop.f32.mrb[0].mxu0
        %v3072 = vpop.f32.mrb[0].mxu0
        %v3073 = vadd.f32 %v2711, %v3072
        %v3074 = vpop.f32.mrb[0].mxu0
        %3075 = vmatprep.mubr.bf16.mxu0 0
        %3076 = vmatmul.mubr.bf16.gmra.mrb[0].mxu0 %v3010
        %v3077 = vpop.f32.mrb[0].mxu0
        %v3078 = vadd.f32 %v2711, %v3077
        %v3079 = vpop.f32.mrb[0].mxu0
        %v3080 = vpop.f32.mrb[0].mxu0
        %v3081 = vadd.f32 %v2711, %v3080
        %v3082 = vpop.f32.mrb[0].mxu0
        %3083 = vmatprep.mubr.bf16.mxu0 0
        %3084 = vmatmul.mubr.bf16.gmra.mrb[0].mxu0 %v3013
        %v3085 = vpop.f32.mrb[0].mxu0
        %v3086 = vadd.f32 %v2711, %v3085
        %v3087 = vpop.f32.mrb[0].mxu0
        %v3088 = vpop.f32.mrb[0].mxu0
        %v3089 = vadd.f32 %v2711, %v3088
        %v3090 = vpop.f32.mrb[0].mxu0
        %3091 = vdwg.mxu0
        %v3092 = vsel %vm1536, %v3062, -inf
        %3093 = vmax.xlane.f32.xlu0 %v3092
        %v3094 = vpop.xlane.xlu0 %3093
        %v3095 = vsel %vm1536, %v3065, -inf
        %3096 = vmax.xlane.f32.xlu0 %v3095
        %v3097 = vpop.xlane.xlu0 %3096
        %v3098 = vsel %vm1536, %v3070, -inf
        %3099 = vmax.xlane.f32.xlu0 %v3098
        %v3100 = vpop.xlane.xlu0 %3099
        %v3101 = vsel %vm1536, %v3073, -inf
        %3102 = vmax.xlane.f32.xlu0 %v3101
        %v3103 = vpop.xlane.xlu0 %3102
        %v3104 = vsel %vm1536, %v3078, -inf
        %3105 = vmax.xlane.f32.xlu0 %v3104
        %v3106 = vpop.xlane.xlu0 %3105
        %v3107 = vsel %vm1536, %v3081, -inf
        %3108 = vmax.xlane.f32.xlu0 %v3107
        %v3109 = vpop.xlane.xlu0 %3108
        %v3110 = vsel %vm1536, %v3086, -inf
        %3111 = vmax.xlane.f32.xlu0 %v3110
        %v3112 = vpop.xlane.xlu0 %3111
        %v3113 = vsel %vm1536, %v3089, -inf
        %3114 = vmax.xlane.f32.xlu0 %v3113
        %v3115 = vpop.xlane.xlu0 %3114
        %v3116 = vsub.f32 %v3062, %v3094
        %v3117 = vsub.f32 %v3065, %v3097
        %v3118 = vsub.f32 %v3070, %v3100
        %v3119 = vsub.f32 %v3073, %v3103
        %v3120 = vsub.f32 %v3078, %v3106
        %v3121 = vsub.f32 %v3081, %v3109
        %v3122 = vsub.f32 %v3086, %v3112
        %v3123 = vsub.f32 %v3089, %v3115
        %v3124 = vmul.f32 %v3116, 1.442695
        %v3125 = vpow.pop %v3124
        %v3126 = vmul.f32 %v3117, 1.442695
        %v3127 = vpow.pop %v3126
        %v3128 = vmul.f32 %v3118, 1.442695
        %v3129 = vpow.pop %v3128
        %v3130 = vmul.f32 %v3119, 1.442695
        %v3131 = vpow.pop %v3130
        %v3132 = vmul.f32 %v3120, 1.442695
        %v3133 = vpow.pop %v3132
        %v3134 = vmul.f32 %v3121, 1.442695
        %v3135 = vpow.pop %v3134
        %v3136 = vmul.f32 %v3122, 1.442695
        %v3137 = vpow.pop %v3136
        %v3138 = vmul.f32 %v3123, 1.442695
        %v3139 = vpow.pop %v3138
        %v3140 = vsel %vm1536, %v3125, 0.0
        %3141 = vadd.xlane.f32.xlu0 %v3140
        %v3142 = vpop.xlane.xlu0 %3141
        %v3143 = vsel %vm1536, %v3127, 0.0
        %3144 = vadd.xlane.f32.xlu0 %v3143
        %v3145 = vpop.xlane.xlu0 %3144
        %v3146 = vsel %vm1536, %v3129, 0.0
        %3147 = vadd.xlane.f32.xlu0 %v3146
        %v3148 = vpop.xlane.xlu0 %3147
        %v3149 = vsel %vm1536, %v3131, 0.0
        %3150 = vadd.xlane.f32.xlu0 %v3149
        %v3151 = vpop.xlane.xlu0 %3150
        %v3152 = vsel %vm1536, %v3133, 0.0
        %3153 = vadd.xlane.f32.xlu0 %v3152
        %v3154 = vpop.xlane.xlu0 %3153
        %v3155 = vsel %vm1536, %v3135, 0.0
        %3156 = vadd.xlane.f32.xlu0 %v3155
        %v3157 = vpop.xlane.xlu0 %3156
        %v3158 = vsel %vm1536, %v3137, 0.0
        %3159 = vadd.xlane.f32.xlu0 %v3158
        %v3160 = vpop.xlane.xlu0 %3159
        %v3161 = vsel %vm1536, %v3139, 0.0
        %3162 = vadd.xlane.f32.xlu0 %v3161
        %v3163 = vpop.xlane.xlu0 %3162
        %v3164 = vrcp.pop %v3142
        %v3165 = vrcp.pop %v3145
        %v3166 = vrcp.pop %v3148
        %v3167 = vrcp.pop %v3151
        %v3168 = vrcp.pop %v3154
        %v3169 = vrcp.pop %v3157
        %v3170 = vrcp.pop %v3160
        %v3171 = vrcp.pop %v3163
        %v3172 = vmul.f32 %v3125, %v3164
        %v3173 = vmul.f32 %v3127, %v3165
        %v3174 = vmul.f32 %v3129, %v3166
        %v3175 = vmul.f32 %v3131, %v3167
        %v3176 = vmul.f32 %v3133, %v3168
        %v3177 = vmul.f32 %v3135, %v3169
        %v3178 = vmul.f32 %v3137, %v3170
        %v3179 = vmul.f32 %v3139, %v3171
        %v3180 = vpack.c.bf16 %v3173, %v3172
        %v3181 = vpack.c.bf16 %v3175, %v3174
        %v3182 = vpack.c.bf16 %v3177, %v3176
        %v3183 = vpack.c.bf16 %v3179, %v3178
        %3188 = vrot.lane.b32.xlu0 %v1430, 96
        %v3189 = vpop.permute.xlu0 %3188
        %3190 = vrot.lane.b32.xlu0 %v1433, 96
        %v3191 = vpop.permute.xlu0 %3190
        %3192 = vrot.lane.b32.xlu0 %v1436, 96
        %v3193 = vpop.permute.xlu0 %3192
        %3194 = vrot.lane.b32.xlu0 %v1439, 96
        %v3195 = vpop.permute.xlu0 %3194
        %v3201 = vsel %vm1536, %v3180, 0
        %v3204 = vsel %vm1536, %v3181, 0
        %v3207 = vsel %vm1536, %v3182, 0
        %v3210 = vsel %vm1536, %v3183, 0
        %3212 = vmatprep.subr.bf16.mxu0 0
        %3213 = vmatpush1.bf16.msra.mxu0 %v3189
        %3214 = vmatprep.subr.bf16.mxu0 0
        %3215 = vmatpush1.bf16.msra.mxu0 %v3191
        %3216 = vmatprep.subr.bf16.mxu0 0
        %3217 = vmatpush1.bf16.msra.mxu0 %v3193
        %3218 = vmatprep.subr.bf16.mxu0 0
        %3219 = vmatpush1.bf16.msra.mxu0 %v3195
        %3220 = vmatprep.subr.bf16.mxu0 0
        %3221 = vmatpush1.bf16.msra.mxu0 0
        %3222 = vmatprep.subr.bf16.mxu0 0
        %3223 = vmatpush1.bf16.msra.mxu0 0
        %3224 = vmatprep.subr.bf16.mxu0 0
        %3225 = vmatpush1.bf16.msra.mxu0 0
        %3226 = vmatprep.subr.bf16.mxu0 0
        %3227 = vmatpush1.bf16.msra.mxu0 0
        %3228 = vmatprep.subr.bf16.mxu0 0
        %3229 = vmatpush1.bf16.msra.mxu0 0
        %3230 = vmatprep.subr.bf16.mxu0 0
        %3231 = vmatpush1.bf16.msra.mxu0 0
        %3232 = vmatprep.subr.bf16.mxu0 0
        %3233 = vmatpush1.bf16.msra.mxu0 0
        %3234 = vmatprep.subr.bf16.mxu0 0
        %3235 = vmatpush1.bf16.msra.mxu0 0
        %3236 = vmatprep.subr.bf16.mxu0 0
        %3237 = vmatpush1.bf16.msra.mxu0 0
        %3238 = vmatprep.subr.bf16.mxu0 0
        %3239 = vmatpush1.bf16.msra.mxu0 0
        %3240 = vmatprep.subr.bf16.mxu0 0
        %3241 = vmatpush1.bf16.msra.mxu0 0
        %3242 = vmatprep.subr.bf16.mxu0 0
        %3243 = vmatpush1.bf16.msra.mxu0 0
        %3244 = vmatprep.mubr.bf16.mxu0 0
        %3245 = vmatmul.mubr.bf16.gmra.mrb[0].mxu0 %v3201
        %v3246 = vpop.f32.mrb[0].mxu0
        %v3247 = vadd.f32 0.0, %v3246
        %v3248 = vpop.f32.mrb[0].mxu0
        %v3249 = vpop.f32.mrb[0].mxu0
        %v3250 = vadd.f32 0.0, %v3249
        %v3251 = vpop.f32.mrb[0].mxu0
        %3252 = vmatprep.mubr.bf16.mxu0 0
        %3253 = vmatmul.mubr.bf16.gmra.mrb[0].mxu0 %v3204
        %v3254 = vpop.f32.mrb[0].mxu0
        %v3255 = vadd.f32 0.0, %v3254
        %v3256 = vpop.f32.mrb[0].mxu0
        %v3257 = vpop.f32.mrb[0].mxu0
        %v3258 = vadd.f32 0.0, %v3257
        %v3259 = vpop.f32.mrb[0].mxu0
        %3260 = vmatprep.mubr.bf16.mxu0 0
        %3261 = vmatmul.mubr.bf16.gmra.mrb[0].mxu0 %v3207
        %v3262 = vpop.f32.mrb[0].mxu0
        %v3263 = vadd.f32 0.0, %v3262
        %v3264 = vpop.f32.mrb[0].mxu0
        %v3265 = vpop.f32.mrb[0].mxu0
        %v3266 = vadd.f32 0.0, %v3265
        %v3267 = vpop.f32.mrb[0].mxu0
        %3268 = vmatprep.mubr.bf16.mxu0 0
        %3269 = vmatmul.mubr.bf16.gmra.mrb[0].mxu0 %v3210
        %v3270 = vpop.f32.mrb[0].mxu0
        %v3271 = vadd.f32 0.0, %v3270
        %v3272 = vpop.f32.mrb[0].mxu0
        %v3273 = vpop.f32.mrb[0].mxu0
        %v3274 = vadd.f32 0.0, %v3273
        %v3275 = vpop.f32.mrb[0].mxu0
        %3276 = vdwg.mxu0
        %3285 = vrot.lane.b32.xlu0 %v3247, 32
        %v3286 = vpop.permute.xlu0 %3285
        %3287 = vrot.lane.b32.xlu0 %v3250, 32
        %v3288 = vpop.permute.xlu0 %3287
        %3289 = vrot.lane.b32.xlu0 %v3255, 32
        %v3290 = vpop.permute.xlu0 %3289
        %3291 = vrot.lane.b32.xlu0 %v3258, 32
        %v3292 = vpop.permute.xlu0 %3291
        %3293 = vrot.lane.b32.xlu0 %v3263, 32
        %v3294 = vpop.permute.xlu0 %3293
        %3295 = vrot.lane.b32.xlu0 %v3266, 32
        %v3296 = vpop.permute.xlu0 %3295
        %3297 = vrot.lane.b32.xlu0 %v3271, 32
        %v3298 = vpop.permute.xlu0 %3297
        %3299 = vrot.lane.b32.xlu0 %v3274, 32
        %v3300 = vpop.permute.xlu0 %3299
        %3309 = vst.msk [vmem:[#allocation2 + $0x40] sm:$0xff] %vm2044, %v3286
        %3310 = vst.msk [vmem:[#allocation2 + $0x48] sm:$0xff] %vm2044, %v3288
        %3311 = vst.msk [vmem:[#allocation2 + $0x50] sm:$0xff] %vm2044, %v3290
        %3312 = vst.msk [vmem:[#allocation2 + $0x58] sm:$0xff] %vm2044, %v3292
        %3313 = vst.msk [vmem:[#allocation2 + $0x60] sm:$0xff] %vm2044, %v3294
        %3314 = vst.msk [vmem:[#allocation2 + $0x68] sm:$0xff] %vm2044, %v3296
        %3315 = vst.msk [vmem:[#allocation2 + $0x70] sm:$0xff] %vm2044, %v3298
        %3316 = vst.msk [vmem:[#allocation2 + $0x78] sm:$0xff] %vm2044, %v3300
        %3317 = vrot.lane.b32.xlu0 %v1428, 64
        %v3318 = vpop.permute.xlu0 %3317
        %3319 = vrot.lane.b32.xlu0 %v1431, 64
        %v3320 = vpop.permute.xlu0 %3319
        %3321 = vrot.lane.b32.xlu0 %v1434, 64
        %v3322 = vpop.permute.xlu0 %3321
        %3323 = vrot.lane.b32.xlu0 %v1437, 64
        %v3324 = vpop.permute.xlu0 %3323
        %3325 = vrot.lane.b32.xlu0 %v1429, 64
        %v3326 = vpop.permute.xlu0 %3325
        %3327 = vrot.lane.b32.xlu0 %v1432, 64
        %v3328 = vpop.permute.xlu0 %3327
        %3329 = vrot.lane.b32.xlu0 %v1435, 64
        %v3330 = vpop.permute.xlu0 %3329
        %3331 = vrot.lane.b32.xlu0 %v1438, 64
        %v3332 = vpop.permute.xlu0 %3331
        %v3334 = vsel %vm1446, %v3318, 0
        %v3337 = vsel %vm1446, %v3320, 0
        %v3340 = vsel %vm1446, %v3322, 0
        %v3343 = vsel %vm1446, %v3324, 0
        %v3346 = vsel %vm1446, %v3326, 0
        %v3349 = vsel %vm1446, %v3328, 0
        %v3352 = vsel %vm1446, %v3330, 0
        %v3355 = vsel %vm1446, %v3332, 0
        %3357 = vmatprep.subr.bf16.mxu0 0
        %3358 = vmatpush1.bf16.xpose.msra.mxu0 %v3346
        %3359 = vmatprep.subr.bf16.mxu0 0
        %3360 = vmatpush1.bf16.xpose.msra.mxu0 %v3349
        %3361 = vmatprep.subr.bf16.mxu0 0
        %3362 = vmatpush1.bf16.xpose.msra.mxu0 %v3352
        %3363 = vmatprep.subr.bf16.mxu0 0
        %3364 = vmatpush1.bf16.xpose.msra.mxu0 %v3355
        %3365 = vmatprep.subr.bf16.mxu0 0
        %3366 = vmatpush1.bf16.xpose.msra.mxu0 0
        %3367 = vmatprep.subr.bf16.mxu0 0
        %3368 = vmatpush1.bf16.xpose.msra.mxu0 0
        %3369 = vmatprep.subr.bf16.mxu0 0
        %3370 = vmatpush1.bf16.xpose.msra.mxu0 0
        %3371 = vmatprep.subr.bf16.mxu0 0
        %3372 = vmatpush1.bf16.xpose.msra.mxu0 0
        %3373 = vmatprep.subr.bf16.mxu0 0
        %3374 = vmatpush1.bf16.xpose.msra.mxu0 0
        %3375 = vmatprep.subr.bf16.mxu0 0
        %3376 = vmatpush1.bf16.xpose.msra.mxu0 0
        %3377 = vmatprep.subr.bf16.mxu0 0
        %3378 = vmatpush1.bf16.xpose.msra.mxu0 0
        %3379 = vmatprep.subr.bf16.mxu0 0
        %3380 = vmatpush1.bf16.xpose.msra.mxu0 0
        %3381 = vmatprep.subr.bf16.mxu0 0
        %3382 = vmatpush1.bf16.xpose.msra.mxu0 0
        %3383 = vmatprep.subr.bf16.mxu0 0
        %3384 = vmatpush1.bf16.xpose.msra.mxu0 0
        %3385 = vmatprep.subr.bf16.mxu0 0
        %3386 = vmatpush1.bf16.xpose.msra.mxu0 0
        %3387 = vmatprep.subr.bf16.mxu0 0
        %3388 = vmatpush1.bf16.xpose.msra.mxu0 0
        %3389 = vmatprep.mubr.bf16.mxu0 0
        %3390 = vmatmul.mubr.bf16.gmra.mrb[0].mxu0 %v3334
        %v3391 = vpop.f32.mrb[0].mxu0
        %v3392 = vadd.f32 %v2711, %v3391
        %v3393 = vpop.f32.mrb[0].mxu0
        %v3394 = vpop.f32.mrb[0].mxu0
        %v3395 = vadd.f32 %v2711, %v3394
        %v3396 = vpop.f32.mrb[0].mxu0
        %3397 = vmatprep.mubr.bf16.mxu0 0
        %3398 = vmatmul.mubr.bf16.gmra.mrb[0].mxu0 %v3337
        %v3399 = vpop.f32.mrb[0].mxu0
        %v3400 = vadd.f32 %v2711, %v3399
        %v3401 = vpop.f32.mrb[0].mxu0
        %v3402 = vpop.f32.mrb[0].mxu0
        %v3403 = vadd.f32 %v2711, %v3402
        %v3404 = vpop.f32.mrb[0].mxu0
        %3405 = vmatprep.mubr.bf16.mxu0 0
        %3406 = vmatmul.mubr.bf16.gmra.mrb[0].mxu0 %v3340
        %v3407 = vpop.f32.mrb[0].mxu0
        %v3408 = vadd.f32 %v2711, %v3407
        %v3409 = vpop.f32.mrb[0].mxu0
        %v3410 = vpop.f32.mrb[0].mxu0
        %v3411 = vadd.f32 %v2711, %v3410
        %v3412 = vpop.f32.mrb[0].mxu0
        %3413 = vmatprep.mubr.bf16.mxu0 0
        %3414 = vmatmul.mubr.bf16.gmra.mrb[0].mxu0 %v3343
        %v3415 = vpop.f32.mrb[0].mxu0
        %v3416 = vadd.f32 %v2711, %v3415
        %v3417 = vpop.f32.mrb[0].mxu0
        %v3418 = vpop.f32.mrb[0].mxu0
        %v3419 = vadd.f32 %v2711, %v3418
        %v3420 = vpop.f32.mrb[0].mxu0
        %3421 = vdwg.mxu0
        %v3422 = vsel %vm1536, %v3392, -inf
        %3423 = vmax.xlane.f32.xlu0 %v3422
        %v3424 = vpop.xlane.xlu0 %3423
        %v3425 = vsel %vm1536, %v3395, -inf
        %3426 = vmax.xlane.f32.xlu0 %v3425
        %v3427 = vpop.xlane.xlu0 %3426
        %v3428 = vsel %vm1536, %v3400, -inf
        %3429 = vmax.xlane.f32.xlu0 %v3428
        %v3430 = vpop.xlane.xlu0 %3429
        %v3431 = vsel %vm1536, %v3403, -inf
        %3432 = vmax.xlane.f32.xlu0 %v3431
        %v3433 = vpop.xlane.xlu0 %3432
        %v3434 = vsel %vm1536, %v3408, -inf
        %3435 = vmax.xlane.f32.xlu0 %v3434
        %v3436 = vpop.xlane.xlu0 %3435
        %v3437 = vsel %vm1536, %v3411, -inf
        %3438 = vmax.xlane.f32.xlu0 %v3437
        %v3439 = vpop.xlane.xlu0 %3438
        %v3440 = vsel %vm1536, %v3416, -inf
        %3441 = vmax.xlane.f32.xlu0 %v3440
        %v3442 = vpop.xlane.xlu0 %3441
        %v3443 = vsel %vm1536, %v3419, -inf
        %3444 = vmax.xlane.f32.xlu0 %v3443
        %v3445 = vpop.xlane.xlu0 %3444
        %v3446 = vsub.f32 %v3392, %v3424
        %v3447 = vsub.f32 %v3395, %v3427
        %v3448 = vsub.f32 %v3400, %v3430
        %v3449 = vsub.f32 %v3403, %v3433
        %v3450 = vsub.f32 %v3408, %v3436
        %v3451 = vsub.f32 %v3411, %v3439
        %v3452 = vsub.f32 %v3416, %v3442
        %v3453 = vsub.f32 %v3419, %v3445
        %v3454 = vmul.f32 %v3446, 1.442695
        %v3455 = vpow.pop %v3454
        %v3456 = vmul.f32 %v3447, 1.442695
        %v3457 = vpow.pop %v3456
        %v3458 = vmul.f32 %v3448, 1.442695
        %v3459 = vpow.pop %v3458
        %v3460 = vmul.f32 %v3449, 1.442695
        %v3461 = vpow.pop %v3460
        %v3462 = vmul.f32 %v3450, 1.442695
        %v3463 = vpow.pop %v3462
        %v3464 = vmul.f32 %v3451, 1.442695
        %v3465 = vpow.pop %v3464
        %v3466 = vmul.f32 %v3452, 1.442695
        %v3467 = vpow.pop %v3466
        %v3468 = vmul.f32 %v3453, 1.442695
        %v3469 = vpow.pop %v3468
        %v3470 = vsel %vm1536, %v3455, 0.0
        %3471 = vadd.xlane.f32.xlu0 %v3470
        %v3472 = vpop.xlane.xlu0 %3471
        %v3473 = vsel %vm1536, %v3457, 0.0
        %3474 = vadd.xlane.f32.xlu0 %v3473
        %v3475 = vpop.xlane.xlu0 %3474
        %v3476 = vsel %vm1536, %v3459, 0.0
        %3477 = vadd.xlane.f32.xlu0 %v3476
        %v3478 = vpop.xlane.xlu0 %3477
        %v3479 = vsel %vm1536, %v3461, 0.0
        %3480 = vadd.xlane.f32.xlu0 %v3479
        %v3481 = vpop.xlane.xlu0 %3480
        %v3482 = vsel %vm1536, %v3463, 0.0
        %3483 = vadd.xlane.f32.xlu0 %v3482
        %v3484 = vpop.xlane.xlu0 %3483
        %v3485 = vsel %vm1536, %v3465, 0.0
        %3486 = vadd.xlane.f32.xlu0 %v3485
        %v3487 = vpop.xlane.xlu0 %3486
        %v3488 = vsel %vm1536, %v3467, 0.0
        %3489 = vadd.xlane.f32.xlu0 %v3488
        %v3490 = vpop.xlane.xlu0 %3489
        %v3491 = vsel %vm1536, %v3469, 0.0
        %3492 = vadd.xlane.f32.xlu0 %v3491
        %v3493 = vpop.xlane.xlu0 %3492
        %v3494 = vrcp.pop %v3472
        %v3495 = vrcp.pop %v3475
        %v3496 = vrcp.pop %v3478
        %v3497 = vrcp.pop %v3481
        %v3498 = vrcp.pop %v3484
        %v3499 = vrcp.pop %v3487
        %v3500 = vrcp.pop %v3490
        %v3501 = vrcp.pop %v3493
        %v3502 = vmul.f32 %v3455, %v3494
        %v3503 = vmul.f32 %v3457, %v3495
        %v3504 = vmul.f32 %v3459, %v3496
        %v3505 = vmul.f32 %v3461, %v3497
        %v3506 = vmul.f32 %v3463, %v3498
        %v3507 = vmul.f32 %v3465, %v3499
        %v3508 = vmul.f32 %v3467, %v3500
        %v3509 = vmul.f32 %v3469, %v3501
        %v3510 = vpack.c.bf16 %v3503, %v3502
        %v3511 = vpack.c.bf16 %v3505, %v3504
        %v3512 = vpack.c.bf16 %v3507, %v3506
        %v3513 = vpack.c.bf16 %v3509, %v3508
        %3514 = vrot.lane.b32.xlu0 %v1430, 64
        %v3515 = vpop.permute.xlu0 %3514
        %3516 = vrot.lane.b32.xlu0 %v1433, 64
        %v3517 = vpop.permute.xlu0 %3516
        %3518 = vrot.lane.b32.xlu0 %v1436, 64
        %v3519 = vpop.permute.xlu0 %3518
        %3520 = vrot.lane.b32.xlu0 %v1439, 64
        %v3521 = vpop.permute.xlu0 %3520
        %v3527 = vsel %vm1536, %v3510, 0
        %v3530 = vsel %vm1536, %v3511, 0
        %v3533 = vsel %vm1536, %v3512, 0
        %v3536 = vsel %vm1536, %v3513, 0
        %3538 = vmatprep.subr.bf16.mxu0 0
        %3539 = vmatpush1.bf16.msra.mxu0 %v3515
        %3540 = vmatprep.subr.bf16.mxu0 0
        %3541 = vmatpush1.bf16.msra.mxu0 %v3517
        %3542 = vmatprep.subr.bf16.mxu0 0
        %3543 = vmatpush1.bf16.msra.mxu0 %v3519
        %3544 = vmatprep.subr.bf16.mxu0 0
        %3545 = vmatpush1.bf16.msra.mxu0 %v3521
        %3546 = vmatprep.subr.bf16.mxu0 0
        %3547 = vmatpush1.bf16.msra.mxu0 0
        %3548 = vmatprep.subr.bf16.mxu0 0
        %3549 = vmatpush1.bf16.msra.mxu0 0
        %3550 = vmatprep.subr.bf16.mxu0 0
        %3551 = vmatpush1.bf16.msra.mxu0 0
        %3552 = vmatprep.subr.bf16.mxu0 0
        %3553 = vmatpush1.bf16.msra.mxu0 0
        %3554 = vmatprep.subr.bf16.mxu0 0
        %3555 = vmatpush1.bf16.msra.mxu0 0
        %3556 = vmatprep.subr.bf16.mxu0 0
        %3557 = vmatpush1.bf16.msra.mxu0 0
        %3558 = vmatprep.subr.bf16.mxu0 0
        %3559 = vmatpush1.bf16.msra.mxu0 0
        %3560 = vmatprep.subr.bf16.mxu0 0
        %3561 = vmatpush1.bf16.msra.mxu0 0
        %3562 = vmatprep.subr.bf16.mxu0 0
        %3563 = vmatpush1.bf16.msra.mxu0 0
        %3564 = vmatprep.subr.bf16.mxu0 0
        %3565 = vmatpush1.bf16.msra.mxu0 0
        %3566 = vmatprep.subr.bf16.mxu0 0
        %3567 = vmatpush1.bf16.msra.mxu0 0
        %3568 = vmatprep.subr.bf16.mxu0 0
        %3569 = vmatpush1.bf16.msra.mxu0 0
        %3570 = vmatprep.mubr.bf16.mxu0 0
        %3571 = vmatmul.mubr.bf16.gmra.mrb[0].mxu0 %v3527
        %v3572 = vpop.f32.mrb[0].mxu0
        %v3573 = vadd.f32 0.0, %v3572
        %v3574 = vpop.f32.mrb[0].mxu0
        %v3575 = vpop.f32.mrb[0].mxu0
        %v3576 = vadd.f32 0.0, %v3575
        %v3577 = vpop.f32.mrb[0].mxu0
        %3578 = vmatprep.mubr.bf16.mxu0 0
        %3579 = vmatmul.mubr.bf16.gmra.mrb[0].mxu0 %v3530
        %v3580 = vpop.f32.mrb[0].mxu0
        %v3581 = vadd.f32 0.0, %v3580
        %v3582 = vpop.f32.mrb[0].mxu0
        %v3583 = vpop.f32.mrb[0].mxu0
        %v3584 = vadd.f32 0.0, %v3583
        %v3585 = vpop.f32.mrb[0].mxu0
        %3586 = vmatprep.mubr.bf16.mxu0 0
        %3587 = vmatmul.mubr.bf16.gmra.mrb[0].mxu0 %v3533
        %v3588 = vpop.f32.mrb[0].mxu0
        %v3589 = vadd.f32 0.0, %v3588
        %v3590 = vpop.f32.mrb[0].mxu0
        %v3591 = vpop.f32.mrb[0].mxu0
        %v3592 = vadd.f32 0.0, %v3591
        %v3593 = vpop.f32.mrb[0].mxu0
        %3594 = vmatprep.mubr.bf16.mxu0 0
        %3595 = vmatmul.mubr.bf16.gmra.mrb[0].mxu0 %v3536
        %v3596 = vpop.f32.mrb[0].mxu0
        %v3597 = vadd.f32 0.0, %v3596
        %v3598 = vpop.f32.mrb[0].mxu0
        %v3599 = vpop.f32.mrb[0].mxu0
        %v3600 = vadd.f32 0.0, %v3599
        %v3601 = vpop.f32.mrb[0].mxu0
        %3602 = vdwg.mxu0
        %3611 = vrot.lane.b32.xlu0 %v3573, 64
        %v3612 = vpop.permute.xlu0 %3611
        %3613 = vrot.lane.b32.xlu0 %v3576, 64
        %v3614 = vpop.permute.xlu0 %3613
        %3615 = vrot.lane.b32.xlu0 %v3581, 64
        %v3616 = vpop.permute.xlu0 %3615
        %3617 = vrot.lane.b32.xlu0 %v3584, 64
        %v3618 = vpop.permute.xlu0 %3617
        %3619 = vrot.lane.b32.xlu0 %v3589, 64
        %v3620 = vpop.permute.xlu0 %3619
        %3621 = vrot.lane.b32.xlu0 %v3592, 64
        %v3622 = vpop.permute.xlu0 %3621
        %3623 = vrot.lane.b32.xlu0 %v3597, 64
        %v3624 = vpop.permute.xlu0 %3623
        %3625 = vrot.lane.b32.xlu0 %v3600, 64
        %v3626 = vpop.permute.xlu0 %3625
        %3635 = vst.msk [vmem:[#allocation2 + $0x40] sm:$0xff] %vm2371, %v3612
        %3636 = vst.msk [vmem:[#allocation2 + $0x48] sm:$0xff] %vm2371, %v3614
        %3637 = vst.msk [vmem:[#allocation2 + $0x50] sm:$0xff] %vm2371, %v3616
        %3638 = vst.msk [vmem:[#allocation2 + $0x58] sm:$0xff] %vm2371, %v3618
        %3639 = vst.msk [vmem:[#allocation2 + $0x60] sm:$0xff] %vm2371, %v3620
        %3640 = vst.msk [vmem:[#allocation2 + $0x68] sm:$0xff] %vm2371, %v3622
        %3641 = vst.msk [vmem:[#allocation2 + $0x70] sm:$0xff] %vm2371, %v3624
        %3642 = vst.msk [vmem:[#allocation2 + $0x78] sm:$0xff] %vm2371, %v3626
        %3643 = vrot.lane.b32.xlu0 %v1428, 32
        %v3644 = vpop.permute.xlu0 %3643
        %3645 = vrot.lane.b32.xlu0 %v1431, 32
        %v3646 = vpop.permute.xlu0 %3645
        %3647 = vrot.lane.b32.xlu0 %v1434, 32
        %v3648 = vpop.permute.xlu0 %3647
        %3649 = vrot.lane.b32.xlu0 %v1437, 32
        %v3650 = vpop.permute.xlu0 %3649
        %3651 = vrot.lane.b32.xlu0 %v1429, 32
        %v3652 = vpop.permute.xlu0 %3651
        %3653 = vrot.lane.b32.xlu0 %v1432, 32
        %v3654 = vpop.permute.xlu0 %3653
        %3655 = vrot.lane.b32.xlu0 %v1435, 32
        %v3656 = vpop.permute.xlu0 %3655
        %3657 = vrot.lane.b32.xlu0 %v1438, 32
        %v3658 = vpop.permute.xlu0 %3657
        %v3660 = vsel %vm1446, %v3644, 0
        %v3663 = vsel %vm1446, %v3646, 0
        %v3666 = vsel %vm1446, %v3648, 0
        %v3669 = vsel %vm1446, %v3650, 0
        %v3672 = vsel %vm1446, %v3652, 0
        %v3675 = vsel %vm1446, %v3654, 0
        %v3678 = vsel %vm1446, %v3656, 0
        %v3681 = vsel %vm1446, %v3658, 0
        %3683 = vmatprep.subr.bf16.mxu0 0
        %3684 = vmatpush1.bf16.xpose.msra.mxu0 %v3672
        %3685 = vmatprep.subr.bf16.mxu0 0
        %3686 = vmatpush1.bf16.xpose.msra.mxu0 %v3675
        %3687 = vmatprep.subr.bf16.mxu0 0
        %3688 = vmatpush1.bf16.xpose.msra.mxu0 %v3678
        %3689 = vmatprep.subr.bf16.mxu0 0
        %3690 = vmatpush1.bf16.xpose.msra.mxu0 %v3681
        %3691 = vmatprep.subr.bf16.mxu0 0
        %3692 = vmatpush1.bf16.xpose.msra.mxu0 0
        %3693 = vmatprep.subr.bf16.mxu0 0
        %3694 = vmatpush1.bf16.xpose.msra.mxu0 0
        %3695 = vmatprep.subr.bf16.mxu0 0
        %3696 = vmatpush1.bf16.xpose.msra.mxu0 0
        %3697 = vmatprep.subr.bf16.mxu0 0
        %3698 = vmatpush1.bf16.xpose.msra.mxu0 0
        %3699 = vmatprep.subr.bf16.mxu0 0
        %3700 = vmatpush1.bf16.xpose.msra.mxu0 0
        %3701 = vmatprep.subr.bf16.mxu0 0
        %3702 = vmatpush1.bf16.xpose.msra.mxu0 0
        %3703 = vmatprep.subr.bf16.mxu0 0
        %3704 = vmatpush1.bf16.xpose.msra.mxu0 0
        %3705 = vmatprep.subr.bf16.mxu0 0
        %3706 = vmatpush1.bf16.xpose.msra.mxu0 0
        %3707 = vmatprep.subr.bf16.mxu0 0
        %3708 = vmatpush1.bf16.xpose.msra.mxu0 0
        %3709 = vmatprep.subr.bf16.mxu0 0
        %3710 = vmatpush1.bf16.xpose.msra.mxu0 0
        %3711 = vmatprep.subr.bf16.mxu0 0
        %3712 = vmatpush1.bf16.xpose.msra.mxu0 0
        %3713 = vmatprep.subr.bf16.mxu0 0
        %3714 = vmatpush1.bf16.xpose.msra.mxu0 0
        %3715 = vmatprep.mubr.bf16.mxu0 0
        %3716 = vmatmul.mubr.bf16.gmra.mrb[0].mxu0 %v3660
        %v3717 = vpop.f32.mrb[0].mxu0
        %v3718 = vadd.f32 %v2711, %v3717
        %v3719 = vpop.f32.mrb[0].mxu0
        %v3720 = vpop.f32.mrb[0].mxu0
        %v3721 = vadd.f32 %v2711, %v3720
        %v3722 = vpop.f32.mrb[0].mxu0
        %3723 = vmatprep.mubr.bf16.mxu0 0
        %3724 = vmatmul.mubr.bf16.gmra.mrb[0].mxu0 %v3663
        %v3725 = vpop.f32.mrb[0].mxu0
        %v3726 = vadd.f32 %v2711, %v3725
        %v3727 = vpop.f32.mrb[0].mxu0
        %v3728 = vpop.f32.mrb[0].mxu0
        %v3729 = vadd.f32 %v2711, %v3728
        %v3730 = vpop.f32.mrb[0].mxu0
        %3731 = vmatprep.mubr.bf16.mxu0 0
        %3732 = vmatmul.mubr.bf16.gmra.mrb[0].mxu0 %v3666
        %v3733 = vpop.f32.mrb[0].mxu0
        %v3734 = vadd.f32 %v2711, %v3733
        %v3735 = vpop.f32.mrb[0].mxu0
        %v3736 = vpop.f32.mrb[0].mxu0
        %v3737 = vadd.f32 %v2711, %v3736
        %v3738 = vpop.f32.mrb[0].mxu0
        %3739 = vmatprep.mubr.bf16.mxu0 0
        %3740 = vmatmul.mubr.bf16.gmra.mrb[0].mxu0 %v3669
        %v3741 = vpop.f32.mrb[0].mxu0
        %v3742 = vadd.f32 %v2711, %v3741
        %v3743 = vpop.f32.mrb[0].mxu0
        %v3744 = vpop.f32.mrb[0].mxu0
        %v3745 = vadd.f32 %v2711, %v3744
        %v3746 = vpop.f32.mrb[0].mxu0
        %3747 = vdwg.mxu0
        %v3748 = vsel %vm1536, %v3718, -inf
        %3749 = vmax.xlane.f32.xlu0 %v3748
        %v3750 = vpop.xlane.xlu0 %3749
        %v3751 = vsel %vm1536, %v3721, -inf
        %3752 = vmax.xlane.f32.xlu0 %v3751
        %v3753 = vpop.xlane.xlu0 %3752
        %v3754 = vsel %vm1536, %v3726, -inf
        %3755 = vmax.xlane.f32.xlu0 %v3754
        %v3756 = vpop.xlane.xlu0 %3755
        %v3757 = vsel %vm1536, %v3729, -inf
        %3758 = vmax.xlane.f32.xlu0 %v3757
        %v3759 = vpop.xlane.xlu0 %3758
        %v3760 = vsel %vm1536, %v3734, -inf
        %3761 = vmax.xlane.f32.xlu0 %v3760
        %v3762 = vpop.xlane.xlu0 %3761
        %v3763 = vsel %vm1536, %v3737, -inf
        %3764 = vmax.xlane.f32.xlu0 %v3763
        %v3765 = vpop.xlane.xlu0 %3764
        %v3766 = vsel %vm1536, %v3742, -inf
        %3767 = vmax.xlane.f32.xlu0 %v3766
        %v3768 = vpop.xlane.xlu0 %3767
        %v3769 = vsel %vm1536, %v3745, -inf
        %3770 = vmax.xlane.f32.xlu0 %v3769
        %v3771 = vpop.xlane.xlu0 %3770
        %v3772 = vsub.f32 %v3718, %v3750
        %v3773 = vsub.f32 %v3721, %v3753
        %v3774 = vsub.f32 %v3726, %v3756
        %v3775 = vsub.f32 %v3729, %v3759
        %v3776 = vsub.f32 %v3734, %v3762
        %v3777 = vsub.f32 %v3737, %v3765
        %v3778 = vsub.f32 %v3742, %v3768
        %v3779 = vsub.f32 %v3745, %v3771
        %v3780 = vmul.f32 %v3772, 1.442695
        %v3781 = vpow.pop %v3780
        %v3782 = vmul.f32 %v3773, 1.442695
        %v3783 = vpow.pop %v3782
        %v3784 = vmul.f32 %v3774, 1.442695
        %v3785 = vpow.pop %v3784
        %v3786 = vmul.f32 %v3775, 1.442695
        %v3787 = vpow.pop %v3786
        %v3788 = vmul.f32 %v3776, 1.442695
        %v3789 = vpow.pop %v3788
        %v3790 = vmul.f32 %v3777, 1.442695
        %v3791 = vpow.pop %v3790
        %v3792 = vmul.f32 %v3778, 1.442695
        %v3793 = vpow.pop %v3792
        %v3794 = vmul.f32 %v3779, 1.442695
        %v3795 = vpow.pop %v3794
        %v3796 = vsel %vm1536, %v3781, 0.0
        %3797 = vadd.xlane.f32.xlu0 %v3796
        %v3798 = vpop.xlane.xlu0 %3797
        %v3799 = vsel %vm1536, %v3783, 0.0
        %3800 = vadd.xlane.f32.xlu0 %v3799
        %v3801 = vpop.xlane.xlu0 %3800
        %v3802 = vsel %vm1536, %v3785, 0.0
        %3803 = vadd.xlane.f32.xlu0 %v3802
        %v3804 = vpop.xlane.xlu0 %3803
        %v3805 = vsel %vm1536, %v3787, 0.0
        %3806 = vadd.xlane.f32.xlu0 %v3805
        %v3807 = vpop.xlane.xlu0 %3806
        %v3808 = vsel %vm1536, %v3789, 0.0
        %3809 = vadd.xlane.f32.xlu0 %v3808
        %v3810 = vpop.xlane.xlu0 %3809
        %v3811 = vsel %vm1536, %v3791, 0.0
        %3812 = vadd.xlane.f32.xlu0 %v3811
        %v3813 = vpop.xlane.xlu0 %3812
        %v3814 = vsel %vm1536, %v3793, 0.0
        %3815 = vadd.xlane.f32.xlu0 %v3814
        %v3816 = vpop.xlane.xlu0 %3815
        %v3817 = vsel %vm1536, %v3795, 0.0
        %3818 = vadd.xlane.f32.xlu0 %v3817
        %v3819 = vpop.xlane.xlu0 %3818
        %v3820 = vrcp.pop %v3798
        %v3821 = vrcp.pop %v3801
        %v3822 = vrcp.pop %v3804
        %v3823 = vrcp.pop %v3807
        %v3824 = vrcp.pop %v3810
        %v3825 = vrcp.pop %v3813
        %v3826 = vrcp.pop %v3816
        %v3827 = vrcp.pop %v3819
        %v3828 = vmul.f32 %v3781, %v3820
        %v3829 = vmul.f32 %v3783, %v3821
        %v3830 = vmul.f32 %v3785, %v3822
        %v3831 = vmul.f32 %v3787, %v3823
        %v3832 = vmul.f32 %v3789, %v3824
        %v3833 = vmul.f32 %v3791, %v3825
        %v3834 = vmul.f32 %v3793, %v3826
        %v3835 = vmul.f32 %v3795, %v3827
        %v3836 = vpack.c.bf16 %v3829, %v3828
        %v3837 = vpack.c.bf16 %v3831, %v3830
        %v3838 = vpack.c.bf16 %v3833, %v3832
        %v3839 = vpack.c.bf16 %v3835, %v3834
        %3840 = vrot.lane.b32.xlu0 %v1430, 32
        %v3841 = vpop.permute.xlu0 %3840
        %3842 = vrot.lane.b32.xlu0 %v1433, 32
        %v3843 = vpop.permute.xlu0 %3842
        %3844 = vrot.lane.b32.xlu0 %v1436, 32
        %v3845 = vpop.permute.xlu0 %3844
        %3846 = vrot.lane.b32.xlu0 %v1439, 32
        %v3847 = vpop.permute.xlu0 %3846
        %v3853 = vsel %vm1536, %v3836, 0
        %v3856 = vsel %vm1536, %v3837, 0
        %v3859 = vsel %vm1536, %v3838, 0
        %v3862 = vsel %vm1536, %v3839, 0
        %3864 = vmatprep.subr.bf16.mxu0 0
        %3865 = vmatpush1.bf16.msra.mxu0 %v3841
        %3866 = vmatprep.subr.bf16.mxu0 0
        %3867 = vmatpush1.bf16.msra.mxu0 %v3843
        %3868 = vmatprep.subr.bf16.mxu0 0
        %3869 = vmatpush1.bf16.msra.mxu0 %v3845
        %3870 = vmatprep.subr.bf16.mxu0 0
        %3871 = vmatpush1.bf16.msra.mxu0 %v3847
        %3872 = vmatprep.subr.bf16.mxu0 0
        %3873 = vmatpush1.bf16.msra.mxu0 0
        %3874 = vmatprep.subr.bf16.mxu0 0
        %3875 = vmatpush1.bf16.msra.mxu0 0
        %3876 = vmatprep.subr.bf16.mxu0 0
        %3877 = vmatpush1.bf16.msra.mxu0 0
        %3878 = vmatprep.subr.bf16.mxu0 0
        %3879 = vmatpush1.bf16.msra.mxu0 0
        %3880 = vmatprep.subr.bf16.mxu0 0
        %3881 = vmatpush1.bf16.msra.mxu0 0
        %3882 = vmatprep.subr.bf16.mxu0 0
        %3883 = vmatpush1.bf16.msra.mxu0 0
        %3884 = vmatprep.subr.bf16.mxu0 0
        %3885 = vmatpush1.bf16.msra.mxu0 0
        %3886 = vmatprep.subr.bf16.mxu0 0
        %3887 = vmatpush1.bf16.msra.mxu0 0
        %3888 = vmatprep.subr.bf16.mxu0 0
        %3889 = vmatpush1.bf16.msra.mxu0 0
        %3890 = vmatprep.subr.bf16.mxu0 0
        %3891 = vmatpush1.bf16.msra.mxu0 0
        %3892 = vmatprep.subr.bf16.mxu0 0
        %3893 = vmatpush1.bf16.msra.mxu0 0
        %3894 = vmatprep.subr.bf16.mxu0 0
        %3895 = vmatpush1.bf16.msra.mxu0 0
        %3896 = vmatprep.mubr.bf16.mxu0 0
        %3897 = vmatmul.mubr.bf16.gmra.mrb[0].mxu0 %v3853
        %v3898 = vpop.f32.mrb[0].mxu0
        %v3899 = vadd.f32 0.0, %v3898
        %v3900 = vpop.f32.mrb[0].mxu0
        %v3901 = vpop.f32.mrb[0].mxu0
        %v3902 = vadd.f32 0.0, %v3901
        %v3903 = vpop.f32.mrb[0].mxu0
        %3904 = vmatprep.mubr.bf16.mxu0 0
        %3905 = vmatmul.mubr.bf16.gmra.mrb[0].mxu0 %v3856
        %v3906 = vpop.f32.mrb[0].mxu0
        %v3907 = vadd.f32 0.0, %v3906
        %v3908 = vpop.f32.mrb[0].mxu0
        %v3909 = vpop.f32.mrb[0].mxu0
        %v3910 = vadd.f32 0.0, %v3909
        %v3911 = vpop.f32.mrb[0].mxu0
        %3912 = vmatprep.mubr.bf16.mxu0 0
        %3913 = vmatmul.mubr.bf16.gmra.mrb[0].mxu0 %v3859
        %v3914 = vpop.f32.mrb[0].mxu0
        %v3915 = vadd.f32 0.0, %v3914
        %v3916 = vpop.f32.mrb[0].mxu0
        %v3917 = vpop.f32.mrb[0].mxu0
        %v3918 = vadd.f32 0.0, %v3917
        %v3919 = vpop.f32.mrb[0].mxu0
        %3920 = vmatprep.mubr.bf16.mxu0 0
        %3921 = vmatmul.mubr.bf16.gmra.mrb[0].mxu0 %v3862
        %v3922 = vpop.f32.mrb[0].mxu0
        %v3923 = vadd.f32 0.0, %v3922
        %v3924 = vpop.f32.mrb[0].mxu0
        %v3925 = vpop.f32.mrb[0].mxu0
        %v3926 = vadd.f32 0.0, %v3925
        %v3927 = vpop.f32.mrb[0].mxu0
        %3928 = vdwg.mxu0
        %3937 = vrot.lane.b32.xlu0 %v3899, 96
        %v3938 = vpop.permute.xlu0 %3937
        %3939 = vrot.lane.b32.xlu0 %v3902, 96
        %v3940 = vpop.permute.xlu0 %3939
        %3941 = vrot.lane.b32.xlu0 %v3907, 96
        %v3942 = vpop.permute.xlu0 %3941
        %3943 = vrot.lane.b32.xlu0 %v3910, 96
        %v3944 = vpop.permute.xlu0 %3943
        %3945 = vrot.lane.b32.xlu0 %v3915, 96
        %v3946 = vpop.permute.xlu0 %3945
        %3947 = vrot.lane.b32.xlu0 %v3918, 96
        %v3948 = vpop.permute.xlu0 %3947
        %3949 = vrot.lane.b32.xlu0 %v3923, 96
        %v3950 = vpop.permute.xlu0 %3949
        %3951 = vrot.lane.b32.xlu0 %v3926, 96
        %v3952 = vpop.permute.xlu0 %3951
        %3961 = vst.msk [vmem:[#allocation2 + $0x40] sm:$0xff] %vm2698, %v3938
        %3962 = vst.msk [vmem:[#allocation2 + $0x48] sm:$0xff] %vm2698, %v3940
        %3963 = vst.msk [vmem:[#allocation2 + $0x50] sm:$0xff] %vm2698, %v3942
        %3964 = vst.msk [vmem:[#allocation2 + $0x58] sm:$0xff] %vm2698, %v3944
        %3965 = vst.msk [vmem:[#allocation2 + $0x60] sm:$0xff] %vm2698, %v3946
        %3966 = vst.msk [vmem:[#allocation2 + $0x68] sm:$0xff] %vm2698, %v3948
        %3967 = vst.msk [vmem:[#allocation2 + $0x70] sm:$0xff] %vm2698, %v3950
        %3968 = vst.msk [vmem:[#allocation2 + $0x78] sm:$0xff] %vm2698, %v3952
        %v3969 = vld [vmem:[#allocation2] sm:$0xff]
        %v3970 = vld [vmem:[#allocation2 + $0x8] sm:$0xff]
        %v3971 = vld [vmem:[#allocation2 + $0x10] sm:$0xff]
        %v3972 = vld [vmem:[#allocation2 + $0x18] sm:$0xff]
        %v3973 = vld [vmem:[#allocation2 + $0x20] sm:$0xff]
        %v3974 = vld [vmem:[#allocation2 + $0x28] sm:$0xff]
        %v3975 = vld [vmem:[#allocation2 + $0x30] sm:$0xff]
        %v3976 = vld [vmem:[#allocation2 + $0x38] sm:$0xff]
        %v3977 = vld [vmem:[#allocation2 + $0x40] sm:$0xff]
        %v3978 = vld [vmem:[#allocation2 + $0x48] sm:$0xff]
        %v3979 = vld [vmem:[#allocation2 + $0x50] sm:$0xff]
        %v3980 = vld [vmem:[#allocation2 + $0x58] sm:$0xff]
        %v3981 = vld [vmem:[#allocation2 + $0x60] sm:$0xff]
        %v3982 = vld [vmem:[#allocation2 + $0x68] sm:$0xff]
        %v3983 = vld [vmem:[#allocation2 + $0x70] sm:$0xff]
        %v3984 = vld [vmem:[#allocation2 + $0x78] sm:$0xff]
        %3986 = vset.pattern.permute.xlu0 0
        %3987 = vperm.xlu0 %3986, %v654
        %v3988 = vpop.permute.xlu0 %3987
        %3991 = vset.pattern.permute.xlu0 0
        %3992 = vperm.xlu0 %3991, %v655
        %v3993 = vpop.permute.xlu0 %3992
        %3996 = vset.pattern.permute.xlu0 0
        %3997 = vperm.xlu0 %3996, %v656
        %v3998 = vpop.permute.xlu0 %3997
        %4001 = vset.pattern.permute.xlu0 0
        %4002 = vperm.xlu0 %4001, %v657
        %v4003 = vpop.permute.xlu0 %4002
        %4006 = vset.pattern.permute.xlu0 0
        %4007 = vperm.xlu0 %4006, %v658
        %v4008 = vpop.permute.xlu0 %4007
        %4011 = vset.pattern.permute.xlu0 0
        %4012 = vperm.xlu0 %4011, %v659
        %v4013 = vpop.permute.xlu0 %4012
        %4016 = vset.pattern.permute.xlu0 0
        %4017 = vperm.xlu0 %4016, %v660
        %v4018 = vpop.permute.xlu0 %4017
        %4021 = vset.pattern.permute.xlu0 0
        %4022 = vperm.xlu0 %4021, %v661
        %v4023 = vpop.permute.xlu0 %4022
        %4026 = vset.pattern.permute.xlu0 0
        %4027 = vperm.xlu0 %4026, %v662
        %v4028 = vpop.permute.xlu0 %4027
        %4031 = vset.pattern.permute.xlu0 0
        %4032 = vperm.xlu0 %4031, %v663
        %v4033 = vpop.permute.xlu0 %4032
        %4036 = vset.pattern.permute.xlu0 0
        %4037 = vperm.xlu0 %4036, %v664
        %v4038 = vpop.permute.xlu0 %4037
        %4041 = vset.pattern.permute.xlu0 0
        %4042 = vperm.xlu0 %4041, %v665
        %v4043 = vpop.permute.xlu0 %4042
        %4046 = vset.pattern.permute.xlu0 0
        %4047 = vperm.xlu0 %4046, %v666
        %v4048 = vpop.permute.xlu0 %4047
        %4051 = vset.pattern.permute.xlu0 0
        %4052 = vperm.xlu0 %4051, %v667
        %v4053 = vpop.permute.xlu0 %4052
        %4056 = vset.pattern.permute.xlu0 0
        %4057 = vperm.xlu0 %4056, %v668
        %v4058 = vpop.permute.xlu0 %4057
        %4061 = vset.pattern.permute.xlu0 0
        %4062 = vperm.xlu0 %4061, %v669
        %v4063 = vpop.permute.xlu0 %4062
        %v4065 = vmul.f32 %v3969, %v3988
        %v4066 = vmul.f32 %v3970, %v3993
        %v4067 = vmul.f32 %v3971, %v3998
        %v4068 = vmul.f32 %v3972, %v4003
        %v4069 = vmul.f32 %v3973, %v4008
        %v4070 = vmul.f32 %v3974, %v4013
        %v4071 = vmul.f32 %v3975, %v4018
        %v4072 = vmul.f32 %v3976, %v4023
        %v4073 = vmul.f32 %v3977, %v4028
        %v4074 = vmul.f32 %v3978, %v4033
        %v4075 = vmul.f32 %v3979, %v4038
        %v4076 = vmul.f32 %v3980, %v4043
        %v4077 = vmul.f32 %v3981, %v4048
        %v4078 = vmul.f32 %v3982, %v4053
        %v4079 = vmul.f32 %v3983, %v4058
        %v4080 = vmul.f32 %v3984, %v4063
        %v4081 = vpack.c.bf16 %v4066, %v4065
        %v4082 = vpack.c.bf16 %v4068, %v4067
        %v4083 = vpack.c.bf16 %v4070, %v4069
        %v4084 = vpack.c.bf16 %v4072, %v4071
        %v4085 = vpack.c.bf16 %v4074, %v4073
        %v4086 = vpack.c.bf16 %v4076, %v4075
        %v4087 = vpack.c.bf16 %v4078, %v4077
        %v4088 = vpack.c.bf16 %v4080, %v4079
        %v4089 = vld [vmem:[#allocation6] sm:$0xf]
        %v4090 = vld [vmem:[#allocation6 + $0x4] sm:$0xf]
        %v4091 = vld [vmem:[#allocation6 + $0x8] sm:$0xf]
        %v4092 = vld [vmem:[#allocation6 + $0xc] sm:$0xf]
        %v4093 = vld [vmem:[#allocation6 + $0x10] sm:$0xf]
        %v4094 = vld [vmem:[#allocation6 + $0x14] sm:$0xf]
        %v4095 = vld [vmem:[#allocation6 + $0x18] sm:$0xf]
        %v4096 = vld [vmem:[#allocation6 + $0x1c] sm:$0xf]
        %v4097 = vld [vmem:[#allocation6 + $0x20] sm:$0xf]
        %v4098 = vld [vmem:[#allocation6 + $0x24] sm:$0xf]
        %v4099 = vld [vmem:[#allocation6 + $0x28] sm:$0xf]
        %v4100 = vld [vmem:[#allocation6 + $0x2c] sm:$0xf]
        %v4101 = vld [vmem:[#allocation6 + $0x30] sm:$0xf]
        %v4102 = vld [vmem:[#allocation6 + $0x34] sm:$0xf]
        %v4103 = vld [vmem:[#allocation6 + $0x38] sm:$0xf]
        %v4104 = vld [vmem:[#allocation6 + $0x3c] sm:$0xf]
        %v4105 = vld [vmem:[%s8] sm:$0x1]
        %v4107 = vlaneseq
        %v4108 = vshrl.u32 %v4107, 7
        %v4109 = vsub.s32 0, %v4108
        %v4110 = vrot.slane %v4105, %v4109
        %v4128 = vunpack.c.l.b16 %v4089
        %v4129 = vunpack.c.l.b16 %v4090
        %v4130 = vunpack.c.l.b16 %v4091
        %v4131 = vunpack.c.l.b16 %v4092
        %v4132 = vunpack.c.l.b16 %v4093
        %v4133 = vunpack.c.l.b16 %v4094
        %v4134 = vunpack.c.l.b16 %v4095
        %v4135 = vunpack.c.l.b16 %v4096
        %v4136 = vunpack.c.l.b16 %v4097
        %v4137 = vunpack.c.l.b16 %v4098
        %v4138 = vunpack.c.l.b16 %v4099
        %v4139 = vunpack.c.l.b16 %v4100
        %v4140 = vunpack.c.l.b16 %v4101
        %v4141 = vunpack.c.l.b16 %v4102
        %v4142 = vunpack.c.l.b16 %v4103
        %v4143 = vunpack.c.l.b16 %v4104
        %v4144 = vpack.c.b16 %v4129, %v4128
        %v4145 = vpack.c.b16 %v4131, %v4130
        %v4146 = vpack.c.b16 %v4133, %v4132
        %v4147 = vpack.c.b16 %v4135, %v4134
        %v4148 = vpack.c.b16 %v4137, %v4136
        %v4149 = vpack.c.b16 %v4139, %v4138
        %v4150 = vpack.c.b16 %v4141, %v4140
        %v4151 = vpack.c.b16 %v4143, %v4142
        %4160 = vmatprep.subr.bf16.mxu0 0
        %4161 = vmatpush1.bf16.msra.mxu0 %v4144
        %4162 = vmatprep.subr.bf16.mxu0 0
        %4163 = vmatpush1.bf16.msra.mxu0 %v4145
        %4164 = vmatprep.subr.bf16.mxu0 0
        %4165 = vmatpush1.bf16.msra.mxu0 %v4146
        %4166 = vmatprep.subr.bf16.mxu0 0
        %4167 = vmatpush1.bf16.msra.mxu0 %v4147
        %4168 = vmatprep.subr.bf16.mxu0 0
        %4169 = vmatpush1.bf16.msra.mxu0 %v4148
        %4170 = vmatprep.subr.bf16.mxu0 0
        %4171 = vmatpush1.bf16.msra.mxu0 %v4149
        %4172 = vmatprep.subr.bf16.mxu0 0
        %4173 = vmatpush1.bf16.msra.mxu0 %v4150
        %4174 = vmatprep.subr.bf16.mxu0 0
        %4175 = vmatpush1.bf16.msra.mxu0 %v4151
        %4176 = vmatprep.subr.bf16.mxu0 0
        %4177 = vmatpush1.bf16.msra.mxu0 0
        %4178 = vmatprep.subr.bf16.mxu0 0
        %4179 = vmatpush1.bf16.msra.mxu0 0
        %4180 = vmatprep.subr.bf16.mxu0 0
        %4181 = vmatpush1.bf16.msra.mxu0 0
        %4182 = vmatprep.subr.bf16.mxu0 0
        %4183 = vmatpush1.bf16.msra.mxu0 0
        %4184 = vmatprep.subr.bf16.mxu0 0
        %4185 = vmatpush1.bf16.msra.mxu0 0
        %4186 = vmatprep.subr.bf16.mxu0 0
        %4187 = vmatpush1.bf16.msra.mxu0 0
        %4188 = vmatprep.subr.bf16.mxu0 0
        %4189 = vmatpush1.bf16.msra.mxu0 0
        %4190 = vmatprep.subr.bf16.mxu0 0
        %4191 = vmatpush1.bf16.msra.mxu0 0
        %4192 = vmatprep.mubr.bf16.mxu0 0
        %4193 = vmatmul.mubr.bf16.gmra.mrb[0].mxu0 %v4081
        %v4194 = vpop.f32.mrb[0].mxu0
        %v4195 = vadd.f32 %v4110, %v4194
        %v4196 = vpop.f32.mrb[0].mxu0
        %v4197 = vpop.f32.mrb[0].mxu0
        %v4198 = vadd.f32 %v4110, %v4197
        %v4199 = vpop.f32.mrb[0].mxu0
        %4200 = vmatprep.mubr.bf16.mxu0 0
        %4201 = vmatmul.mubr.bf16.gmra.mrb[0].mxu0 %v4082
        %v4202 = vpop.f32.mrb[0].mxu0
        %v4203 = vadd.f32 %v4110, %v4202
        %v4204 = vpop.f32.mrb[0].mxu0
        %v4205 = vpop.f32.mrb[0].mxu0
        %v4206 = vadd.f32 %v4110, %v4205
        %v4207 = vpop.f32.mrb[0].mxu0
        %4208 = vmatprep.mubr.bf16.mxu0 0
        %4209 = vmatmul.mubr.bf16.gmra.mrb[0].mxu0 %v4083
        %v4210 = vpop.f32.mrb[0].mxu0
        %v4211 = vadd.f32 %v4110, %v4210
        %v4212 = vpop.f32.mrb[0].mxu0
        %v4213 = vpop.f32.mrb[0].mxu0
        %v4214 = vadd.f32 %v4110, %v4213
        %v4215 = vpop.f32.mrb[0].mxu0
        %4216 = vmatprep.mubr.bf16.mxu0 0
        %4217 = vmatmul.mubr.bf16.gmra.mrb[0].mxu0 %v4084
        %v4218 = vpop.f32.mrb[0].mxu0
        %v4219 = vadd.f32 %v4110, %v4218
        %v4220 = vpop.f32.mrb[0].mxu0
        %v4221 = vpop.f32.mrb[0].mxu0
        %v4222 = vadd.f32 %v4110, %v4221
        %v4223 = vpop.f32.mrb[0].mxu0
        %4224 = vmatprep.mubr.bf16.mxu0 0
        %4225 = vmatmul.mubr.bf16.gmra.mrb[0].mxu0 %v4085
        %v4226 = vpop.f32.mrb[0].mxu0
        %v4227 = vadd.f32 %v4110, %v4226
        %v4228 = vpop.f32.mrb[0].mxu0
        %v4229 = vpop.f32.mrb[0].mxu0
        %v4230 = vadd.f32 %v4110, %v4229
        %v4231 = vpop.f32.mrb[0].mxu0
        %4232 = vmatprep.mubr.bf16.mxu0 0
        %4233 = vmatmul.mubr.bf16.gmra.mrb[0].mxu0 %v4086
        %v4234 = vpop.f32.mrb[0].mxu0
        %v4235 = vadd.f32 %v4110, %v4234
        %v4236 = vpop.f32.mrb[0].mxu0
        %v4237 = vpop.f32.mrb[0].mxu0
        %v4238 = vadd.f32 %v4110, %v4237
        %v4239 = vpop.f32.mrb[0].mxu0
        %4240 = vmatprep.mubr.bf16.mxu0 0
        %4241 = vmatmul.mubr.bf16.gmra.mrb[0].mxu0 %v4087
        %v4242 = vpop.f32.mrb[0].mxu0
        %v4243 = vadd.f32 %v4110, %v4242
        %v4244 = vpop.f32.mrb[0].mxu0
        %v4245 = vpop.f32.mrb[0].mxu0
        %v4246 = vadd.f32 %v4110, %v4245
        %v4247 = vpop.f32.mrb[0].mxu0
        %4248 = vmatprep.mubr.bf16.mxu0 0
        %4249 = vmatmul.mubr.bf16.gmra.mrb[0].mxu0 %v4088
        %v4250 = vpop.f32.mrb[0].mxu0
        %v4251 = vadd.f32 %v4110, %v4250
        %v4252 = vpop.f32.mrb[0].mxu0
        %v4253 = vpop.f32.mrb[0].mxu0
        %v4254 = vadd.f32 %v4110, %v4253
        %v4255 = vpop.f32.mrb[0].mxu0
        %4256 = vdwg.mxu0
        %v4257 = vld [vmem:[%s585] sm:$0xff]
        %v4258 = vld [vmem:[%s585 + $0x8] sm:$0xff]
        %v4259 = vld [vmem:[%s585 + $0x10] sm:$0xff]
        %v4260 = vld [vmem:[%s585 + $0x18] sm:$0xff]
        %v4261 = vld [vmem:[%s585 + $0x20] sm:$0xff]
        %v4262 = vld [vmem:[%s585 + $0x28] sm:$0xff]
        %v4263 = vld [vmem:[%s585 + $0x30] sm:$0xff]
        %v4264 = vld [vmem:[%s585 + $0x38] sm:$0xff]
        %v4265 = vld [vmem:[%s585 + $0x40] sm:$0xff]
        %v4266 = vld [vmem:[%s585 + $0x48] sm:$0xff]
        %v4267 = vld [vmem:[%s585 + $0x50] sm:$0xff]
        %v4268 = vld [vmem:[%s585 + $0x58] sm:$0xff]
        %v4269 = vld [vmem:[%s585 + $0x60] sm:$0xff]
        %v4270 = vld [vmem:[%s585 + $0x68] sm:$0xff]
        %v4271 = vld [vmem:[%s585 + $0x70] sm:$0xff]
        %v4272 = vld [vmem:[%s585 + $0x78] sm:$0xff]
        %v4273 = vadd.f32 %v4257, %v4195
        %v4274 = vadd.f32 %v4258, %v4198
        %v4275 = vadd.f32 %v4259, %v4203
        %v4276 = vadd.f32 %v4260, %v4206
        %v4277 = vadd.f32 %v4261, %v4211
        %v4278 = vadd.f32 %v4262, %v4214
        %v4279 = vadd.f32 %v4263, %v4219
        %v4280 = vadd.f32 %v4264, %v4222
        %v4281 = vadd.f32 %v4265, %v4227
        %v4282 = vadd.f32 %v4266, %v4230
        %v4283 = vadd.f32 %v4267, %v4235
        %v4284 = vadd.f32 %v4268, %v4238
        %v4285 = vadd.f32 %v4269, %v4243
        %v4286 = vadd.f32 %v4270, %v4246
        %v4287 = vadd.f32 %v4271, %v4251
        %v4288 = vadd.f32 %v4272, %v4254
        %v4289 = vld [vmem:[%s9] sm:$0x1]
        %v4290 = vld [vmem:[%s10] sm:$0x1]
        %4291 = vadd.xlane.f32.xlu0 %v4273
        %v4292 = vpop.xlane.xlu0 %4291
        %4293 = vadd.xlane.f32.xlu0 %v4274
        %v4294 = vpop.xlane.xlu0 %4293
        %4295 = vadd.xlane.f32.xlu0 %v4275
        %v4296 = vpop.xlane.xlu0 %4295
        %4297 = vadd.xlane.f32.xlu0 %v4276
        %v4298 = vpop.xlane.xlu0 %4297
        %4299 = vadd.xlane.f32.xlu0 %v4277
        %v4300 = vpop.xlane.xlu0 %4299
        %4301 = vadd.xlane.f32.xlu0 %v4278
        %v4302 = vpop.xlane.xlu0 %4301
        %4303 = vadd.xlane.f32.xlu0 %v4279
        %v4304 = vpop.xlane.xlu0 %4303
        %4305 = vadd.xlane.f32.xlu0 %v4280
        %v4306 = vpop.xlane.xlu0 %4305
        %4307 = vadd.xlane.f32.xlu0 %v4281
        %v4308 = vpop.xlane.xlu0 %4307
        %4309 = vadd.xlane.f32.xlu0 %v4282
        %v4310 = vpop.xlane.xlu0 %4309
        %4311 = vadd.xlane.f32.xlu0 %v4283
        %v4312 = vpop.xlane.xlu0 %4311
        %4313 = vadd.xlane.f32.xlu0 %v4284
        %v4314 = vpop.xlane.xlu0 %4313
        %4315 = vadd.xlane.f32.xlu0 %v4285
        %v4316 = vpop.xlane.xlu0 %4315
        %4317 = vadd.xlane.f32.xlu0 %v4286
        %v4318 = vpop.xlane.xlu0 %4317
        %4319 = vadd.xlane.f32.xlu0 %v4287
        %v4320 = vpop.xlane.xlu0 %4319
        %4321 = vadd.xlane.f32.xlu0 %v4288
        %v4322 = vpop.xlane.xlu0 %4321
        %v4323 = vmul.f32 %v4292, %v720
        %v4324 = vmul.f32 %v4294, %v720
        %v4325 = vmul.f32 %v4296, %v720
        %v4326 = vmul.f32 %v4298, %v720
        %v4327 = vmul.f32 %v4300, %v720
        %v4328 = vmul.f32 %v4302, %v720
        %v4329 = vmul.f32 %v4304, %v720
        %v4330 = vmul.f32 %v4306, %v720
        %v4331 = vmul.f32 %v4308, %v720
        %v4332 = vmul.f32 %v4310, %v720
        %v4333 = vmul.f32 %v4312, %v720
        %v4334 = vmul.f32 %v4314, %v720
        %v4335 = vmul.f32 %v4316, %v720
        %v4336 = vmul.f32 %v4318, %v720
        %v4337 = vmul.f32 %v4320, %v720
        %v4338 = vmul.f32 %v4322, %v720
        %v4339 = vsub.f32 %v4273, %v4323
        %v4340 = vsub.f32 %v4274, %v4324
        %v4341 = vsub.f32 %v4275, %v4325
        %v4342 = vsub.f32 %v4276, %v4326
        %v4343 = vsub.f32 %v4277, %v4327
        %v4344 = vsub.f32 %v4278, %v4328
        %v4345 = vsub.f32 %v4279, %v4329
        %v4346 = vsub.f32 %v4280, %v4330
        %v4347 = vsub.f32 %v4281, %v4331
        %v4348 = vsub.f32 %v4282, %v4332
        %v4349 = vsub.f32 %v4283, %v4333
        %v4350 = vsub.f32 %v4284, %v4334
        %v4351 = vsub.f32 %v4285, %v4335
        %v4352 = vsub.f32 %v4286, %v4336
        %v4353 = vsub.f32 %v4287, %v4337
        %v4354 = vsub.f32 %v4288, %v4338
        %v4355 = vmul.f32 %v4339, %v4339
        %v4356 = vmul.f32 %v4340, %v4340
        %v4357 = vmul.f32 %v4341, %v4341
        %v4358 = vmul.f32 %v4342, %v4342
        %v4359 = vmul.f32 %v4343, %v4343
        %v4360 = vmul.f32 %v4344, %v4344
        %v4361 = vmul.f32 %v4345, %v4345
        %v4362 = vmul.f32 %v4346, %v4346
        %v4363 = vmul.f32 %v4347, %v4347
        %v4364 = vmul.f32 %v4348, %v4348
        %v4365 = vmul.f32 %v4349, %v4349
        %v4366 = vmul.f32 %v4350, %v4350
        %v4367 = vmul.f32 %v4351, %v4351
        %v4368 = vmul.f32 %v4352, %v4352
        %v4369 = vmul.f32 %v4353, %v4353
        %v4370 = vmul.f32 %v4354, %v4354
        %4371 = vadd.xlane.f32.xlu0 %v4355
        %v4372 = vpop.xlane.xlu0 %4371
        %4373 = vadd.xlane.f32.xlu0 %v4356
        %v4374 = vpop.xlane.xlu0 %4373
        %4375 = vadd.xlane.f32.xlu0 %v4357
        %v4376 = vpop.xlane.xlu0 %4375
        %4377 = vadd.xlane.f32.xlu0 %v4358
        %v4378 = vpop.xlane.xlu0 %4377
        %4379 = vadd.xlane.f32.xlu0 %v4359
        %v4380 = vpop.xlane.xlu0 %4379
        %4381 = vadd.xlane.f32.xlu0 %v4360
        %v4382 = vpop.xlane.xlu0 %4381
        %4383 = vadd.xlane.f32.xlu0 %v4361
        %v4384 = vpop.xlane.xlu0 %4383
        %4385 = vadd.xlane.f32.xlu0 %v4362
        %v4386 = vpop.xlane.xlu0 %4385
        %4387 = vadd.xlane.f32.xlu0 %v4363
        %v4388 = vpop.xlane.xlu0 %4387
        %4389 = vadd.xlane.f32.xlu0 %v4364
        %v4390 = vpop.xlane.xlu0 %4389
        %4391 = vadd.xlane.f32.xlu0 %v4365
        %v4392 = vpop.xlane.xlu0 %4391
        %4393 = vadd.xlane.f32.xlu0 %v4366
        %v4394 = vpop.xlane.xlu0 %4393
        %4395 = vadd.xlane.f32.xlu0 %v4367
        %v4396 = vpop.xlane.xlu0 %4395
        %4397 = vadd.xlane.f32.xlu0 %v4368
        %v4398 = vpop.xlane.xlu0 %4397
        %4399 = vadd.xlane.f32.xlu0 %v4369
        %v4400 = vpop.xlane.xlu0 %4399
        %4401 = vadd.xlane.f32.xlu0 %v4370
        %v4402 = vpop.xlane.xlu0 %4401
        %v4403 = vmul.f32 %v4372, %v720
        %v4404 = vmul.f32 %v4374, %v720
        %v4405 = vmul.f32 %v4376, %v720
        %v4406 = vmul.f32 %v4378, %v720
        %v4407 = vmul.f32 %v4380, %v720
        %v4408 = vmul.f32 %v4382, %v720
        %v4409 = vmul.f32 %v4384, %v720
        %v4410 = vmul.f32 %v4386, %v720
        %v4411 = vmul.f32 %v4388, %v720
        %v4412 = vmul.f32 %v4390, %v720
        %v4413 = vmul.f32 %v4392, %v720
        %v4414 = vmul.f32 %v4394, %v720
        %v4415 = vmul.f32 %v4396, %v720
        %v4416 = vmul.f32 %v4398, %v720
        %v4417 = vmul.f32 %v4400, %v720
        %v4418 = vmul.f32 %v4402, %v720
        %v4419 = vadd.f32 %v4403, 1e-05
        %v4420 = vadd.f32 %v4404, 1e-05
        %v4421 = vadd.f32 %v4405, 1e-05
        %v4422 = vadd.f32 %v4406, 1e-05
        %v4423 = vadd.f32 %v4407, 1e-05
        %v4424 = vadd.f32 %v4408, 1e-05
        %v4425 = vadd.f32 %v4409, 1e-05
        %v4426 = vadd.f32 %v4410, 1e-05
        %v4427 = vadd.f32 %v4411, 1e-05
        %v4428 = vadd.f32 %v4412, 1e-05
        %v4429 = vadd.f32 %v4413, 1e-05
        %v4430 = vadd.f32 %v4414, 1e-05
        %v4431 = vadd.f32 %v4415, 1e-05
        %v4432 = vadd.f32 %v4416, 1e-05
        %v4433 = vadd.f32 %v4417, 1e-05
        %v4434 = vadd.f32 %v4418, 1e-05
        %v4435 = vrsqrt.pop %v4419
        %v4436 = vmul.f32 %v4419, %v4435
        %vm4437 = vcmp.eq.f32.partialorder %v4419, inf
        %v4438 = vsel %vm4437, %v4419, %v4436
        %vm4439 = vcmp.eq.f32.partialorder %v4419, 0.0
        %v4440 = vand.u32 %v4419, 2147483648
        %v4441 = vsel %vm4439, %v4440, %v4438
        %v4442 = vrsqrt.pop %v4420
        %v4443 = vmul.f32 %v4420, %v4442
        %vm4444 = vcmp.eq.f32.partialorder %v4420, inf
        %v4445 = vsel %vm4444, %v4420, %v4443
        %vm4446 = vcmp.eq.f32.partialorder %v4420, 0.0
        %v4447 = vand.u32 %v4420, 2147483648
        %v4448 = vsel %vm4446, %v4447, %v4445
        %v4449 = vrsqrt.pop %v4421
        %v4450 = vmul.f32 %v4421, %v4449
        %vm4451 = vcmp.eq.f32.partialorder %v4421, inf
        %v4452 = vsel %vm4451, %v4421, %v4450
        %vm4453 = vcmp.eq.f32.partialorder %v4421, 0.0
        %v4454 = vand.u32 %v4421, 2147483648
        %v4455 = vsel %vm4453, %v4454, %v4452
        %v4456 = vrsqrt.pop %v4422
        %v4457 = vmul.f32 %v4422, %v4456
        %vm4458 = vcmp.eq.f32.partialorder %v4422, inf
        %v4459 = vsel %vm4458, %v4422, %v4457
        %vm4460 = vcmp.eq.f32.partialorder %v4422, 0.0
        %v4461 = vand.u32 %v4422, 2147483648
        %v4462 = vsel %vm4460, %v4461, %v4459
        %v4463 = vrsqrt.pop %v4423
        %v4464 = vmul.f32 %v4423, %v4463
        %vm4465 = vcmp.eq.f32.partialorder %v4423, inf
        %v4466 = vsel %vm4465, %v4423, %v4464
        %vm4467 = vcmp.eq.f32.partialorder %v4423, 0.0
        %v4468 = vand.u32 %v4423, 2147483648
        %v4469 = vsel %vm4467, %v4468, %v4466
        %v4470 = vrsqrt.pop %v4424
        %v4471 = vmul.f32 %v4424, %v4470
        %vm4472 = vcmp.eq.f32.partialorder %v4424, inf
        %v4473 = vsel %vm4472, %v4424, %v4471
        %vm4474 = vcmp.eq.f32.partialorder %v4424, 0.0
        %v4475 = vand.u32 %v4424, 2147483648
        %v4476 = vsel %vm4474, %v4475, %v4473
        %v4477 = vrsqrt.pop %v4425
        %v4478 = vmul.f32 %v4425, %v4477
        %vm4479 = vcmp.eq.f32.partialorder %v4425, inf
        %v4480 = vsel %vm4479, %v4425, %v4478
        %vm4481 = vcmp.eq.f32.partialorder %v4425, 0.0
        %v4482 = vand.u32 %v4425, 2147483648
        %v4483 = vsel %vm4481, %v4482, %v4480
        %v4484 = vrsqrt.pop %v4426
        %v4485 = vmul.f32 %v4426, %v4484
        %vm4486 = vcmp.eq.f32.partialorder %v4426, inf
        %v4487 = vsel %vm4486, %v4426, %v4485
        %vm4488 = vcmp.eq.f32.partialorder %v4426, 0.0
        %v4489 = vand.u32 %v4426, 2147483648
        %v4490 = vsel %vm4488, %v4489, %v4487
        %v4491 = vrsqrt.pop %v4427
        %v4492 = vmul.f32 %v4427, %v4491
        %vm4493 = vcmp.eq.f32.partialorder %v4427, inf
        %v4494 = vsel %vm4493, %v4427, %v4492
        %vm4495 = vcmp.eq.f32.partialorder %v4427, 0.0
        %v4496 = vand.u32 %v4427, 2147483648
        %v4497 = vsel %vm4495, %v4496, %v4494
        %v4498 = vrsqrt.pop %v4428
        %v4499 = vmul.f32 %v4428, %v4498
        %vm4500 = vcmp.eq.f32.partialorder %v4428, inf
        %v4501 = vsel %vm4500, %v4428, %v4499
        %vm4502 = vcmp.eq.f32.partialorder %v4428, 0.0
        %v4503 = vand.u32 %v4428, 2147483648
        %v4504 = vsel %vm4502, %v4503, %v4501
        %v4505 = vrsqrt.pop %v4429
        %v4506 = vmul.f32 %v4429, %v4505
        %vm4507 = vcmp.eq.f32.partialorder %v4429, inf
        %v4508 = vsel %vm4507, %v4429, %v4506
        %vm4509 = vcmp.eq.f32.partialorder %v4429, 0.0
        %v4510 = vand.u32 %v4429, 2147483648
        %v4511 = vsel %vm4509, %v4510, %v4508
        %v4512 = vrsqrt.pop %v4430
        %v4513 = vmul.f32 %v4430, %v4512
        %vm4514 = vcmp.eq.f32.partialorder %v4430, inf
        %v4515 = vsel %vm4514, %v4430, %v4513
        %vm4516 = vcmp.eq.f32.partialorder %v4430, 0.0
        %v4517 = vand.u32 %v4430, 2147483648
        %v4518 = vsel %vm4516, %v4517, %v4515
        %v4519 = vrsqrt.pop %v4431
        %v4520 = vmul.f32 %v4431, %v4519
        %vm4521 = vcmp.eq.f32.partialorder %v4431, inf
        %v4522 = vsel %vm4521, %v4431, %v4520
        %vm4523 = vcmp.eq.f32.partialorder %v4431, 0.0
        %v4524 = vand.u32 %v4431, 2147483648
        %v4525 = vsel %vm4523, %v4524, %v4522
        %v4526 = vrsqrt.pop %v4432
        %v4527 = vmul.f32 %v4432, %v4526
        %vm4528 = vcmp.eq.f32.partialorder %v4432, inf
        %v4529 = vsel %vm4528, %v4432, %v4527
        %vm4530 = vcmp.eq.f32.partialorder %v4432, 0.0
        %v4531 = vand.u32 %v4432, 2147483648
        %v4532 = vsel %vm4530, %v4531, %v4529
        %v4533 = vrsqrt.pop %v4433
        %v4534 = vmul.f32 %v4433, %v4533
        %vm4535 = vcmp.eq.f32.partialorder %v4433, inf
        %v4536 = vsel %vm4535, %v4433, %v4534
        %vm4537 = vcmp.eq.f32.partialorder %v4433, 0.0
        %v4538 = vand.u32 %v4433, 2147483648
        %v4539 = vsel %vm4537, %v4538, %v4536
        %v4540 = vrsqrt.pop %v4434
        %v4541 = vmul.f32 %v4434, %v4540
        %vm4542 = vcmp.eq.f32.partialorder %v4434, inf
        %v4543 = vsel %vm4542, %v4434, %v4541
        %vm4544 = vcmp.eq.f32.partialorder %v4434, 0.0
        %v4545 = vand.u32 %v4434, 2147483648
        %v4546 = vsel %vm4544, %v4545, %v4543
        %v4547 = vrcp.pop %v4441
        %v4548 = vmul.f32 %v4339, %v4547
        %v4549 = vrcp.pop %v4448
        %v4550 = vmul.f32 %v4340, %v4549
        %v4551 = vrcp.pop %v4455
        %v4552 = vmul.f32 %v4341, %v4551
        %v4553 = vrcp.pop %v4462
        %v4554 = vmul.f32 %v4342, %v4553
        %v4555 = vrcp.pop %v4469
        %v4556 = vmul.f32 %v4343, %v4555
        %v4557 = vrcp.pop %v4476
        %v4558 = vmul.f32 %v4344, %v4557
        %v4559 = vrcp.pop %v4483
        %v4560 = vmul.f32 %v4345, %v4559
        %v4561 = vrcp.pop %v4490
        %v4562 = vmul.f32 %v4346, %v4561
        %v4563 = vrcp.pop %v4497
        %v4564 = vmul.f32 %v4347, %v4563
        %v4565 = vrcp.pop %v4504
        %v4566 = vmul.f32 %v4348, %v4565
        %v4567 = vrcp.pop %v4511
        %v4568 = vmul.f32 %v4349, %v4567
        %v4569 = vrcp.pop %v4518
        %v4570 = vmul.f32 %v4350, %v4569
        %v4571 = vrcp.pop %v4525
        %v4572 = vmul.f32 %v4351, %v4571
        %v4573 = vrcp.pop %v4532
        %v4574 = vmul.f32 %v4352, %v4573
        %v4575 = vrcp.pop %v4539
        %v4576 = vmul.f32 %v4353, %v4575
        %v4577 = vrcp.pop %v4546
        %v4578 = vmul.f32 %v4354, %v4577
        %v4580 = vlaneseq
        %v4581 = vshrl.u32 %v4580, 7
        %v4582 = vsub.s32 0, %v4581
        %v4583 = vrot.slane %v4289, %v4582
        %v4585 = vmul.f32 %v4548, %v4583
        %v4586 = vmul.f32 %v4550, %v4583
        %v4587 = vmul.f32 %v4552, %v4583
        %v4588 = vmul.f32 %v4554, %v4583
        %v4589 = vmul.f32 %v4556, %v4583
        %v4590 = vmul.f32 %v4558, %v4583
        %v4591 = vmul.f32 %v4560, %v4583
        %v4592 = vmul.f32 %v4562, %v4583
        %v4593 = vmul.f32 %v4564, %v4583
        %v4594 = vmul.f32 %v4566, %v4583
        %v4595 = vmul.f32 %v4568, %v4583
        %v4596 = vmul.f32 %v4570, %v4583
        %v4597 = vmul.f32 %v4572, %v4583
        %v4598 = vmul.f32 %v4574, %v4583
        %v4599 = vmul.f32 %v4576, %v4583
        %v4600 = vmul.f32 %v4578, %v4583
        %v4602 = vlaneseq
        %v4603 = vshrl.u32 %v4602, 7
        %v4604 = vsub.s32 0, %v4603
        %v4605 = vrot.slane %v4290, %v4604
        %v4607 = vadd.f32 %v4585, %v4605
        %v4608 = vadd.f32 %v4586, %v4605
        %v4609 = vadd.f32 %v4587, %v4605
        %v4610 = vadd.f32 %v4588, %v4605
        %v4611 = vadd.f32 %v4589, %v4605
        %v4612 = vadd.f32 %v4590, %v4605
        %v4613 = vadd.f32 %v4591, %v4605
        %v4614 = vadd.f32 %v4592, %v4605
        %v4615 = vadd.f32 %v4593, %v4605
        %v4616 = vadd.f32 %v4594, %v4605
        %v4617 = vadd.f32 %v4595, %v4605
        %v4618 = vadd.f32 %v4596, %v4605
        %v4619 = vadd.f32 %v4597, %v4605
        %v4620 = vadd.f32 %v4598, %v4605
        %v4621 = vadd.f32 %v4599, %v4605
        %v4622 = vadd.f32 %v4600, %v4605
        %v4623 = vpack.c.bf16 %v4608, %v4607
        %v4624 = vpack.c.bf16 %v4610, %v4609
        %v4625 = vpack.c.bf16 %v4612, %v4611
        %v4626 = vpack.c.bf16 %v4614, %v4613
        %v4627 = vpack.c.bf16 %v4616, %v4615
        %v4628 = vpack.c.bf16 %v4618, %v4617
        %v4629 = vpack.c.bf16 %v4620, %v4619
        %v4630 = vpack.c.bf16 %v4622, %v4621
        %v4631 = vld [vmem:[#allocation8] sm:$0xff]
        %v4632 = vld [vmem:[#allocation8 + $0x8] sm:$0xff]
        %v4633 = vld [vmem:[#allocation8 + $0x10] sm:$0xff]
        %v4634 = vld [vmem:[#allocation8 + $0x18] sm:$0xff]
        %v4635 = vld [vmem:[#allocation8 + $0x20] sm:$0xff]
        %v4636 = vld [vmem:[#allocation8 + $0x28] sm:$0xff]
        %v4637 = vld [vmem:[#allocation8 + $0x30] sm:$0xff]
        %v4638 = vld [vmem:[#allocation8 + $0x38] sm:$0xff]
        %v4639 = vld [vmem:[#allocation8 + $0x40] sm:$0xff]
        %v4640 = vld [vmem:[#allocation8 + $0x48] sm:$0xff]
        %v4641 = vld [vmem:[#allocation8 + $0x50] sm:$0xff]
        %v4642 = vld [vmem:[#allocation8 + $0x58] sm:$0xff]
        %v4643 = vld [vmem:[#allocation8 + $0x60] sm:$0xff]
        %v4644 = vld [vmem:[#allocation8 + $0x68] sm:$0xff]
        %v4645 = vld [vmem:[#allocation8 + $0x70] sm:$0xff]
        %v4646 = vld [vmem:[#allocation8 + $0x78] sm:$0xff]
        %v4647 = vld [vmem:[%s12] sm:$0x3]
        %v4649 = vlaneseq
        %v4650 = vshrl.u32 %v4649, 7
        %v4651 = vsub.s32 0, %v4650
        %v4652 = vrot.slane %v4647, %v4651
        %v4653 = vlaneseq
        %v4654 = vshrl.u32 %v4653, 7
        %v4655 = vsub.s32 1, %v4654
        %v4656 = vrot.slane %v4647, %v4655
        %v4675 = vunpack.c.l.b16 %v4631
        %v4676 = vunpack.c.h.b16 %v4631
        %v4677 = vunpack.c.l.b16 %v4632
        %v4678 = vunpack.c.h.b16 %v4632
        %v4679 = vunpack.c.l.b16 %v4633
        %v4680 = vunpack.c.h.b16 %v4633
        %v4681 = vunpack.c.l.b16 %v4634
        %v4682 = vunpack.c.h.b16 %v4634
        %v4683 = vunpack.c.l.b16 %v4635
        %v4684 = vunpack.c.h.b16 %v4635
        %v4685 = vunpack.c.l.b16 %v4636
        %v4686 = vunpack.c.h.b16 %v4636
        %v4687 = vunpack.c.l.b16 %v4637
        %v4688 = vunpack.c.h.b16 %v4637
        %v4689 = vunpack.c.l.b16 %v4638
        %v4690 = vunpack.c.h.b16 %v4638
        %v4691 = vunpack.c.l.b16 %v4639
        %v4692 = vunpack.c.h.b16 %v4639
        %v4693 = vunpack.c.l.b16 %v4640
        %v4694 = vunpack.c.h.b16 %v4640
        %v4695 = vunpack.c.l.b16 %v4641
        %v4696 = vunpack.c.h.b16 %v4641
        %v4697 = vunpack.c.l.b16 %v4642
        %v4698 = vunpack.c.h.b16 %v4642
        %v4699 = vunpack.c.l.b16 %v4643
        %v4700 = vunpack.c.h.b16 %v4643
        %v4701 = vunpack.c.l.b16 %v4644
        %v4702 = vunpack.c.h.b16 %v4644
        %v4703 = vunpack.c.l.b16 %v4645
        %v4704 = vunpack.c.h.b16 %v4645
        %v4705 = vunpack.c.l.b16 %v4646
        %v4706 = vunpack.c.h.b16 %v4646
        %v4707 = vpack.c.b16 %v4677, %v4675
        %v4708 = vpack.c.b16 %v4678, %v4676
        %v4709 = vpack.c.b16 %v4681, %v4679
        %v4710 = vpack.c.b16 %v4682, %v4680
        %v4711 = vpack.c.b16 %v4685, %v4683
        %v4712 = vpack.c.b16 %v4686, %v4684
        %v4713 = vpack.c.b16 %v4689, %v4687
        %v4714 = vpack.c.b16 %v4690, %v4688
        %v4715 = vpack.c.b16 %v4693, %v4691
        %v4716 = vpack.c.b16 %v4694, %v4692
        %v4717 = vpack.c.b16 %v4697, %v4695
        %v4718 = vpack.c.b16 %v4698, %v4696
        %v4719 = vpack.c.b16 %v4701, %v4699
        %v4720 = vpack.c.b16 %v4702, %v4700
        %v4721 = vpack.c.b16 %v4705, %v4703
        %v4722 = vpack.c.b16 %v4706, %v4704
        %4739 = vmatprep.subr.bf16.mxu0 %v4708
        %4740 = vmatpush1.bf16.msra.mxu0 %v4707
        %4741 = vmatprep.subr.bf16.mxu0 %v4710
        %4742 = vmatpush1.bf16.msra.mxu0 %v4709
        %4743 = vmatprep.subr.bf16.mxu0 %v4712
        %4744 = vmatpush1.bf16.msra.mxu0 %v4711
        %4745 = vmatprep.subr.bf16.mxu0 %v4714
        %4746 = vmatpush1.bf16.msra.mxu0 %v4713
        %4747 = vmatprep.subr.bf16.mxu0 %v4716
        %4748 = vmatpush1.bf16.msra.mxu0 %v4715
        %4749 = vmatprep.subr.bf16.mxu0 %v4718
        %4750 = vmatpush1.bf16.msra.mxu0 %v4717
        %4751 = vmatprep.subr.bf16.mxu0 %v4720
        %4752 = vmatpush1.bf16.msra.mxu0 %v4719
        %4753 = vmatprep.subr.bf16.mxu0 %v4722
        %4754 = vmatpush1.bf16.msra.mxu0 %v4721
        %4755 = vmatprep.subr.bf16.mxu0 0
        %4756 = vmatpush1.bf16.msra.mxu0 0
        %4757 = vmatprep.subr.bf16.mxu0 0
        %4758 = vmatpush1.bf16.msra.mxu0 0
        %4759 = vmatprep.subr.bf16.mxu0 0
        %4760 = vmatpush1.bf16.msra.mxu0 0
        %4761 = vmatprep.subr.bf16.mxu0 0
        %4762 = vmatpush1.bf16.msra.mxu0 0
        %4763 = vmatprep.subr.bf16.mxu0 0
        %4764 = vmatpush1.bf16.msra.mxu0 0
        %4765 = vmatprep.subr.bf16.mxu0 0
        %4766 = vmatpush1.bf16.msra.mxu0 0
        %4767 = vmatprep.subr.bf16.mxu0 0
        %4768 = vmatpush1.bf16.msra.mxu0 0
        %4769 = vmatprep.subr.bf16.mxu0 0
        %4770 = vmatpush1.bf16.msra.mxu0 0
        %4771 = vmatprep.mubr.bf16.mxu0 0
        %4772 = vmatmul.mubr.bf16.gmra.mrb[0].mxu0 %v4623
        %v4773 = vpop.f32.mrb[0].mxu0
        %v4774 = vadd.f32 %v4652, %v4773
        %v4775 = vpop.f32.mrb[0].mxu0
        %v4776 = vadd.f32 %v4656, %v4775
        %v4777 = vpop.f32.mrb[0].mxu0
        %v4778 = vadd.f32 %v4652, %v4777
        %v4779 = vpop.f32.mrb[0].mxu0
        %v4780 = vadd.f32 %v4656, %v4779
        %4781 = vmatprep.mubr.bf16.mxu0 0
        %4782 = vmatmul.mubr.bf16.gmra.mrb[0].mxu0 %v4624
        %v4783 = vpop.f32.mrb[0].mxu0
        %v4784 = vadd.f32 %v4652, %v4783
        %v4785 = vpop.f32.mrb[0].mxu0
        %v4786 = vadd.f32 %v4656, %v4785
        %v4787 = vpop.f32.mrb[0].mxu0
        %v4788 = vadd.f32 %v4652, %v4787
        %v4789 = vpop.f32.mrb[0].mxu0
        %v4790 = vadd.f32 %v4656, %v4789
        %4791 = vmatprep.mubr.bf16.mxu0 0
        %4792 = vmatmul.mubr.bf16.gmra.mrb[0].mxu0 %v4625
        %v4793 = vpop.f32.mrb[0].mxu0
        %v4794 = vadd.f32 %v4652, %v4793
        %v4795 = vpop.f32.mrb[0].mxu0
        %v4796 = vadd.f32 %v4656, %v4795
        %v4797 = vpop.f32.mrb[0].mxu0
        %v4798 = vadd.f32 %v4652, %v4797
        %v4799 = vpop.f32.mrb[0].mxu0
        %v4800 = vadd.f32 %v4656, %v4799
        %4801 = vmatprep.mubr.bf16.mxu0 0
        %4802 = vmatmul.mubr.bf16.gmra.mrb[0].mxu0 %v4626
        %v4803 = vpop.f32.mrb[0].mxu0
        %v4804 = vadd.f32 %v4652, %v4803
        %v4805 = vpop.f32.mrb[0].mxu0
        %v4806 = vadd.f32 %v4656, %v4805
        %v4807 = vpop.f32.mrb[0].mxu0
        %v4808 = vadd.f32 %v4652, %v4807
        %v4809 = vpop.f32.mrb[0].mxu0
        %v4810 = vadd.f32 %v4656, %v4809
        %4811 = vmatprep.mubr.bf16.mxu0 0
        %4812 = vmatmul.mubr.bf16.gmra.mrb[0].mxu0 %v4627
        %v4813 = vpop.f32.mrb[0].mxu0
        %v4814 = vadd.f32 %v4652, %v4813
        %v4815 = vpop.f32.mrb[0].mxu0
        %v4816 = vadd.f32 %v4656, %v4815
        %v4817 = vpop.f32.mrb[0].mxu0
        %v4818 = vadd.f32 %v4652, %v4817
        %v4819 = vpop.f32.mrb[0].mxu0
        %v4820 = vadd.f32 %v4656, %v4819
        %4821 = vmatprep.mubr.bf16.mxu0 0
        %4822 = vmatmul.mubr.bf16.gmra.mrb[0].mxu0 %v4628
        %v4823 = vpop.f32.mrb[0].mxu0
        %v4824 = vadd.f32 %v4652, %v4823
        %v4825 = vpop.f32.mrb[0].mxu0
        %v4826 = vadd.f32 %v4656, %v4825
        %v4827 = vpop.f32.mrb[0].mxu0
        %v4828 = vadd.f32 %v4652, %v4827
        %v4829 = vpop.f32.mrb[0].mxu0
        %v4830 = vadd.f32 %v4656, %v4829
        %4831 = vmatprep.mubr.bf16.mxu0 0
        %4832 = vmatmul.mubr.bf16.gmra.mrb[0].mxu0 %v4629
        %v4833 = vpop.f32.mrb[0].mxu0
        %v4834 = vadd.f32 %v4652, %v4833
        %v4835 = vpop.f32.mrb[0].mxu0
        %v4836 = vadd.f32 %v4656, %v4835
        %v4837 = vpop.f32.mrb[0].mxu0
        %v4838 = vadd.f32 %v4652, %v4837
        %v4839 = vpop.f32.mrb[0].mxu0
        %v4840 = vadd.f32 %v4656, %v4839
        %4841 = vmatprep.mubr.bf16.mxu0 0
        %4842 = vmatmul.mubr.bf16.gmra.mrb[0].mxu0 %v4630
        %v4843 = vpop.f32.mrb[0].mxu0
        %v4844 = vadd.f32 %v4652, %v4843
        %v4845 = vpop.f32.mrb[0].mxu0
        %v4846 = vadd.f32 %v4656, %v4845
        %v4847 = vpop.f32.mrb[0].mxu0
        %v4848 = vadd.f32 %v4652, %v4847
        %v4849 = vpop.f32.mrb[0].mxu0
        %v4850 = vadd.f32 %v4656, %v4849
        %4851 = vdwg.mxu0
        %v4852 = vmul.f32 %v4774, 0.5
        %v4853 = vmul.f32 %v4776, 0.5
        %v4854 = vmul.f32 %v4778, 0.5
        %v4855 = vmul.f32 %v4780, 0.5
        %v4856 = vmul.f32 %v4784, 0.5
        %v4857 = vmul.f32 %v4786, 0.5
        %v4858 = vmul.f32 %v4788, 0.5
        %v4859 = vmul.f32 %v4790, 0.5
        %v4860 = vmul.f32 %v4794, 0.5
        %v4861 = vmul.f32 %v4796, 0.5
        %v4862 = vmul.f32 %v4798, 0.5
        %v4863 = vmul.f32 %v4800, 0.5
        %v4864 = vmul.f32 %v4804, 0.5
        %v4865 = vmul.f32 %v4806, 0.5
        %v4866 = vmul.f32 %v4808, 0.5
        %v4867 = vmul.f32 %v4810, 0.5
        %v4868 = vmul.f32 %v4814, 0.5
        %v4869 = vmul.f32 %v4816, 0.5
        %v4870 = vmul.f32 %v4818, 0.5
        %v4871 = vmul.f32 %v4820, 0.5
        %v4872 = vmul.f32 %v4824, 0.5
        %v4873 = vmul.f32 %v4826, 0.5
        %v4874 = vmul.f32 %v4828, 0.5
        %v4875 = vmul.f32 %v4830, 0.5
        %v4876 = vmul.f32 %v4834, 0.5
        %v4877 = vmul.f32 %v4836, 0.5
        %v4878 = vmul.f32 %v4838, 0.5
        %v4879 = vmul.f32 %v4840, 0.5
        %v4880 = vmul.f32 %v4844, 0.5
        %v4881 = vmul.f32 %v4846, 0.5
        %v4882 = vmul.f32 %v4848, 0.5
        %v4883 = vmul.f32 %v4850, 0.5
        %v4884 = vmul.f32 %v4774, 0.044715
        %v4885 = vmul.f32 %v4776, 0.044715
        %v4886 = vmul.f32 %v4778, 0.044715
        %v4887 = vmul.f32 %v4780, 0.044715
        %v4888 = vmul.f32 %v4784, 0.044715
        %v4889 = vmul.f32 %v4786, 0.044715
        %v4890 = vmul.f32 %v4788, 0.044715
        %v4891 = vmul.f32 %v4790, 0.044715
        %v4892 = vmul.f32 %v4794, 0.044715
        %v4893 = vmul.f32 %v4796, 0.044715
        %v4894 = vmul.f32 %v4798, 0.044715
        %v4895 = vmul.f32 %v4800, 0.044715
        %v4896 = vmul.f32 %v4804, 0.044715
        %v4897 = vmul.f32 %v4806, 0.044715
        %v4898 = vmul.f32 %v4808, 0.044715
        %v4899 = vmul.f32 %v4810, 0.044715
        %v4900 = vmul.f32 %v4814, 0.044715
        %v4901 = vmul.f32 %v4816, 0.044715
        %v4902 = vmul.f32 %v4818, 0.044715
        %v4903 = vmul.f32 %v4820, 0.044715
        %v4904 = vmul.f32 %v4824, 0.044715
        %v4905 = vmul.f32 %v4826, 0.044715
        %v4906 = vmul.f32 %v4828, 0.044715
        %v4907 = vmul.f32 %v4830, 0.044715
        %v4908 = vmul.f32 %v4834, 0.044715
        %v4909 = vmul.f32 %v4836, 0.044715
        %v4910 = vmul.f32 %v4838, 0.044715
        %v4911 = vmul.f32 %v4840, 0.044715
        %v4912 = vmul.f32 %v4844, 0.044715
        %v4913 = vmul.f32 %v4846, 0.044715
        %v4914 = vmul.f32 %v4848, 0.044715
        %v4915 = vmul.f32 %v4850, 0.044715
        %v4916 = vmul.f32 %v4884, %v4774
        %v4917 = vmul.f32 %v4885, %v4776
        %v4918 = vmul.f32 %v4886, %v4778
        %v4919 = vmul.f32 %v4887, %v4780
        %v4920 = vmul.f32 %v4888, %v4784
        %v4921 = vmul.f32 %v4889, %v4786
        %v4922 = vmul.f32 %v4890, %v4788
        %v4923 = vmul.f32 %v4891, %v4790
        %v4924 = vmul.f32 %v4892, %v4794
        %v4925 = vmul.f32 %v4893, %v4796
        %v4926 = vmul.f32 %v4894, %v4798
        %v4927 = vmul.f32 %v4895, %v4800
        %v4928 = vmul.f32 %v4896, %v4804
        %v4929 = vmul.f32 %v4897, %v4806
        %v4930 = vmul.f32 %v4898, %v4808
        %v4931 = vmul.f32 %v4899, %v4810
        %v4932 = vmul.f32 %v4900, %v4814
        %v4933 = vmul.f32 %v4901, %v4816
        %v4934 = vmul.f32 %v4902, %v4818
        %v4935 = vmul.f32 %v4903, %v4820
        %v4936 = vmul.f32 %v4904, %v4824
        %v4937 = vmul.f32 %v4905, %v4826
        %v4938 = vmul.f32 %v4906, %v4828
        %v4939 = vmul.f32 %v4907, %v4830
        %v4940 = vmul.f32 %v4908, %v4834
        %v4941 = vmul.f32 %v4909, %v4836
        %v4942 = vmul.f32 %v4910, %v4838
        %v4943 = vmul.f32 %v4911, %v4840
        %v4944 = vmul.f32 %v4912, %v4844
        %v4945 = vmul.f32 %v4913, %v4846
        %v4946 = vmul.f32 %v4914, %v4848
        %v4947 = vmul.f32 %v4915, %v4850
        %v4948 = vmul.f32 %v4916, %v4774
        %v4949 = vmul.f32 %v4917, %v4776
        %v4950 = vmul.f32 %v4918, %v4778
        %v4951 = vmul.f32 %v4919, %v4780
        %v4952 = vmul.f32 %v4920, %v4784
        %v4953 = vmul.f32 %v4921, %v4786
        %v4954 = vmul.f32 %v4922, %v4788
        %v4955 = vmul.f32 %v4923, %v4790
        %v4956 = vmul.f32 %v4924, %v4794
        %v4957 = vmul.f32 %v4925, %v4796
        %v4958 = vmul.f32 %v4926, %v4798
        %v4959 = vmul.f32 %v4927, %v4800
        %v4960 = vmul.f32 %v4928, %v4804
        %v4961 = vmul.f32 %v4929, %v4806
        %v4962 = vmul.f32 %v4930, %v4808
        %v4963 = vmul.f32 %v4931, %v4810
        %v4964 = vmul.f32 %v4932, %v4814
        %v4965 = vmul.f32 %v4933, %v4816
        %v4966 = vmul.f32 %v4934, %v4818
        %v4967 = vmul.f32 %v4935, %v4820
        %v4968 = vmul.f32 %v4936, %v4824
        %v4969 = vmul.f32 %v4937, %v4826
        %v4970 = vmul.f32 %v4938, %v4828
        %v4971 = vmul.f32 %v4939, %v4830
        %v4972 = vmul.f32 %v4940, %v4834
        %v4973 = vmul.f32 %v4941, %v4836
        %v4974 = vmul.f32 %v4942, %v4838
        %v4975 = vmul.f32 %v4943, %v4840
        %v4976 = vmul.f32 %v4944, %v4844
        %v4977 = vmul.f32 %v4945, %v4846
        %v4978 = vmul.f32 %v4946, %v4848
        %v4979 = vmul.f32 %v4947, %v4850
        %v4980 = vadd.f32 %v4774, %v4948
        %v4981 = vadd.f32 %v4776, %v4949
        %v4982 = vadd.f32 %v4778, %v4950
        %v4983 = vadd.f32 %v4780, %v4951
        %v4984 = vadd.f32 %v4784, %v4952
        %v4985 = vadd.f32 %v4786, %v4953
        %v4986 = vadd.f32 %v4788, %v4954
        %v4987 = vadd.f32 %v4790, %v4955
        %v4988 = vadd.f32 %v4794, %v4956
        %v4989 = vadd.f32 %v4796, %v4957
        %v4990 = vadd.f32 %v4798, %v4958
        %v4991 = vadd.f32 %v4800, %v4959
        %v4992 = vadd.f32 %v4804, %v4960
        %v4993 = vadd.f32 %v4806, %v4961
        %v4994 = vadd.f32 %v4808, %v4962
        %v4995 = vadd.f32 %v4810, %v4963
        %v4996 = vadd.f32 %v4814, %v4964
        %v4997 = vadd.f32 %v4816, %v4965
        %v4998 = vadd.f32 %v4818, %v4966
        %v4999 = vadd.f32 %v4820, %v4967
        %v5000 = vadd.f32 %v4824, %v4968
        %v5001 = vadd.f32 %v4826, %v4969
        %v5002 = vadd.f32 %v4828, %v4970
        %v5003 = vadd.f32 %v4830, %v4971
        %v5004 = vadd.f32 %v4834, %v4972
        %v5005 = vadd.f32 %v4836, %v4973
        %v5006 = vadd.f32 %v4838, %v4974
        %v5007 = vadd.f32 %v4840, %v4975
        %v5008 = vadd.f32 %v4844, %v4976
        %v5009 = vadd.f32 %v4846, %v4977
        %v5010 = vadd.f32 %v4848, %v4978
        %v5011 = vadd.f32 %v4850, %v4979
        %v5012 = vmul.f32 %v4980, 0.7978846
        %v5013 = vmul.f32 %v4981, 0.7978846
        %v5014 = vmul.f32 %v4982, 0.7978846
        %v5015 = vmul.f32 %v4983, 0.7978846
        %v5016 = vmul.f32 %v4984, 0.7978846
        %v5017 = vmul.f32 %v4985, 0.7978846
        %v5018 = vmul.f32 %v4986, 0.7978846
        %v5019 = vmul.f32 %v4987, 0.7978846
        %v5020 = vmul.f32 %v4988, 0.7978846
        %v5021 = vmul.f32 %v4989, 0.7978846
        %v5022 = vmul.f32 %v4990, 0.7978846
        %v5023 = vmul.f32 %v4991, 0.7978846
        %v5024 = vmul.f32 %v4992, 0.7978846
        %v5025 = vmul.f32 %v4993, 0.7978846
        %v5026 = vmul.f32 %v4994, 0.7978846
        %v5027 = vmul.f32 %v4995, 0.7978846
        %v5028 = vmul.f32 %v4996, 0.7978846
        %v5029 = vmul.f32 %v4997, 0.7978846
        %v5030 = vmul.f32 %v4998, 0.7978846
        %v5031 = vmul.f32 %v4999, 0.7978846
        %v5032 = vmul.f32 %v5000, 0.7978846
        %v5033 = vmul.f32 %v5001, 0.7978846
        %v5034 = vmul.f32 %v5002, 0.7978846
        %v5035 = vmul.f32 %v5003, 0.7978846
        %v5036 = vmul.f32 %v5004, 0.7978846
        %v5037 = vmul.f32 %v5005, 0.7978846
        %v5038 = vmul.f32 %v5006, 0.7978846
        %v5039 = vmul.f32 %v5007, 0.7978846
        %v5040 = vmul.f32 %v5008, 0.7978846
        %v5041 = vmul.f32 %v5009, 0.7978846
        %v5042 = vmul.f32 %v5010, 0.7978846
        %v5043 = vmul.f32 %v5011, 0.7978846
        %v5044 = vtanh.pop %v5012
        %v5045 = vtanh.pop %v5013
        %v5046 = vtanh.pop %v5014
        %v5047 = vtanh.pop %v5015
        %v5048 = vtanh.pop %v5016
        %v5049 = vtanh.pop %v5017
        %v5050 = vtanh.pop %v5018
        %v5051 = vtanh.pop %v5019
        %v5052 = vtanh.pop %v5020
        %v5053 = vtanh.pop %v5021
        %v5054 = vtanh.pop %v5022
        %v5055 = vtanh.pop %v5023
        %v5056 = vtanh.pop %v5024
        %v5057 = vtanh.pop %v5025
        %v5058 = vtanh.pop %v5026
        %v5059 = vtanh.pop %v5027
        %v5060 = vtanh.pop %v5028
        %v5061 = vtanh.pop %v5029
        %v5062 = vtanh.pop %v5030
        %v5063 = vtanh.pop %v5031
        %v5064 = vtanh.pop %v5032
        %v5065 = vtanh.pop %v5033
        %v5066 = vtanh.pop %v5034
        %v5067 = vtanh.pop %v5035
        %v5068 = vtanh.pop %v5036
        %v5069 = vtanh.pop %v5037
        %v5070 = vtanh.pop %v5038
        %v5071 = vtanh.pop %v5039
        %v5072 = vtanh.pop %v5040
        %v5073 = vtanh.pop %v5041
        %v5074 = vtanh.pop %v5042
        %v5075 = vtanh.pop %v5043
        %v5076 = vadd.f32 %v5044, 1.0
        %v5077 = vadd.f32 %v5045, 1.0
        %v5078 = vadd.f32 %v5046, 1.0
        %v5079 = vadd.f32 %v5047, 1.0
        %v5080 = vadd.f32 %v5048, 1.0
        %v5081 = vadd.f32 %v5049, 1.0
        %v5082 = vadd.f32 %v5050, 1.0
        %v5083 = vadd.f32 %v5051, 1.0
        %v5084 = vadd.f32 %v5052, 1.0
        %v5085 = vadd.f32 %v5053, 1.0
        %v5086 = vadd.f32 %v5054, 1.0
        %v5087 = vadd.f32 %v5055, 1.0
        %v5088 = vadd.f32 %v5056, 1.0
        %v5089 = vadd.f32 %v5057, 1.0
        %v5090 = vadd.f32 %v5058, 1.0
        %v5091 = vadd.f32 %v5059, 1.0
        %v5092 = vadd.f32 %v5060, 1.0
        %v5093 = vadd.f32 %v5061, 1.0
        %v5094 = vadd.f32 %v5062, 1.0
        %v5095 = vadd.f32 %v5063, 1.0
        %v5096 = vadd.f32 %v5064, 1.0
        %v5097 = vadd.f32 %v5065, 1.0
        %v5098 = vadd.f32 %v5066, 1.0
        %v5099 = vadd.f32 %v5067, 1.0
        %v5100 = vadd.f32 %v5068, 1.0
        %v5101 = vadd.f32 %v5069, 1.0
        %v5102 = vadd.f32 %v5070, 1.0
        %v5103 = vadd.f32 %v5071, 1.0
        %v5104 = vadd.f32 %v5072, 1.0
        %v5105 = vadd.f32 %v5073, 1.0
        %v5106 = vadd.f32 %v5074, 1.0
        %v5107 = vadd.f32 %v5075, 1.0
        %v5108 = vmul.f32 %v4852, %v5076
        %v5109 = vmul.f32 %v4853, %v5077
        %v5110 = vmul.f32 %v4854, %v5078
        %v5111 = vmul.f32 %v4855, %v5079
        %v5112 = vmul.f32 %v4856, %v5080
        %v5113 = vmul.f32 %v4857, %v5081
        %v5114 = vmul.f32 %v4858, %v5082
        %v5115 = vmul.f32 %v4859, %v5083
        %v5116 = vmul.f32 %v4860, %v5084
        %v5117 = vmul.f32 %v4861, %v5085
        %v5118 = vmul.f32 %v4862, %v5086
        %v5119 = vmul.f32 %v4863, %v5087
        %v5120 = vmul.f32 %v4864, %v5088
        %v5121 = vmul.f32 %v4865, %v5089
        %v5122 = vmul.f32 %v4866, %v5090
        %v5123 = vmul.f32 %v4867, %v5091
        %v5124 = vmul.f32 %v4868, %v5092
        %v5125 = vmul.f32 %v4869, %v5093
        %v5126 = vmul.f32 %v4870, %v5094
        %v5127 = vmul.f32 %v4871, %v5095
        %v5128 = vmul.f32 %v4872, %v5096
        %v5129 = vmul.f32 %v4873, %v5097
        %v5130 = vmul.f32 %v4874, %v5098
        %v5131 = vmul.f32 %v4875, %v5099
        %v5132 = vmul.f32 %v4876, %v5100
        %v5133 = vmul.f32 %v4877, %v5101
        %v5134 = vmul.f32 %v4878, %v5102
        %v5135 = vmul.f32 %v4879, %v5103
        %v5136 = vmul.f32 %v4880, %v5104
        %v5137 = vmul.f32 %v4881, %v5105
        %v5138 = vmul.f32 %v4882, %v5106
        %v5139 = vmul.f32 %v4883, %v5107
        %v5140 = vpack.c.bf16 %v5110, %v5108
        %v5141 = vpack.c.bf16 %v5111, %v5109
        %v5142 = vpack.c.bf16 %v5114, %v5112
        %v5143 = vpack.c.bf16 %v5115, %v5113
        %v5144 = vpack.c.bf16 %v5118, %v5116
        %v5145 = vpack.c.bf16 %v5119, %v5117
        %v5146 = vpack.c.bf16 %v5122, %v5120
        %v5147 = vpack.c.bf16 %v5123, %v5121
        %v5148 = vpack.c.bf16 %v5126, %v5124
        %v5149 = vpack.c.bf16 %v5127, %v5125
        %v5150 = vpack.c.bf16 %v5130, %v5128
        %v5151 = vpack.c.bf16 %v5131, %v5129
        %v5152 = vpack.c.bf16 %v5134, %v5132
        %v5153 = vpack.c.bf16 %v5135, %v5133
        %v5154 = vpack.c.bf16 %v5138, %v5136
        %v5155 = vpack.c.bf16 %v5139, %v5137
        %v5156 = vld [vmem:[#allocation9] sm:$0xf]
        %v5157 = vld [vmem:[#allocation9 + $0x4] sm:$0xf]
        %v5158 = vld [vmem:[#allocation9 + $0x8] sm:$0xf]
        %v5159 = vld [vmem:[#allocation9 + $0xc] sm:$0xf]
        %v5160 = vld [vmem:[#allocation9 + $0x10] sm:$0xf]
        %v5161 = vld [vmem:[#allocation9 + $0x14] sm:$0xf]
        %v5162 = vld [vmem:[#allocation9 + $0x18] sm:$0xf]
        %v5163 = vld [vmem:[#allocation9 + $0x1c] sm:$0xf]
        %v5164 = vld [vmem:[#allocation9 + $0x20] sm:$0xf]
        %v5165 = vld [vmem:[#allocation9 + $0x24] sm:$0xf]
        %v5166 = vld [vmem:[#allocation9 + $0x28] sm:$0xf]
        %v5167 = vld [vmem:[#allocation9 + $0x2c] sm:$0xf]
        %v5168 = vld [vmem:[#allocation9 + $0x30] sm:$0xf]
        %v5169 = vld [vmem:[#allocation9 + $0x34] sm:$0xf]
        %v5170 = vld [vmem:[#allocation9 + $0x38] sm:$0xf]
        %v5171 = vld [vmem:[#allocation9 + $0x3c] sm:$0xf]
        %v5172 = vld [vmem:[#allocation9 + $0x40] sm:$0xf]
        %v5173 = vld [vmem:[#allocation9 + $0x44] sm:$0xf]
        %v5174 = vld [vmem:[#allocation9 + $0x48] sm:$0xf]
        %v5175 = vld [vmem:[#allocation9 + $0x4c] sm:$0xf]
        %v5176 = vld [vmem:[#allocation9 + $0x50] sm:$0xf]
        %v5177 = vld [vmem:[#allocation9 + $0x54] sm:$0xf]
        %v5178 = vld [vmem:[#allocation9 + $0x58] sm:$0xf]
        %v5179 = vld [vmem:[#allocation9 + $0x5c] sm:$0xf]
        %v5180 = vld [vmem:[#allocation9 + $0x60] sm:$0xf]
        %v5181 = vld [vmem:[#allocation9 + $0x64] sm:$0xf]
        %v5182 = vld [vmem:[#allocation9 + $0x68] sm:$0xf]
        %v5183 = vld [vmem:[#allocation9 + $0x6c] sm:$0xf]
        %v5184 = vld [vmem:[#allocation9 + $0x70] sm:$0xf]
        %v5185 = vld [vmem:[#allocation9 + $0x74] sm:$0xf]
        %v5186 = vld [vmem:[#allocation9 + $0x78] sm:$0xf]
        %v5187 = vld [vmem:[#allocation9 + $0x7c] sm:$0xf]
        %v5188 = vld [vmem:[%s14] sm:$0x1]
        %v5190 = vlaneseq
        %v5191 = vshrl.u32 %v5190, 7
        %v5192 = vsub.s32 0, %v5191
        %v5193 = vrot.slane %v5188, %v5192
        %v5227 = vunpack.c.l.b16 %v5156
        %v5228 = vunpack.c.l.b16 %v5157
        %v5229 = vunpack.c.l.b16 %v5158
        %v5230 = vunpack.c.l.b16 %v5159
        %v5231 = vunpack.c.l.b16 %v5160
        %v5232 = vunpack.c.l.b16 %v5161
        %v5233 = vunpack.c.l.b16 %v5162
        %v5234 = vunpack.c.l.b16 %v5163
        %v5235 = vunpack.c.l.b16 %v5164
        %v5236 = vunpack.c.l.b16 %v5165
        %v5237 = vunpack.c.l.b16 %v5166
        %v5238 = vunpack.c.l.b16 %v5167
        %v5239 = vunpack.c.l.b16 %v5168
        %v5240 = vunpack.c.l.b16 %v5169
        %v5241 = vunpack.c.l.b16 %v5170
        %v5242 = vunpack.c.l.b16 %v5171
        %v5243 = vunpack.c.l.b16 %v5172
        %v5244 = vunpack.c.l.b16 %v5173
        %v5245 = vunpack.c.l.b16 %v5174
        %v5246 = vunpack.c.l.b16 %v5175
        %v5247 = vunpack.c.l.b16 %v5176
        %v5248 = vunpack.c.l.b16 %v5177
        %v5249 = vunpack.c.l.b16 %v5178
        %v5250 = vunpack.c.l.b16 %v5179
        %v5251 = vunpack.c.l.b16 %v5180
        %v5252 = vunpack.c.l.b16 %v5181
        %v5253 = vunpack.c.l.b16 %v5182
        %v5254 = vunpack.c.l.b16 %v5183
        %v5255 = vunpack.c.l.b16 %v5184
        %v5256 = vunpack.c.l.b16 %v5185
        %v5257 = vunpack.c.l.b16 %v5186
        %v5258 = vunpack.c.l.b16 %v5187
        %v5259 = vpack.c.b16 %v5228, %v5227
        %v5260 = vpack.c.b16 %v5230, %v5229
        %v5261 = vpack.c.b16 %v5232, %v5231
        %v5262 = vpack.c.b16 %v5234, %v5233
        %v5263 = vpack.c.b16 %v5236, %v5235
        %v5264 = vpack.c.b16 %v5238, %v5237
        %v5265 = vpack.c.b16 %v5240, %v5239
        %v5266 = vpack.c.b16 %v5242, %v5241
        %v5267 = vpack.c.b16 %v5244, %v5243
        %v5268 = vpack.c.b16 %v5246, %v5245
        %v5269 = vpack.c.b16 %v5248, %v5247
        %v5270 = vpack.c.b16 %v5250, %v5249
        %v5271 = vpack.c.b16 %v5252, %v5251
        %v5272 = vpack.c.b16 %v5254, %v5253
        %v5273 = vpack.c.b16 %v5256, %v5255
        %v5274 = vpack.c.b16 %v5258, %v5257
        %5291 = vmatprep.subr.bf16.mxu0 0
        %5292 = vmatpush1.bf16.msra.mxu0 %v5259
        %5293 = vmatprep.subr.bf16.mxu0 0
        %5294 = vmatpush1.bf16.msra.mxu0 %v5260
        %5295 = vmatprep.subr.bf16.mxu0 0
        %5296 = vmatpush1.bf16.msra.mxu0 %v5261
        %5297 = vmatprep.subr.bf16.mxu0 0
        %5298 = vmatpush1.bf16.msra.mxu0 %v5262
        %5299 = vmatprep.subr.bf16.mxu0 0
        %5300 = vmatpush1.bf16.msra.mxu0 %v5263
        %5301 = vmatprep.subr.bf16.mxu0 0
        %5302 = vmatpush1.bf16.msra.mxu0 %v5264
        %5303 = vmatprep.subr.bf16.mxu0 0
        %5304 = vmatpush1.bf16.msra.mxu0 %v5265
        %5305 = vmatprep.subr.bf16.mxu0 0
        %5306 = vmatpush1.bf16.msra.mxu0 %v5266
        %5307 = vmatprep.subr.bf16.mxu0 0
        %5308 = vmatpush1.bf16.msra.mxu0 %v5267
        %5309 = vmatprep.subr.bf16.mxu0 0
        %5310 = vmatpush1.bf16.msra.mxu0 %v5268
        %5311 = vmatprep.subr.bf16.mxu0 0
        %5312 = vmatpush1.bf16.msra.mxu0 %v5269
        %5313 = vmatprep.subr.bf16.mxu0 0
        %5314 = vmatpush1.bf16.msra.mxu0 %v5270
        %5315 = vmatprep.subr.bf16.mxu0 0
        %5316 = vmatpush1.bf16.msra.mxu0 %v5271
        %5317 = vmatprep.subr.bf16.mxu0 0
        %5318 = vmatpush1.bf16.msra.mxu0 %v5272
        %5319 = vmatprep.subr.bf16.mxu0 0
        %5320 = vmatpush1.bf16.msra.mxu0 %v5273
        %5321 = vmatprep.subr.bf16.mxu0 0
        %5322 = vmatpush1.bf16.msra.mxu0 %v5274
        %5323 = vmatprep.mubr.bf16.mxu0 %v5141
        %5324 = vmatmul.mubr.bf16.gmra.mrb[0].mxu0 %v5140
        %v5325 = vpop.f32.mrb[0].mxu0
        %v5326 = vadd.f32 %v5193, %v5325
        %v5327 = vpop.f32.mrb[0].mxu0
        %v5328 = vpop.f32.mrb[0].mxu0
        %v5329 = vadd.f32 %v5193, %v5328
        %v5330 = vpop.f32.mrb[0].mxu0
        %5331 = vmatprep.mubr.bf16.mxu0 %v5143
        %5332 = vmatmul.mubr.bf16.gmra.mrb[0].mxu0 %v5142
        %v5333 = vpop.f32.mrb[0].mxu0
        %v5334 = vadd.f32 %v5193, %v5333
        %v5335 = vpop.f32.mrb[0].mxu0
        %v5336 = vpop.f32.mrb[0].mxu0
        %v5337 = vadd.f32 %v5193, %v5336
        %v5338 = vpop.f32.mrb[0].mxu0
        %5339 = vmatprep.mubr.bf16.mxu0 %v5145
        %5340 = vmatmul.mubr.bf16.gmra.mrb[0].mxu0 %v5144
        %v5341 = vpop.f32.mrb[0].mxu0
        %v5342 = vadd.f32 %v5193, %v5341
        %v5343 = vpop.f32.mrb[0].mxu0
        %v5344 = vpop.f32.mrb[0].mxu0
        %v5345 = vadd.f32 %v5193, %v5344
        %v5346 = vpop.f32.mrb[0].mxu0
        %5347 = vmatprep.mubr.bf16.mxu0 %v5147
        %5348 = vmatmul.mubr.bf16.gmra.mrb[0].mxu0 %v5146
        %v5349 = vpop.f32.mrb[0].mxu0
        %v5350 = vadd.f32 %v5193, %v5349
        %v5351 = vpop.f32.mrb[0].mxu0
        %v5352 = vpop.f32.mrb[0].mxu0
        %v5353 = vadd.f32 %v5193, %v5352
        %v5354 = vpop.f32.mrb[0].mxu0
        %5355 = vmatprep.mubr.bf16.mxu0 %v5149
        %5356 = vmatmul.mubr.bf16.gmra.mrb[0].mxu0 %v5148
        %v5357 = vpop.f32.mrb[0].mxu0
        %v5358 = vadd.f32 %v5193, %v5357
        %v5359 = vpop.f32.mrb[0].mxu0
        %v5360 = vpop.f32.mrb[0].mxu0
        %v5361 = vadd.f32 %v5193, %v5360
        %v5362 = vpop.f32.mrb[0].mxu0
        %5363 = vmatprep.mubr.bf16.mxu0 %v5151
        %5364 = vmatmul.mubr.bf16.gmra.mrb[0].mxu0 %v5150
        %v5365 = vpop.f32.mrb[0].mxu0
        %v5366 = vadd.f32 %v5193, %v5365
        %v5367 = vpop.f32.mrb[0].mxu0
        %v5368 = vpop.f32.mrb[0].mxu0
        %v5369 = vadd.f32 %v5193, %v5368
        %v5370 = vpop.f32.mrb[0].mxu0
        %5371 = vmatprep.mubr.bf16.mxu0 %v5153
        %5372 = vmatmul.mubr.bf16.gmra.mrb[0].mxu0 %v5152
        %v5373 = vpop.f32.mrb[0].mxu0
        %v5374 = vadd.f32 %v5193, %v5373
        %v5375 = vpop.f32.mrb[0].mxu0
        %v5376 = vpop.f32.mrb[0].mxu0
        %v5377 = vadd.f32 %v5193, %v5376
        %v5378 = vpop.f32.mrb[0].mxu0
        %5379 = vmatprep.mubr.bf16.mxu0 %v5155
        %5380 = vmatmul.mubr.bf16.gmra.mrb[0].mxu0 %v5154
        %v5381 = vpop.f32.mrb[0].mxu0
        %v5382 = vadd.f32 %v5193, %v5381
        %v5383 = vpop.f32.mrb[0].mxu0
        %v5384 = vpop.f32.mrb[0].mxu0
        %v5385 = vadd.f32 %v5193, %v5384
        %v5386 = vpop.f32.mrb[0].mxu0
        %5387 = vdwg.mxu0
        %v5388 = vadd.f32 %v4273, %v5326
        %v5389 = vadd.f32 %v4274, %v5329
        %v5390 = vadd.f32 %v4275, %v5334
        %v5391 = vadd.f32 %v4276, %v5337
        %v5392 = vadd.f32 %v4277, %v5342
        %v5393 = vadd.f32 %v4278, %v5345
        %v5394 = vadd.f32 %v4279, %v5350
        %v5395 = vadd.f32 %v4280, %v5353
        %v5396 = vadd.f32 %v4281, %v5358
        %v5397 = vadd.f32 %v4282, %v5361
        %v5398 = vadd.f32 %v4283, %v5366
        %v5399 = vadd.f32 %v4284, %v5369
        %v5400 = vadd.f32 %v4285, %v5374
        %v5401 = vadd.f32 %v4286, %v5377
        %v5402 = vadd.f32 %v4287, %v5382
        %v5403 = vadd.f32 %v4288, %v5385
        %5404 = vst [vmem:[%s579] sm:$0xff] %v5388
        %5405 = vst [vmem:[%s579 + $0x8] sm:$0xff] %v5389
        %5406 = vst [vmem:[%s579 + $0x10] sm:$0xff] %v5390
        %5407 = vst [vmem:[%s579 + $0x18] sm:$0xff] %v5391
        %5408 = vst [vmem:[%s579 + $0x20] sm:$0xff] %v5392
        %5409 = vst [vmem:[%s579 + $0x28] sm:$0xff] %v5393
        %5410 = vst [vmem:[%s579 + $0x30] sm:$0xff] %v5394
        %5411 = vst [vmem:[%s579 + $0x38] sm:$0xff] %v5395
        %5412 = vst [vmem:[%s579 + $0x40] sm:$0xff] %v5396
        %5413 = vst [vmem:[%s579 + $0x48] sm:$0xff] %v5397
        %5414 = vst [vmem:[%s579 + $0x50] sm:$0xff] %v5398
        %5415 = vst [vmem:[%s579 + $0x58] sm:$0xff] %v5399
        %5416 = vst [vmem:[%s579 + $0x60] sm:$0xff] %v5400
        %5417 = vst [vmem:[%s579 + $0x68] sm:$0xff] %v5401
        %5418 = vst [vmem:[%s579 + $0x70] sm:$0xff] %v5402
        %5419 = vst [vmem:[%s579 + $0x78] sm:$0xff] %v5403
        %s5420 = sand.u32 %s370, 1
        %s5421 = scalar_lea.sflag [#allocation5], %s5420
        %s5422 = sand.u32 %s370, 1
        %s5423 = smul.addr %s5422, 128
        %s5424 = scalar_lea.vmem [#allocation11], %s5423
        // Predicated region
        $region97: #{tpu_custom_call.1} parent=79 // pred_check
          %p5425 = pneg %p380
        $region98: #{tpu_custom_call.1} parent=79 // pred_check_branch
          %5427 = sbr.rel (%p5425) target = $region100
        $region99: #{tpu_custom_call.1} parent=79 // pred_region
          %s5428 = smul.u32 2, %s32
          %s5430 = ssub.s32 2048, 2048
          %5431 = vsyncadd %s5421, %s5430
          %s5432 = smul.addr %s5428, 8
          %s5433 = smul.addr %s5432, 128
          %s5434 = scalar_lea.hbm %s15, %s5433
          %s5435 = sshll.u32 %s5424, 4
          %s5436 = int_to_ptr.vmem [resolvable:$true] %s5435
          %5441 = dma.vmem_to_hbm [thread:$0]  %s5436, 2048, %s5434, %s5421, 128, 128, 8
        $region100: #{tpu_custom_call.1} parent=79 // pred_fallthru
          _
      $region80: #{tpu_custom_call.1} parent=5 // pred_fallthru
        _
      %p5442 = scmp.le.s32.totalorder 2, %s27
      // Predicated region
      $region101: #{tpu_custom_call.1} parent=5 // pred_check
        %p5443 = pneg %p5442
      $region102: #{tpu_custom_call.1} parent=5 // pred_check_branch
        %5445 = sbr.rel (%p5443) target = $region104
      $region103: #{tpu_custom_call.1} parent=5 // pred_region
        %s5446 = ssub.s32 %s27, 2
        // Predicated region
        $region105: #{tpu_custom_call.1} parent=103 // pred_check
          %p5447 = pneg %p386
        $region106: #{tpu_custom_call.1} parent=103 // pred_check_branch
          %5449 = sbr.rel (%p5447) target = $region108
        $region107: #{tpu_custom_call.1} parent=103 // pred_region
          %s5450 = sand.u32 %s371, 1
          %s5451 = scalar_lea.sflag [#allocation5], %s5450
          %s5452 = sand.u32 %s371, 1
          %s5453 = smul.addr %s5452, 128
          %s5454 = scalar_lea.vmem [#allocation11], %s5453
          %5455 = dma.done %s5451, 2048
        $region108: #{tpu_custom_call.1} parent=103 // pred_fallthru
          _
      $region104: #{tpu_custom_call.1} parent=5 // pred_fallthru
        _
    $region6: #{tpu_custom_call.1} parent=1 // loop_footer
      %s31 = sadd.s32 1, %s27
    $region7: #{tpu_custom_call.1} parent=1 // loop_footer_branch
      %26 = sbr.rel target = $region3
    $region8: #{tpu_custom_call.1} parent=1 // loop_exit
      _
    %5456 = vsyncpa [#allocation4], 1
    %s5457 = scalar_lea.sflag [#allocation4], 1
    %5458 = vsyncpa %s5457, 1
    %5459 = vsyncpa [#allocation7], 1
    %5460 = vsyncpa [#allocation10], 1
    %5461 = vsyncpa [#allocation5], 1
    %s5462 = scalar_lea.sflag [#allocation5], 1
    %5463 = vsyncpa %s5462, 1

</llo_original>
